<compile_context>
chip_gen: v6e
topology: v6e:2x2x1
jax: 0.10.0
libtpu: 0.0.40
codegen_flags: <defaults>
</compile_context>

<pallas_src>
import math
import functools

import jax
import jax.numpy as jnp
from jax.experimental import pallas as pl
from jax.experimental.pallas import tpu as pltpu


# ----------------------------------------------------------------------------- helpers
def _layer_norm(x, gamma, beta, eps):
    mean = jnp.mean(x, axis=-1, keepdims=True)
    var = jnp.mean((x - mean) ** 2, axis=-1, keepdims=True)   # biased, like torch LayerNorm
    return (x - mean) * jax.lax.rsqrt(var + eps) * gamma + beta


def generate_square_subsequent_mask(sz):
    # same as the PyTorch helper: 0 on/below diagonal, -1e6 above
    keep = jnp.tril(jnp.ones((sz, sz), jnp.float32))
    return jnp.where(keep == 1.0, 0.0, -1e6)


def _packed_layout(n_heads):
    """Row layout of the packed per-layer small-vector block (shared by init + kernel)."""
    H = n_heads
    rows = dict(bq=0, bo=H, b1=H + 1, b2=H + 2, g1=H + 3, be1=H + 4, g2=H + 5, be2=H + 6)
    n_rows = ((H + 7 + 7) // 8) * 8                            # pad rows to sublane multiple
    return rows, n_rows


def _vmem_limit_bytes():
    cap = 64 * 1024 * 1024                                     # conservative fallback (v7x)
    try:
        cap = int(pltpu.get_tpu_info().vmem_capacity_bytes)
    except Exception:
        pass
    return int(min(100 * 1024 * 1024, int(cap * 0.85)))


def _pick_bt(B, S, D, H, Hh, vmem_limit):
    """Batch-block size: target ~256 MXU rows, stay inside a VMEM budget, keep >=2
    steps on the 'parallel' grid axis (v7x has 2 TensorCores), and divide B."""
    per_b = 4 * (6 * S * D + 3 * S * S + 2 * S * Hh)           # f32 resident activations / elt
    cap = max(1, (vmem_limit // 2) // max(per_b, 1))
    bt = max(1, min(B, -(-256 // S), cap))
    if B >= 2:
        bt = min(bt, max(1, B // 2))
    while B % bt:
        bt -= 1
    return bt


# ----------------------------------------------------------------------------- kernel
def _tst_fused_kernel(src_ref, pe_ref, mask_ref, pad_ref,
                      wi_ref, wq_ref, wk_ref, wv_ref, wo_ref,
                      w1_ref, w2_ref, small_ref,
                      wout_ref, bout_ref,
                      out_ref, x_scr,
                      *, n_heads, head_dim, n_hidden, bt, eps):
    """grid = (batch_block, layer).  One block of `bt` batch elements per outer step;
    activations (bt*S, D) stay resident in VMEM scratch across the layer axis."""
    l = pl.program_id(1)
    n_layers = pl.num_programs(1)
    H, hd, Hh = n_heads, head_dim, n_hidden
    D = H * hd
    S = pe_ref.shape[0]
    M = bt * S                                                 # flattened (batch, seq) rows
    rows, _ = _packed_layout(H)

    # ---- embed (first layer step): x = src @ (Wi*sqrt(D)) + (bi*sqrt(D) + pe)
    @pl.when(l == 0)
    def _():
        src = src_ref[...].reshape(M, -1).astype(jnp.bfloat16)           # (M, Fp)
        emb = jnp.dot(src, wi_ref[...], preferred_element_type=jnp.float32)
        x_scr[...] = emb + jnp.tile(pe_ref[...], (bt, 1))                # pe already holds bias

    x = x_scr[...]                                             # (M, D) f32, layer-resident
    x_bf = x.astype(jnp.bfloat16)
    sp = small_ref[0]                                          # (R, Wp) packed per-layer vecs

    # additive attention mask shared by all heads: (bt, S, S) = src_mask + key padding
    amask = mask_ref[...][None, :, :] + pad_ref[...]

    # ---- multi-head self-attention
    # Head-major weights (H, D, hd): each per-head dot is the same MXU granularity a
    # batched dot_general would lower to, but only ONE head's (bt, S, S) scores are live
    # at a time (keeps attention intermediates small).
    # TODO(synk): for realistic S (>=512) tile K/V with an online softmax instead of a
    # full (bt, S, S) score block per head.
    attn = None
    for h in range(H):
        # softmax scale 1/sqrt(hd) folded into Wq / bq at init
        q_h = (jnp.dot(x_bf, wq_ref[0, h], preferred_element_type=jnp.float32)
               + sp[rows["bq"] + h:rows["bq"] + h + 1, :hd]).astype(jnp.bfloat16)
        k_h = jnp.dot(x_bf, wk_ref[0, h],
                      preferred_element_type=jnp.float32).astype(jnp.bfloat16)
        v_h = jnp.dot(x_bf, wv_ref[0, h],
                      preferred_element_type=jnp.float32).astype(jnp.bfloat16)

        s = jnp.einsum('bqd,bkd->bqk',
                       q_h.reshape(bt, S, hd), k_h.reshape(bt, S, hd),
                       preferred_element_type=jnp.float32) + amask       # (bt, S, S)
        s = s - jnp.max(s, axis=-1, keepdims=True)
        p = jnp.exp(s)
        p = p * pl.reciprocal(jnp.sum(p, axis=-1, keepdims=True), approx=True)
        c = jnp.einsum('bqk,bkd->bqd', p.astype(jnp.bfloat16), v_h.reshape(bt, S, hd),
                       preferred_element_type=jnp.float32)               # (bt, S, hd)

        # output projection fused as an accumulator chain over heads
        o_h = jnp.dot(c.astype(jnp.bfloat16).reshape(M, hd), wo_ref[0, h],
                      preferred_element_type=jnp.float32)                # (M, D)
        attn = o_h if attn is None else attn + o_h
    attn = attn + sp[rows["bo"]:rows["bo"] + 1, :D]            # out_proj bias (+ folded v-bias)

    # ---- residual + LayerNorm 1 (post-norm)
    y = _layer_norm(x + attn,
                    sp[rows["g1"]:rows["g1"] + 1, :D],
                    sp[rows["be1"]:rows["be1"] + 1, :D], eps)

    # ---- feed-forward: Linear -> ReLU -> Linear
    h1 = jnp.maximum(
        jnp.dot(y.astype(jnp.bfloat16), w1_ref[0],
                preferred_element_type=jnp.float32) + sp[rows["b1"]:rows["b1"] + 1, :Hh], 0.0)
    h2 = jnp.dot(h1.astype(jnp.bfloat16), w2_ref[0],
                 preferred_element_type=jnp.float32) + sp[rows["b2"]:rows["b2"] + 1, :D]

    # ---- residual + LayerNorm 2; activations stay resident for the next layer step
    x_new = _layer_norm(y + h2,
                        sp[rows["g2"]:rows["g2"] + 1, :D],
                        sp[rows["be2"]:rows["be2"] + 1, :D], eps)
    x_scr[...] = x_new

    # ---- OutputLinear + tanh on the last layer step (lane-dense, 128-padded features)
    @pl.when(l == n_layers - 1)
    def _():
        o = jnp.dot(x_new.astype(jnp.bfloat16), wout_ref[...],
                    preferred_element_type=jnp.float32) + bout_ref[...]
        out_ref[...] = jnp.tanh(o).reshape(out_ref.shape)


# ----------------------------------------------------------------------------- wrapper
def tst_forward(params, src, src_mask=None, padding_mask=None):
    """src: (S, B, n_features) seq-first, like the PyTorch module. Returns (S, B, n_features)."""
    S, B, F = src.shape
    D = params["d_model"]
    H = params["n_heads"]
    Hh = params["n_hidden"]
    hd = D // H
    L = params["wq3"].shape[0]
    Fp = params["wi_t"].shape[0]                    # lane-padded input feature dim
    FP = params["wout_t"].shape[1]                  # lane-padded output feature dim
    assert S % 8 == 0, "kernel assumes seq length is a multiple of 8 (sublane tile)"

    # batch-major, lane-padded features
    src_bm = jnp.transpose(src.astype(jnp.float32), (1, 0, 2))           # (B, S, F)
    src_bm = jnp.pad(src_bm, ((0, 0), (0, 0), (0, Fp - F)))

    # positional encoding with the (scaled) InputLinear bias folded in
    pe_bi = params["pe"][:S] + params["pe_bias"]                         # (S, D)

    # shared additive (S, S) mask; per-batch key-padding mask stays (B, 1, S)
    sm = (src_mask.astype(jnp.float32) if src_mask is not None
          else jnp.zeros((S, S), jnp.float32))
    if padding_mask is not None:
        pad_add = jnp.where(padding_mask, -1e6, 0.0).astype(jnp.float32)[:, None, :]
    else:
        pad_add = jnp.zeros((B, 1, S), jnp.float32)

    vmem_limit = _vmem_limit_bytes()
    bt = _pick_bt(B, S, D, H, Hh, vmem_limit)
    nb = B // bt

    kernel = functools.partial(_tst_fused_kernel, n_heads=H, head_dim=hd,
                               n_hidden=Hh, bt=bt, eps=1e-5)

    # TODO(synk): constant-index blocks are left at default double-buffering; use
    # pipeline_mode=pl.Buffered(1) here once single-buffering is needed for v7x headroom.
    def const(a):
        nd = a.ndim
        return pl.BlockSpec(tuple(a.shape), lambda b, l, nd=nd: (0,) * nd)

    def per_layer(a):
        nd = a.ndim
        return pl.BlockSpec((1,) + tuple(a.shape[1:]),
                            lambda b, l, nd=nd: (l,) + (0,) * (nd - 1))

    out = pl.pallas_call(
        kernel,
        out_shape=jax.ShapeDtypeStruct((B, S, FP), jnp.float32),
        grid=(nb, L),
        in_specs=[
            pl.BlockSpec((bt, S, Fp), lambda b, l: (b, 0, 0)),           # src (padded F)
            const(pe_bi),                                                # pe + input bias
            const(sm),                                                   # shared attn mask
            pl.BlockSpec((bt, 1, S), lambda b, l: (b, 0, 0)),            # padding mask (additive)
            const(params["wi_t"]),
            per_layer(params["wq3"]), per_layer(params["wk3"]),
            per_layer(params["wv3"]), per_layer(params["wo3"]),
            per_layer(params["w1_t"]), per_layer(params["w2_t"]),
            per_layer(params["packed"]),
            const(params["wout_t"]), const(params["bout"]),
        ],
        out_specs=pl.BlockSpec((bt, S, FP), lambda b, l: (b, 0, 0)),
        scratch_shapes=[pltpu.VMEM((bt * S, D), jnp.float32)],           # resident activations
        compiler_params=pltpu.CompilerParams(
            dimension_semantics=("parallel", "arbitrary"),
            vmem_limit_bytes=vmem_limit),
    )(src_bm, pe_bi, sm, pad_add,
      params["wi_t"],
      params["wq3"], params["wk3"], params["wv3"], params["wo3"],
      params["w1_t"], params["w2_t"], params["packed"],
      params["wout_t"], params["bout"])

    # drop lane padding, return seq-first like the PyTorch module
    return jnp.transpose(out[:, :, :F], (1, 0, 2))                       # (S, B, F)


# ----------------------------------------------------------------------------- params
def init_params(key, *, n_features, d_model, n_heads, n_hidden, n_layers, max_len=512):
    D, Hh, L, F, H = d_model, n_hidden, n_layers, n_features, n_heads
    hd = D // H
    bf = jnp.bfloat16
    initrange = 0.1
    ks = jax.random.split(key, 9)

    # ---- input / output linears (PyTorch init_weights)
    wi = jax.random.uniform(ks[0], (D, F), jnp.float32, -initrange, initrange)
    bi = jax.random.uniform(ks[1], (1, D), jnp.float32,
                            -1.0 / math.sqrt(F), 1.0 / math.sqrt(F))
    wout = jax.random.uniform(ks[2], (F, D), jnp.float32, -initrange, initrange)

    # lane-pad the feature axes to 128; fold sqrt(d_model) into the input linear
    Fp = ((F + 127) // 128) * 128
    FP = ((F + 127) // 128) * 128
    wi_t = jnp.zeros((Fp, D), jnp.float32).at[:F, :].set(wi.T * math.sqrt(D))
    pe_bias = bi * math.sqrt(D)
    wout_t = jnp.zeros((D, FP), jnp.float32).at[:, :F].set(wout.T)
    bout = jnp.zeros((1, FP), jnp.float32)                     # OutputLinear.bias zero-init

    # ---- sinusoidal positional encoding (max_len, D)
    position = jnp.arange(max_len, dtype=jnp.float32)[:, None]
    div_term = jnp.exp(jnp.arange(0, D, 2, dtype=jnp.float32) * (-math.log(10000.0) / D))
    pe = jnp.zeros((max_len, D), jnp.float32)
    pe = pe.at[:, 0::2].set(jnp.sin(position * div_term))
    pe = pe.at[:, 1::2].set(jnp.cos(position * div_term))

    # ---- encoder layers
    s_d = 1.0 / math.sqrt(D)
    s_h = 1.0 / math.sqrt(Hh)
    wqkv = jax.random.uniform(ks[3], (L, 3 * D, D), jnp.float32, -s_d, s_d)
    wo = jax.random.uniform(ks[4], (L, D, D), jnp.float32, -s_d, s_d)
    w1 = jax.random.uniform(ks[5], (L, Hh, D), jnp.float32, -s_d, s_d)
    w2 = jax.random.uniform(ks[6], (L, D, Hh), jnp.float32, -s_h, s_h)
    b1 = jax.random.uniform(ks[7], (L, Hh), jnp.float32, -s_d, s_d)
    b2 = jax.random.uniform(ks[8], (L, D), jnp.float32, -s_h, s_h)
    bqkv = jnp.zeros((L, 3 * D), jnp.float32)                  # MHA in_proj_bias zero-init
    bo = jnp.zeros((L, D), jnp.float32)                        # out_proj.bias zero-init

    # head-major projection weights (L, H, D, hd); 1/sqrt(hd) folded into Wq
    def head_major(w_rows):                                    # (L, D, D): [l, out, in]
        return jnp.transpose(w_rows.reshape(L, H, hd, D), (0, 1, 3, 2))
    wq3 = head_major(wqkv[:, 0 * D:1 * D, :]) / math.sqrt(hd)
    wk3 = head_major(wqkv[:, 1 * D:2 * D, :])
    wv3 = head_major(wqkv[:, 2 * D:3 * D, :])
    wo3 = jnp.transpose(wo, (0, 2, 1)).reshape(L, H, hd, D)    # (L, H, hd, D)

    # exact bias folds: k-bias has no effect through the row-wise softmax; since the
    # softmax rows sum to 1, the v-bias contributes sum_h bv_h @ Wo_h to every position.
    bq = bqkv[:, 0 * D:1 * D].reshape(L, H, hd) / math.sqrt(hd)
    bv = bqkv[:, 2 * D:3 * D].reshape(L, H, hd)
    bo_eff = bo + jnp.einsum('lhj,lhjm->lm', bv, wo3)

    # pack small per-layer vectors into one (L, R, Wp) block (single DMA per layer)
    rows, n_rows = _packed_layout(H)
    Wp = max(D, Hh)
    packed = jnp.zeros((L, n_rows, Wp), jnp.float32)
    packed = packed.at[:, rows["bq"]:rows["bq"] + H, :hd].set(bq)
    packed = packed.at[:, rows["bo"], :D].set(bo_eff)
    packed = packed.at[:, rows["b1"], :Hh].set(b1)
    packed = packed.at[:, rows["b2"], :D].set(b2)
    packed = packed.at[:, rows["g1"], :D].set(1.0)             # LayerNorm1 gamma
    packed = packed.at[:, rows["be1"], :D].set(0.0)            # LayerNorm1 beta
    packed = packed.at[:, rows["g2"], :D].set(1.0)             # LayerNorm2 gamma
    packed = packed.at[:, rows["be2"], :D].set(0.0)            # LayerNorm2 beta

    return dict(
        d_model=D, n_heads=H, n_hidden=Hh,
        pe=pe, pe_bias=pe_bias,
        wi_t=wi_t.astype(bf),
        wq3=wq3.astype(bf), wk3=wk3.astype(bf), wv3=wv3.astype(bf), wo3=wo3.astype(bf),
        w1_t=jnp.transpose(w1, (0, 2, 1)).astype(bf),
        w2_t=jnp.transpose(w2, (0, 2, 1)).astype(bf),
        packed=packed,
        wout_t=wout_t.astype(bf), bout=bout,
    )


# ----------------------------------------------------------------------------- main
if __name__ == "__main__":
    # small shapes consistent with the module (seq-first transformer input)
    S, B = 8, 2
    N_FEATURES, D_MODEL, N_HEADS, N_HIDDEN, N_LAYERS = 4, 32, 4, 32, 2

    key = jax.random.PRNGKey(0)
    kp, kx = jax.random.split(key)
    params = init_params(kp, n_features=N_FEATURES, d_model=D_MODEL,
                         n_heads=N_HEADS, n_hidden=N_HIDDEN, n_layers=N_LAYERS)

    src = jax.random.normal(kx, (S, B, N_FEATURES), jnp.float32)         # (S, B, F)
    src_mask = generate_square_subsequent_mask(S)                        # (S, S) additive
    # TODO(synk): train_model / optimizer loop is training-only and intentionally not ported.

    out = tst_forward(params, src, src_mask=src_mask, padding_mask=None)
    out = jax.block_until_ready(out)
    assert out.shape == (S, B, N_FEATURES) and out.dtype == jnp.float32
    assert bool(jnp.all(jnp.isfinite(out)))
    print("KERNEL_OK")
</pallas_src>

<mosaic_0001>
module attributes {stable_mosaic.version = 11 : i64} {
  func.func @_tst_fused_kernel(%arg0: i32, %arg1: i32, %arg2: memref<1x8x128xf32, #tpu.memory_space<vmem>>, %arg3: memref<8x32xf32, #tpu.memory_space<vmem>>, %arg4: memref<8x8xf32, #tpu.memory_space<vmem>>, %arg5: memref<1x1x8xf32, #tpu.memory_space<vmem>>, %arg6: memref<128x32xbf16, #tpu.memory_space<vmem>>, %arg7: memref<1x4x32x8xbf16, #tpu.memory_space<vmem>>, %arg8: memref<1x4x32x8xbf16, #tpu.memory_space<vmem>>, %arg9: memref<1x4x32x8xbf16, #tpu.memory_space<vmem>>, %arg10: memref<1x4x8x32xbf16, #tpu.memory_space<vmem>>, %arg11: memref<1x32x32xbf16, #tpu.memory_space<vmem>>, %arg12: memref<1x32x32xbf16, #tpu.memory_space<vmem>>, %arg13: memref<1x16x32xf32, #tpu.memory_space<vmem>>, %arg14: memref<32x128xbf16, #tpu.memory_space<vmem>>, %arg15: memref<1x128xf32, #tpu.memory_space<vmem>>, %arg16: memref<1x8x128xf32, #tpu.memory_space<vmem>>, %arg17: memref<8x32xf32, #tpu.memory_space<vmem>>) attributes {dimension_semantics = [#tpu.dimension_semantics<parallel>, #tpu.dimension_semantics<arbitrary>], iteration_bounds = array<i64: 2, 2>, scalar_prefetch = 0 : i64, scratch_operands = 1 : i64, tpu.core_type = #tpu.core_type<tc>, window_params = [{transform_indices = @transform_0, window_bounds = array<i64: 1, 8, 128>}, {pipeline_mode = #tpu.pipeline_mode<synchronous>, transform_indices = @transform_1, window_bounds = array<i64: 8, 32>}, {pipeline_mode = #tpu.pipeline_mode<synchronous>, transform_indices = @transform_2, window_bounds = array<i64: 8, 8>}, {transform_indices = @transform_3, window_bounds = array<i64: 1, 1, 8>}, {pipeline_mode = #tpu.pipeline_mode<synchronous>, transform_indices = @transform_4, window_bounds = array<i64: 128, 32>}, {transform_indices = @transform_5, window_bounds = array<i64: 1, 4, 32, 8>}, {transform_indices = @transform_6, window_bounds = array<i64: 1, 4, 32, 8>}, {transform_indices = @transform_7, window_bounds = array<i64: 1, 4, 32, 8>}, {transform_indices = @transform_8, window_bounds = array<i64: 1, 4, 8, 32>}, {transform_indices = @transform_9, window_bounds = array<i64: 1, 32, 32>}, {transform_indices = @transform_10, window_bounds = array<i64: 1, 32, 32>}, {transform_indices = @transform_11, window_bounds = array<i64: 1, 16, 32>}, {pipeline_mode = #tpu.pipeline_mode<synchronous>, transform_indices = @transform_12, window_bounds = array<i64: 32, 128>}, {pipeline_mode = #tpu.pipeline_mode<synchronous>, transform_indices = @transform_13, window_bounds = array<i64: 1, 128>}, {transform_indices = @transform_14, window_bounds = array<i64: 1, 8, 128>}]} {
    %c0_i32 = arith.constant 0 : i32
    %0 = arith.cmpi eq, %arg1, %c0_i32 : i32
    %1 = arith.extui %0 : i1 to i32
    %c0_i32_0 = arith.constant 0 : i32
    %2 = arith.cmpi ne, %1, %c0_i32_0 : i32
    scf.if %2 {
      %c0_124 = arith.constant 0 : index
      %c0_125 = arith.constant 0 : index
      %c0_126 = arith.constant 0 : index
      %236 = vector.load %arg2[%c0_124, %c0_125, %c0_126] : memref<1x8x128xf32, #tpu.memory_space<vmem>>, vector<1x8x128xf32>
      %237 = vector.shape_cast %236 : vector<1x8x128xf32> to vector<8x128xf32>
      %238 = arith.truncf %237 : vector<8x128xf32> to vector<8x128xbf16>
      %c0_127 = arith.constant 0 : index
      %c0_128 = arith.constant 0 : index
      %239 = vector.load %arg6[%c0_127, %c0_128] : memref<128x32xbf16, #tpu.memory_space<vmem>>, vector<128x32xbf16>
      %cst_129 = arith.constant dense<0.000000e+00> : vector<8x32xf32>
      %240 = tpu.matmul %238, %239, %cst_129 {dimension_numbers = #tpu.dot_dimension_numbers<[1], [0], [0], [1], [0, 0, 1, 1], [], []>} : vector<8x128xbf16>, vector<128x32xbf16>, vector<8x32xf32> -> vector<8x32xf32>
      %c0_130 = arith.constant 0 : index
      %c0_131 = arith.constant 0 : index
      %241 = vector.load %arg3[%c0_130, %c0_131] : memref<8x32xf32, #tpu.memory_space<vmem>>, vector<8x32xf32>
      %242 = arith.addf %240, %241 : vector<8x32xf32>
      %c0_132 = arith.constant 0 : index
      %c0_133 = arith.constant 0 : index
      %243 = vector.load %arg17[%c0_132, %c0_133] : memref<8x32xf32, #tpu.memory_space<vmem>>, vector<8x32xf32>
      tpu.vector_store %arg17[%c0_132, %c0_133], %242 {strides = array<i32>} : memref<8x32xf32, #tpu.memory_space<vmem>>, vector<8x32xf32>,
    } else {
    }
    %c0 = arith.constant 0 : index
    %c0_1 = arith.constant 0 : index
    %3 = vector.load %arg17[%c0, %c0_1] : memref<8x32xf32, #tpu.memory_space<vmem>>, vector<8x32xf32>
    %4 = arith.truncf %3 : vector<8x32xf32> to vector<8x32xbf16>
    %c0_2 = arith.constant 0 : index
    %c0_3 = arith.constant 0 : index
    %c0_4 = arith.constant 0 : index
    %5 = vector.load %arg13[%c0_2, %c0_3, %c0_4] : memref<1x16x32xf32, #tpu.memory_space<vmem>>, vector<1x16x32xf32>
    %6 = vector.shape_cast %5 : vector<1x16x32xf32> to vector<16x32xf32>
    %c0_5 = arith.constant 0 : index
    %c0_6 = arith.constant 0 : index
    %7 = vector.load %arg4[%c0_5, %c0_6] : memref<8x8xf32, #tpu.memory_space<vmem>>, vector<8x8xf32>
    %8 = vector.shape_cast %7 : vector<8x8xf32> to vector<1x8x8xf32>
    %c0_7 = arith.constant 0 : index
    %c0_8 = arith.constant 0 : index
    %c0_9 = arith.constant 0 : index
    %9 = vector.load %arg5[%c0_7, %c0_8, %c0_9] : memref<1x1x8xf32, #tpu.memory_space<vmem>>, vector<1x1x8xf32>
    %10 = vector.broadcast %9 : vector<1x1x8xf32> to vector<1x8x8xf32>
    %11 = arith.addf %8, %10 : vector<1x8x8xf32>
    %c0_10 = arith.constant 0 : index
    %c0_11 = arith.constant 0 : index
    %c0_12 = arith.constant 0 : index
    %c0_13 = arith.constant 0 : index
    %12 = vector.load %arg7[%c0_10, %c0_11, %c0_12, %c0_13] : memref<1x4x32x8xbf16, #tpu.memory_space<vmem>>, vector<1x1x32x8xbf16>
    %13 = vector.shape_cast %12 : vector<1x1x32x8xbf16> to vector<32x8xbf16>
    %cst = arith.constant dense<0.000000e+00> : vector<8x8xf32>
    %14 = tpu.matmul %4, %13, %cst {dimension_numbers = #tpu.dot_dimension_numbers<[1], [0], [0], [1], [0, 0, 1, 1], [], []>} : vector<8x32xbf16>, vector<32x8xbf16>, vector<8x8xf32> -> vector<8x8xf32>
    %15 = vector.extract_strided_slice %6 {offsets = [0, 0], sizes = [1, 8], strides = [1, 1]} : vector<16x32xf32> to vector<1x8xf32>
    %16 = vector.broadcast %15 : vector<1x8xf32> to vector<8x8xf32>
    %17 = arith.addf %14, %16 : vector<8x8xf32>
    %18 = arith.truncf %17 : vector<8x8xf32> to vector<8x8xbf16>
    %c0_14 = arith.constant 0 : index
    %c0_15 = arith.constant 0 : index
    %c0_16 = arith.constant 0 : index
    %c0_17 = arith.constant 0 : index
    %19 = vector.load %arg8[%c0_14, %c0_15, %c0_16, %c0_17] : memref<1x4x32x8xbf16, #tpu.memory_space<vmem>>, vector<1x1x32x8xbf16>
    %20 = vector.shape_cast %19 : vector<1x1x32x8xbf16> to vector<32x8xbf16>
    %cst_18 = arith.constant dense<0.000000e+00> : vector<8x8xf32>
    %21 = tpu.matmul %4, %20, %cst_18 {dimension_numbers = #tpu.dot_dimension_numbers<[1], [0], [0], [1], [0, 0, 1, 1], [], []>} : vector<8x32xbf16>, vector<32x8xbf16>, vector<8x8xf32> -> vector<8x8xf32>
    %22 = arith.truncf %21 : vector<8x8xf32> to vector<8x8xbf16>
    %c0_19 = arith.constant 0 : index
    %c0_20 = arith.constant 0 : index
    %c0_21 = arith.constant 0 : index
    %c0_22 = arith.constant 0 : index
    %23 = vector.load %arg9[%c0_19, %c0_20, %c0_21, %c0_22] : memref<1x4x32x8xbf16, #tpu.memory_space<vmem>>, vector<1x1x32x8xbf16>
    %24 = vector.shape_cast %23 : vector<1x1x32x8xbf16> to vector<32x8xbf16>
    %cst_23 = arith.constant dense<0.000000e+00> : vector<8x8xf32>
    %25 = tpu.matmul %4, %24, %cst_23 {dimension_numbers = #tpu.dot_dimension_numbers<[1], [0], [0], [1], [0, 0, 1, 1], [], []>} : vector<8x32xbf16>, vector<32x8xbf16>, vector<8x8xf32> -> vector<8x8xf32>
    %26 = arith.truncf %25 : vector<8x8xf32> to vector<8x8xbf16>
    %27 = vector.shape_cast %18 : vector<8x8xbf16> to vector<1x8x8xbf16>
    %28 = vector.shape_cast %22 : vector<8x8xbf16> to vector<1x8x8xbf16>
    "tpu.trace_start"() <{level = 10 : i32, message = "bqd,bkd->bqk"}> : () -> ()
    %cst_24 = arith.constant dense<0.000000e+00> : vector<1x8x8xf32>
    %29 = tpu.matmul %27, %28, %cst_24 {dimension_numbers = #tpu.dot_dimension_numbers<[2], [2], [1], [1], [0, 0, 0, 1, 1, 1], [0], [0]>} : vector<1x8x8xbf16>, vector<1x8x8xbf16>, vector<1x8x8xf32> -> vector<1x8x8xf32>
    "tpu.trace_stop"() : () -> ()
    %30 = arith.addf %29, %11 : vector<1x8x8xf32>
    %cst_25 = arith.constant dense<0xFF800000> : vector<1x8xf32>
    %31 = vector.multi_reduction <maximumf>, %30, %cst_25 [2] : vector<1x8x8xf32> to vector<1x8xf32>
    %32 = vector.shape_cast %31 : vector<1x8xf32> to vector<1x8x1xf32>
    %33 = vector.broadcast %32 : vector<1x8x1xf32> to vector<1x8x8xf32>
    %34 = arith.subf %30, %33 : vector<1x8x8xf32>
    %35 = math.exp %34 : vector<1x8x8xf32>
    %cst_26 = arith.constant dense<0.000000e+00> : vector<1x8xf32>
    %36 = vector.multi_reduction <add>, %35, %cst_26 [2] : vector<1x8x8xf32> to vector<1x8xf32>
    %37 = vector.shape_cast %36 : vector<1x8xf32> to vector<1x8x1xf32>
    %38 = tpu.reciprocal %37 {approx = true} : vector<1x8x1xf32> -> vector<1x8x1xf32>
    %39 = vector.broadcast %38 : vector<1x8x1xf32> to vector<1x8x8xf32>
    %40 = arith.mulf %35, %39 : vector<1x8x8xf32>
    %41 = arith.truncf %40 : vector<1x8x8xf32> to vector<1x8x8xbf16>
    %42 = vector.shape_cast %26 : vector<8x8xbf16> to vector<1x8x8xbf16>
    "tpu.trace_start"() <{level = 10 : i32, message = "bqk,bkd->bqd"}> : () -> ()
    %cst_27 = arith.constant dense<0.000000e+00> : vector<1x8x8xf32>
    %43 = tpu.matmul %41, %42, %cst_27 {dimension_numbers = #tpu.dot_dimension_numbers<[2], [1], [1], [2], [0, 0, 0, 1, 1, 2], [0], [0]>} : vector<1x8x8xbf16>, vector<1x8x8xbf16>, vector<1x8x8xf32> -> vector<1x8x8xf32>
    "tpu.trace_stop"() : () -> ()
    %44 = arith.truncf %43 : vector<1x8x8xf32> to vector<1x8x8xbf16>
    %45 = vector.shape_cast %44 : vector<1x8x8xbf16> to vector<8x8xbf16>
    %c0_28 = arith.constant 0 : index
    %c0_29 = arith.constant 0 : index
    %c0_30 = arith.constant 0 : index
    %c0_31 = arith.constant 0 : index
    %46 = vector.load %arg10[%c0_28, %c0_29, %c0_30, %c0_31] : memref<1x4x8x32xbf16, #tpu.memory_space<vmem>>, vector<1x1x8x32xbf16>
    %47 = vector.shape_cast %46 : vector<1x1x8x32xbf16> to vector<8x32xbf16>
    %cst_32 = arith.constant dense<0.000000e+00> : vector<8x32xf32>
    %48 = tpu.matmul %45, %47, %cst_32 {dimension_numbers = #tpu.dot_dimension_numbers<[1], [0], [0], [1], [0, 0, 1, 1], [], []>} : vector<8x8xbf16>, vector<8x32xbf16>, vector<8x32xf32> -> vector<8x32xf32>
    %c0_33 = arith.constant 0 : index
    %c1 = arith.constant 1 : index
    %c0_34 = arith.constant 0 : index
    %c0_35 = arith.constant 0 : index
    %49 = vector.load %arg7[%c0_33, %c1, %c0_34, %c0_35] : memref<1x4x32x8xbf16, #tpu.memory_space<vmem>>, vector<1x1x32x8xbf16>
    %50 = vector.shape_cast %49 : vector<1x1x32x8xbf16> to vector<32x8xbf16>
    %cst_36 = arith.constant dense<0.000000e+00> : vector<8x8xf32>
    %51 = tpu.matmul %4, %50, %cst_36 {dimension_numbers = #tpu.dot_dimension_numbers<[1], [0], [0], [1], [0, 0, 1, 1], [], []>} : vector<8x32xbf16>, vector<32x8xbf16>, vector<8x8xf32> -> vector<8x8xf32>
    %52 = vector.extract_strided_slice %6 {offsets = [1, 0], sizes = [1, 8], strides = [1, 1]} : vector<16x32xf32> to vector<1x8xf32>
    %53 = vector.broadcast %52 : vector<1x8xf32> to vector<8x8xf32>
    %54 = arith.addf %51, %53 : vector<8x8xf32>
    %55 = arith.truncf %54 : vector<8x8xf32> to vector<8x8xbf16>
    %c0_37 = arith.constant 0 : index
    %c1_38 = arith.constant 1 : index
    %c0_39 = arith.constant 0 : index
    %c0_40 = arith.constant 0 : index
    %56 = vector.load %arg8[%c0_37, %c1_38, %c0_39, %c0_40] : memref<1x4x32x8xbf16, #tpu.memory_space<vmem>>, vector<1x1x32x8xbf16>
    %57 = vector.shape_cast %56 : vector<1x1x32x8xbf16> to vector<32x8xbf16>
    %cst_41 = arith.constant dense<0.000000e+00> : vector<8x8xf32>
    %58 = tpu.matmul %4, %57, %cst_41 {dimension_numbers = #tpu.dot_dimension_numbers<[1], [0], [0], [1], [0, 0, 1, 1], [], []>} : vector<8x32xbf16>, vector<32x8xbf16>, vector<8x8xf32> -> vector<8x8xf32>
    %59 = arith.truncf %58 : vector<8x8xf32> to vector<8x8xbf16>
    %c0_42 = arith.constant 0 : index
    %c1_43 = arith.constant 1 : index
    %c0_44 = arith.constant 0 : index
    %c0_45 = arith.constant 0 : index
    %60 = vector.load %arg9[%c0_42, %c1_43, %c0_44, %c0_45] : memref<1x4x32x8xbf16, #tpu.memory_space<vmem>>, vector<1x1x32x8xbf16>
    %61 = vector.shape_cast %60 : vector<1x1x32x8xbf16> to vector<32x8xbf16>
    %cst_46 = arith.constant dense<0.000000e+00> : vector<8x8xf32>
    %62 = tpu.matmul %4, %61, %cst_46 {dimension_numbers = #tpu.dot_dimension_numbers<[1], [0], [0], [1], [0, 0, 1, 1], [], []>} : vector<8x32xbf16>, vector<32x8xbf16>, vector<8x8xf32> -> vector<8x8xf32>
    %63 = arith.truncf %62 : vector<8x8xf32> to vector<8x8xbf16>
    %64 = vector.shape_cast %55 : vector<8x8xbf16> to vector<1x8x8xbf16>
    %65 = vector.shape_cast %59 : vector<8x8xbf16> to vector<1x8x8xbf16>
    "tpu.trace_start"() <{level = 10 : i32, message = "bqd,bkd->bqk"}> : () -> ()
    %cst_47 = arith.constant dense<0.000000e+00> : vector<1x8x8xf32>
    %66 = tpu.matmul %64, %65, %cst_47 {dimension_numbers = #tpu.dot_dimension_numbers<[2], [2], [1], [1], [0, 0, 0, 1, 1, 1], [0], [0]>} : vector<1x8x8xbf16>, vector<1x8x8xbf16>, vector<1x8x8xf32> -> vector<1x8x8xf32>
    "tpu.trace_stop"() : () -> ()
    %67 = arith.addf %66, %11 : vector<1x8x8xf32>
    %cst_48 = arith.constant dense<0xFF800000> : vector<1x8xf32>
    %68 = vector.multi_reduction <maximumf>, %67, %cst_48 [2] : vector<1x8x8xf32> to vector<1x8xf32>
    %69 = vector.shape_cast %68 : vector<1x8xf32> to vector<1x8x1xf32>
    %70 = vector.broadcast %69 : vector<1x8x1xf32> to vector<1x8x8xf32>
    %71 = arith.subf %67, %70 : vector<1x8x8xf32>
    %72 = math.exp %71 : vector<1x8x8xf32>
    %cst_49 = arith.constant dense<0.000000e+00> : vector<1x8xf32>
    %73 = vector.multi_reduction <add>, %72, %cst_49 [2] : vector<1x8x8xf32> to vector<1x8xf32>
    %74 = vector.shape_cast %73 : vector<1x8xf32> to vector<1x8x1xf32>
    %75 = tpu.reciprocal %74 {approx = true} : vector<1x8x1xf32> -> vector<1x8x1xf32>
    %76 = vector.broadcast %75 : vector<1x8x1xf32> to vector<1x8x8xf32>
    %77 = arith.mulf %72, %76 : vector<1x8x8xf32>
    %78 = arith.truncf %77 : vector<1x8x8xf32> to vector<1x8x8xbf16>
    %79 = vector.shape_cast %63 : vector<8x8xbf16> to vector<1x8x8xbf16>
    "tpu.trace_start"() <{level = 10 : i32, message = "bqk,bkd->bqd"}> : () -> ()
    %cst_50 = arith.constant dense<0.000000e+00> : vector<1x8x8xf32>
    %80 = tpu.matmul %78, %79, %cst_50 {dimension_numbers = #tpu.dot_dimension_numbers<[2], [1], [1], [2], [0, 0, 0, 1, 1, 2], [0], [0]>} : vector<1x8x8xbf16>, vector<1x8x8xbf16>, vector<1x8x8xf32> -> vector<1x8x8xf32>
    "tpu.trace_stop"() : () -> ()
    %81 = arith.truncf %80 : vector<1x8x8xf32> to vector<1x8x8xbf16>
    %82 = vector.shape_cast %81 : vector<1x8x8xbf16> to vector<8x8xbf16>
    %c0_51 = arith.constant 0 : index
    %c1_52 = arith.constant 1 : index
    %c0_53 = arith.constant 0 : index
    %c0_54 = arith.constant 0 : index
    %83 = vector.load %arg10[%c0_51, %c1_52, %c0_53, %c0_54] : memref<1x4x8x32xbf16, #tpu.memory_space<vmem>>, vector<1x1x8x32xbf16>
    %84 = vector.shape_cast %83 : vector<1x1x8x32xbf16> to vector<8x32xbf16>
    %cst_55 = arith.constant dense<0.000000e+00> : vector<8x32xf32>
    %85 = tpu.matmul %82, %84, %cst_55 {dimension_numbers = #tpu.dot_dimension_numbers<[1], [0], [0], [1], [0, 0, 1, 1], [], []>} : vector<8x8xbf16>, vector<8x32xbf16>, vector<8x32xf32> -> vector<8x32xf32>
    %86 = arith.addf %48, %85 : vector<8x32xf32>
    %c0_56 = arith.constant 0 : index
    %c2 = arith.constant 2 : index
    %c0_57 = arith.constant 0 : index
    %c0_58 = arith.constant 0 : index
    %87 = vector.load %arg7[%c0_56, %c2, %c0_57, %c0_58] : memref<1x4x32x8xbf16, #tpu.memory_space<vmem>>, vector<1x1x32x8xbf16>
    %88 = vector.shape_cast %87 : vector<1x1x32x8xbf16> to vector<32x8xbf16>
    %cst_59 = arith.constant dense<0.000000e+00> : vector<8x8xf32>
    %89 = tpu.matmul %4, %88, %cst_59 {dimension_numbers = #tpu.dot_dimension_numbers<[1], [0], [0], [1], [0, 0, 1, 1], [], []>} : vector<8x32xbf16>, vector<32x8xbf16>, vector<8x8xf32> -> vector<8x8xf32>
    %90 = vector.extract_strided_slice %6 {offsets = [2, 0], sizes = [1, 8], strides = [1, 1]} : vector<16x32xf32> to vector<1x8xf32>
    %91 = vector.broadcast %90 : vector<1x8xf32> to vector<8x8xf32>
    %92 = arith.addf %89, %91 : vector<8x8xf32>
    %93 = arith.truncf %92 : vector<8x8xf32> to vector<8x8xbf16>
    %c0_60 = arith.constant 0 : index
    %c2_61 = arith.constant 2 : index
    %c0_62 = arith.constant 0 : index
    %c0_63 = arith.constant 0 : index
    %94 = vector.load %arg8[%c0_60, %c2_61, %c0_62, %c0_63] : memref<1x4x32x8xbf16, #tpu.memory_space<vmem>>, vector<1x1x32x8xbf16>
    %95 = vector.shape_cast %94 : vector<1x1x32x8xbf16> to vector<32x8xbf16>
    %cst_64 = arith.constant dense<0.000000e+00> : vector<8x8xf32>
    %96 = tpu.matmul %4, %95, %cst_64 {dimension_numbers = #tpu.dot_dimension_numbers<[1], [0], [0], [1], [0, 0, 1, 1], [], []>} : vector<8x32xbf16>, vector<32x8xbf16>, vector<8x8xf32> -> vector<8x8xf32>
    %97 = arith.truncf %96 : vector<8x8xf32> to vector<8x8xbf16>
    %c0_65 = arith.constant 0 : index
    %c2_66 = arith.constant 2 : index
    %c0_67 = arith.constant 0 : index
    %c0_68 = arith.constant 0 : index
    %98 = vector.load %arg9[%c0_65, %c2_66, %c0_67, %c0_68] : memref<1x4x32x8xbf16, #tpu.memory_space<vmem>>, vector<1x1x32x8xbf16>
    %99 = vector.shape_cast %98 : vector<1x1x32x8xbf16> to vector<32x8xbf16>
    %cst_69 = arith.constant dense<0.000000e+00> : vector<8x8xf32>
    %100 = tpu.matmul %4, %99, %cst_69 {dimension_numbers = #tpu.dot_dimension_numbers<[1], [0], [0], [1], [0, 0, 1, 1], [], []>} : vector<8x32xbf16>, vector<32x8xbf16>, vector<8x8xf32> -> vector<8x8xf32>
    %101 = arith.truncf %100 : vector<8x8xf32> to vector<8x8xbf16>
    %102 = vector.shape_cast %93 : vector<8x8xbf16> to vector<1x8x8xbf16>
    %103 = vector.shape_cast %97 : vector<8x8xbf16> to vector<1x8x8xbf16>
    "tpu.trace_start"() <{level = 10 : i32, message = "bqd,bkd->bqk"}> : () -> ()
    %cst_70 = arith.constant dense<0.000000e+00> : vector<1x8x8xf32>
    %104 = tpu.matmul %102, %103, %cst_70 {dimension_numbers = #tpu.dot_dimension_numbers<[2], [2], [1], [1], [0, 0, 0, 1, 1, 1], [0], [0]>} : vector<1x8x8xbf16>, vector<1x8x8xbf16>, vector<1x8x8xf32> -> vector<1x8x8xf32>
    "tpu.trace_stop"() : () -> ()
    %105 = arith.addf %104, %11 : vector<1x8x8xf32>
    %cst_71 = arith.constant dense<0xFF800000> : vector<1x8xf32>
    %106 = vector.multi_reduction <maximumf>, %105, %cst_71 [2] : vector<1x8x8xf32> to vector<1x8xf32>
    %107 = vector.shape_cast %106 : vector<1x8xf32> to vector<1x8x1xf32>
    %108 = vector.broadcast %107 : vector<1x8x1xf32> to vector<1x8x8xf32>
    %109 = arith.subf %105, %108 : vector<1x8x8xf32>
    %110 = math.exp %109 : vector<1x8x8xf32>
    %cst_72 = arith.constant dense<0.000000e+00> : vector<1x8xf32>
    %111 = vector.multi_reduction <add>, %110, %cst_72 [2] : vector<1x8x8xf32> to vector<1x8xf32>
    %112 = vector.shape_cast %111 : vector<1x8xf32> to vector<1x8x1xf32>
    %113 = tpu.reciprocal %112 {approx = true} : vector<1x8x1xf32> -> vector<1x8x1xf32>
    %114 = vector.broadcast %113 : vector<1x8x1xf32> to vector<1x8x8xf32>
    %115 = arith.mulf %110, %114 : vector<1x8x8xf32>
    %116 = arith.truncf %115 : vector<1x8x8xf32> to vector<1x8x8xbf16>
    %117 = vector.shape_cast %101 : vector<8x8xbf16> to vector<1x8x8xbf16>
    "tpu.trace_start"() <{level = 10 : i32, message = "bqk,bkd->bqd"}> : () -> ()
    %cst_73 = arith.constant dense<0.000000e+00> : vector<1x8x8xf32>
    %118 = tpu.matmul %116, %117, %cst_73 {dimension_numbers = #tpu.dot_dimension_numbers<[2], [1], [1], [2], [0, 0, 0, 1, 1, 2], [0], [0]>} : vector<1x8x8xbf16>, vector<1x8x8xbf16>, vector<1x8x8xf32> -> vector<1x8x8xf32>
    "tpu.trace_stop"() : () -> ()
    %119 = arith.truncf %118 : vector<1x8x8xf32> to vector<1x8x8xbf16>
    %120 = vector.shape_cast %119 : vector<1x8x8xbf16> to vector<8x8xbf16>
    %c0_74 = arith.constant 0 : index
    %c2_75 = arith.constant 2 : index
    %c0_76 = arith.constant 0 : index
    %c0_77 = arith.constant 0 : index
    %121 = vector.load %arg10[%c0_74, %c2_75, %c0_76, %c0_77] : memref<1x4x8x32xbf16, #tpu.memory_space<vmem>>, vector<1x1x8x32xbf16>
    %122 = vector.shape_cast %121 : vector<1x1x8x32xbf16> to vector<8x32xbf16>
    %cst_78 = arith.constant dense<0.000000e+00> : vector<8x32xf32>
    %123 = tpu.matmul %120, %122, %cst_78 {dimension_numbers = #tpu.dot_dimension_numbers<[1], [0], [0], [1], [0, 0, 1, 1], [], []>} : vector<8x8xbf16>, vector<8x32xbf16>, vector<8x32xf32> -> vector<8x32xf32>
    %124 = arith.addf %86, %123 : vector<8x32xf32>
    %c0_79 = arith.constant 0 : index
    %c3 = arith.constant 3 : index
    %c0_80 = arith.constant 0 : index
    %c0_81 = arith.constant 0 : index
    %125 = vector.load %arg7[%c0_79, %c3, %c0_80, %c0_81] : memref<1x4x32x8xbf16, #tpu.memory_space<vmem>>, vector<1x1x32x8xbf16>
    %126 = vector.shape_cast %125 : vector<1x1x32x8xbf16> to vector<32x8xbf16>
    %cst_82 = arith.constant dense<0.000000e+00> : vector<8x8xf32>
    %127 = tpu.matmul %4, %126, %cst_82 {dimension_numbers = #tpu.dot_dimension_numbers<[1], [0], [0], [1], [0, 0, 1, 1], [], []>} : vector<8x32xbf16>, vector<32x8xbf16>, vector<8x8xf32> -> vector<8x8xf32>
    %128 = vector.extract_strided_slice %6 {offsets = [3, 0], sizes = [1, 8], strides = [1, 1]} : vector<16x32xf32> to vector<1x8xf32>
    %129 = vector.broadcast %128 : vector<1x8xf32> to vector<8x8xf32>
    %130 = arith.addf %127, %129 : vector<8x8xf32>
    %131 = arith.truncf %130 : vector<8x8xf32> to vector<8x8xbf16>
    %c0_83 = arith.constant 0 : index
    %c3_84 = arith.constant 3 : index
    %c0_85 = arith.constant 0 : index
    %c0_86 = arith.constant 0 : index
    %132 = vector.load %arg8[%c0_83, %c3_84, %c0_85, %c0_86] : memref<1x4x32x8xbf16, #tpu.memory_space<vmem>>, vector<1x1x32x8xbf16>
    %133 = vector.shape_cast %132 : vector<1x1x32x8xbf16> to vector<32x8xbf16>
    %cst_87 = arith.constant dense<0.000000e+00> : vector<8x8xf32>
    %134 = tpu.matmul %4, %133, %cst_87 {dimension_numbers = #tpu.dot_dimension_numbers<[1], [0], [0], [1], [0, 0, 1, 1], [], []>} : vector<8x32xbf16>, vector<32x8xbf16>, vector<8x8xf32> -> vector<8x8xf32>
    %135 = arith.truncf %134 : vector<8x8xf32> to vector<8x8xbf16>
    %c0_88 = arith.constant 0 : index
    %c3_89 = arith.constant 3 : index
    %c0_90 = arith.constant 0 : index
    %c0_91 = arith.constant 0 : index
    %136 = vector.load %arg9[%c0_88, %c3_89, %c0_90, %c0_91] : memref<1x4x32x8xbf16, #tpu.memory_space<vmem>>, vector<1x1x32x8xbf16>
    %137 = vector.shape_cast %136 : vector<1x1x32x8xbf16> to vector<32x8xbf16>
    %cst_92 = arith.constant dense<0.000000e+00> : vector<8x8xf32>
    %138 = tpu.matmul %4, %137, %cst_92 {dimension_numbers = #tpu.dot_dimension_numbers<[1], [0], [0], [1], [0, 0, 1, 1], [], []>} : vector<8x32xbf16>, vector<32x8xbf16>, vector<8x8xf32> -> vector<8x8xf32>
    %139 = arith.truncf %138 : vector<8x8xf32> to vector<8x8xbf16>
    %140 = vector.shape_cast %131 : vector<8x8xbf16> to vector<1x8x8xbf16>
    %141 = vector.shape_cast %135 : vector<8x8xbf16> to vector<1x8x8xbf16>
    "tpu.trace_start"() <{level = 10 : i32, message = "bqd,bkd->bqk"}> : () -> ()
    %cst_93 = arith.constant dense<0.000000e+00> : vector<1x8x8xf32>
    %142 = tpu.matmul %140, %141, %cst_93 {dimension_numbers = #tpu.dot_dimension_numbers<[2], [2], [1], [1], [0, 0, 0, 1, 1, 1], [0], [0]>} : vector<1x8x8xbf16>, vector<1x8x8xbf16>, vector<1x8x8xf32> -> vector<1x8x8xf32>
    "tpu.trace_stop"() : () -> ()
    %143 = arith.addf %142, %11 : vector<1x8x8xf32>
    %cst_94 = arith.constant dense<0xFF800000> : vector<1x8xf32>
    %144 = vector.multi_reduction <maximumf>, %143, %cst_94 [2] : vector<1x8x8xf32> to vector<1x8xf32>
    %145 = vector.shape_cast %144 : vector<1x8xf32> to vector<1x8x1xf32>
    %146 = vector.broadcast %145 : vector<1x8x1xf32> to vector<1x8x8xf32>
    %147 = arith.subf %143, %146 : vector<1x8x8xf32>
    %148 = math.exp %147 : vector<1x8x8xf32>
    %cst_95 = arith.constant dense<0.000000e+00> : vector<1x8xf32>
    %149 = vector.multi_reduction <add>, %148, %cst_95 [2] : vector<1x8x8xf32> to vector<1x8xf32>
    %150 = vector.shape_cast %149 : vector<1x8xf32> to vector<1x8x1xf32>
    %151 = tpu.reciprocal %150 {approx = true} : vector<1x8x1xf32> -> vector<1x8x1xf32>
    %152 = vector.broadcast %151 : vector<1x8x1xf32> to vector<1x8x8xf32>
    %153 = arith.mulf %148, %152 : vector<1x8x8xf32>
    %154 = arith.truncf %153 : vector<1x8x8xf32> to vector<1x8x8xbf16>
    %155 = vector.shape_cast %139 : vector<8x8xbf16> to vector<1x8x8xbf16>
    "tpu.trace_start"() <{level = 10 : i32, message = "bqk,bkd->bqd"}> : () -> ()
    %cst_96 = arith.constant dense<0.000000e+00> : vector<1x8x8xf32>
    %156 = tpu.matmul %154, %155, %cst_96 {dimension_numbers = #tpu.dot_dimension_numbers<[2], [1], [1], [2], [0, 0, 0, 1, 1, 2], [0], [0]>} : vector<1x8x8xbf16>, vector<1x8x8xbf16>, vector<1x8x8xf32> -> vector<1x8x8xf32>
    "tpu.trace_stop"() : () -> ()
    %157 = arith.truncf %156 : vector<1x8x8xf32> to vector<1x8x8xbf16>
    %158 = vector.shape_cast %157 : vector<1x8x8xbf16> to vector<8x8xbf16>
    %c0_97 = arith.constant 0 : index
    %c3_98 = arith.constant 3 : index
    %c0_99 = arith.constant 0 : index
    %c0_100 = arith.constant 0 : index
    %159 = vector.load %arg10[%c0_97, %c3_98, %c0_99, %c0_100] : memref<1x4x8x32xbf16, #tpu.memory_space<vmem>>, vector<1x1x8x32xbf16>
    %160 = vector.shape_cast %159 : vector<1x1x8x32xbf16> to vector<8x32xbf16>
    %cst_101 = arith.constant dense<0.000000e+00> : vector<8x32xf32>
    %161 = tpu.matmul %158, %160, %cst_101 {dimension_numbers = #tpu.dot_dimension_numbers<[1], [0], [0], [1], [0, 0, 1, 1], [], []>} : vector<8x8xbf16>, vector<8x32xbf16>, vector<8x32xf32> -> vector<8x32xf32>
    %162 = arith.addf %124, %161 : vector<8x32xf32>
    %163 = vector.extract_strided_slice %6 {offsets = [4, 0], sizes = [1, 32], strides = [1, 1]} : vector<16x32xf32> to vector<1x32xf32>
    %164 = vector.broadcast %163 : vector<1x32xf32> to vector<8x32xf32>
    %165 = arith.addf %162, %164 : vector<8x32xf32>
    %166 = arith.addf %3, %165 : vector<8x32xf32>
    %167 = vector.extract_strided_slice %6 {offsets = [7, 0], sizes = [1, 32], strides = [1, 1]} : vector<16x32xf32> to vector<1x32xf32>
    %168 = vector.extract_strided_slice %6 {offsets = [8, 0], sizes = [1, 32], strides = [1, 1]} : vector<16x32xf32> to vector<1x32xf32>
    %cst_102 = arith.constant dense<0.000000e+00> : vector<8xf32>
    %169 = vector.multi_reduction <add>, %166, %cst_102 [1] : vector<8x32xf32> to vector<8xf32>
    %170 = vector.shape_cast %169 : vector<8xf32> to vector<8x1xf32>
    %cst_103 = arith.constant 3.200000e+01 : f32
    %171 = vector.broadcast %cst_103 : f32 to vector<8x1xf32>
    %172 = arith.divf %170, %171 : vector<8x1xf32>
    %173 = vector.broadcast %172 : vector<8x1xf32> to vector<8x32xf32>
    %174 = arith.subf %166, %173 : vector<8x32xf32>
    %175 = arith.mulf %174, %174 : vector<8x32xf32>
    %cst_104 = arith.constant dense<0.000000e+00> : vector<8xf32>
    %176 = vector.multi_reduction <add>, %175, %cst_104 [1] : vector<8x32xf32> to vector<8xf32>
    %177 = vector.shape_cast %176 : vector<8xf32> to vector<8x1xf32>
    %cst_105 = arith.constant 3.200000e+01 : f32
    %178 = vector.broadcast %cst_105 : f32 to vector<8x1xf32>
    %179 = arith.divf %177, %178 : vector<8x1xf32>
    %180 = vector.broadcast %172 : vector<8x1xf32> to vector<8x32xf32>
    %181 = arith.subf %166, %180 : vector<8x32xf32>
    %cst_106 = arith.constant 9.99999974E-6 : f32
    %182 = vector.broadcast %cst_106 : f32 to vector<8x1xf32>
    %183 = arith.addf %179, %182 : vector<8x1xf32>
    %184 = math.rsqrt %183 : vector<8x1xf32>
    %185 = vector.broadcast %184 : vector<8x1xf32> to vector<8x32xf32>
    %186 = arith.mulf %181, %185 : vector<8x32xf32>
    %187 = vector.broadcast %167 : vector<1x32xf32> to vector<8x32xf32>
    %188 = arith.mulf %186, %187 : vector<8x32xf32>
    %189 = vector.broadcast %168 : vector<1x32xf32> to vector<8x32xf32>
    %190 = arith.addf %188, %189 : vector<8x32xf32>
    %191 = arith.truncf %190 : vector<8x32xf32> to vector<8x32xbf16>
    %c0_107 = arith.constant 0 : index
    %c0_108 = arith.constant 0 : index
    %c0_109 = arith.constant 0 : index
    %192 = vector.load %arg11[%c0_107, %c0_108, %c0_109] : memref<1x32x32xbf16, #tpu.memory_space<vmem>>, vector<1x32x32xbf16>
    %193 = vector.shape_cast %192 : vector<1x32x32xbf16> to vector<32x32xbf16>
    %cst_110 = arith.constant dense<0.000000e+00> : vector<8x32xf32>
    %194 = tpu.matmul %191, %193, %cst_110 {dimension_numbers = #tpu.dot_dimension_numbers<[1], [0], [0], [1], [0, 0, 1, 1], [], []>} : vector<8x32xbf16>, vector<32x32xbf16>, vector<8x32xf32> -> vector<8x32xf32>
    %195 = vector.extract_strided_slice %6 {offsets = [5, 0], sizes = [1, 32], strides = [1, 1]} : vector<16x32xf32> to vector<1x32xf32>
    %196 = vector.broadcast %195 : vector<1x32xf32> to vector<8x32xf32>
    %197 = arith.addf %194, %196 : vector<8x32xf32>
    %cst_111 = arith.constant 0.000000e+00 : f32
    %198 = vector.broadcast %cst_111 : f32 to vector<8x32xf32>
    %199 = arith.maximumf %197, %198 : vector<8x32xf32>
    %200 = arith.truncf %199 : vector<8x32xf32> to vector<8x32xbf16>
    %c0_112 = arith.constant 0 : index
    %c0_113 = arith.constant 0 : index
    %c0_114 = arith.constant 0 : index
    %201 = vector.load %arg12[%c0_112, %c0_113, %c0_114] : memref<1x32x32xbf16, #tpu.memory_space<vmem>>, vector<1x32x32xbf16>
    %202 = vector.shape_cast %201 : vector<1x32x32xbf16> to vector<32x32xbf16>
    %cst_115 = arith.constant dense<0.000000e+00> : vector<8x32xf32>
    %203 = tpu.matmul %200, %202, %cst_115 {dimension_numbers = #tpu.dot_dimension_numbers<[1], [0], [0], [1], [0, 0, 1, 1], [], []>} : vector<8x32xbf16>, vector<32x32xbf16>, vector<8x32xf32> -> vector<8x32xf32>
    %204 = vector.extract_strided_slice %6 {offsets = [6, 0], sizes = [1, 32], strides = [1, 1]} : vector<16x32xf32> to vector<1x32xf32>
    %205 = vector.broadcast %204 : vector<1x32xf32> to vector<8x32xf32>
    %206 = arith.addf %203, %205 : vector<8x32xf32>
    %207 = arith.addf %190, %206 : vector<8x32xf32>
    %208 = vector.extract_strided_slice %6 {offsets = [9, 0], sizes = [1, 32], strides = [1, 1]} : vector<16x32xf32> to vector<1x32xf32>
    %209 = vector.extract_strided_slice %6 {offsets = [10, 0], sizes = [1, 32], strides = [1, 1]} : vector<16x32xf32> to vector<1x32xf32>
    %cst_116 = arith.constant dense<0.000000e+00> : vector<8xf32>
    %210 = vector.multi_reduction <add>, %207, %cst_116 [1] : vector<8x32xf32> to vector<8xf32>
    %211 = vector.shape_cast %210 : vector<8xf32> to vector<8x1xf32>
    %cst_117 = arith.constant 3.200000e+01 : f32
    %212 = vector.broadcast %cst_117 : f32 to vector<8x1xf32>
    %213 = arith.divf %211, %212 : vector<8x1xf32>
    %214 = vector.broadcast %213 : vector<8x1xf32> to vector<8x32xf32>
    %215 = arith.subf %207, %214 : vector<8x32xf32>
    %216 = arith.mulf %215, %215 : vector<8x32xf32>
    %cst_118 = arith.constant dense<0.000000e+00> : vector<8xf32>
    %217 = vector.multi_reduction <add>, %216, %cst_118 [1] : vector<8x32xf32> to vector<8xf32>
    %218 = vector.shape_cast %217 : vector<8xf32> to vector<8x1xf32>
    %cst_119 = arith.constant 3.200000e+01 : f32
    %219 = vector.broadcast %cst_119 : f32 to vector<8x1xf32>
    %220 = arith.divf %218, %219 : vector<8x1xf32>
    %221 = vector.broadcast %213 : vector<8x1xf32> to vector<8x32xf32>
    %222 = arith.subf %207, %221 : vector<8x32xf32>
    %cst_120 = arith.constant 9.99999974E-6 : f32
    %223 = vector.broadcast %cst_120 : f32 to vector<8x1xf32>
    %224 = arith.addf %220, %223 : vector<8x1xf32>
    %225 = math.rsqrt %224 : vector<8x1xf32>
    %226 = vector.broadcast %225 : vector<8x1xf32> to vector<8x32xf32>
    %227 = arith.mulf %222, %226 : vector<8x32xf32>
    %228 = vector.broadcast %208 : vector<1x32xf32> to vector<8x32xf32>
    %229 = arith.mulf %227, %228 : vector<8x32xf32>
    %230 = vector.broadcast %209 : vector<1x32xf32> to vector<8x32xf32>
    %231 = arith.addf %229, %230 : vector<8x32xf32>
    %c0_121 = arith.constant 0 : index
    %c0_122 = arith.constant 0 : index
    %232 = vector.load %arg17[%c0_121, %c0_122] : memref<8x32xf32, #tpu.memory_space<vmem>>, vector<8x32xf32>
    tpu.vector_store %arg17[%c0_121, %c0_122], %231 {strides = array<i32>} : memref<8x32xf32, #tpu.memory_space<vmem>>, vector<8x32xf32>,
    %c1_i32 = arith.constant 1 : i32
    %233 = arith.cmpi eq, %arg1, %c1_i32 : i32
    %234 = arith.extui %233 : i1 to i32
    %c0_i32_123 = arith.constant 0 : i32
    %235 = arith.cmpi ne, %234, %c0_i32_123 : i32
    scf.if %235 {
      %236 = arith.truncf %231 : vector<8x32xf32> to vector<8x32xbf16>
      %c0_124 = arith.constant 0 : index
      %c0_125 = arith.constant 0 : index
      %237 = vector.load %arg14[%c0_124, %c0_125] : memref<32x128xbf16, #tpu.memory_space<vmem>>, vector<32x128xbf16>
      %cst_126 = arith.constant dense<0.000000e+00> : vector<8x128xf32>
      %238 = tpu.matmul %236, %237, %cst_126 {dimension_numbers = #tpu.dot_dimension_numbers<[1], [0], [0], [1], [0, 0, 1, 1], [], []>} : vector<8x32xbf16>, vector<32x128xbf16>, vector<8x128xf32> -> vector<8x128xf32>
      %c0_127 = arith.constant 0 : index
      %c0_128 = arith.constant 0 : index
      %239 = vector.load %arg15[%c0_127, %c0_128] : memref<1x128xf32, #tpu.memory_space<vmem>>, vector<1x128xf32>
      %240 = vector.broadcast %239 : vector<1x128xf32> to vector<8x128xf32>
      %241 = arith.addf %238, %240 : vector<8x128xf32>
      %242 = math.tanh %241 : vector<8x128xf32>
      %243 = vector.shape_cast %242 : vector<8x128xf32> to vector<1x8x128xf32>
      %c0_129 = arith.constant 0 : index
      %c0_130 = arith.constant 0 : index
      %c0_131 = arith.constant 0 : index
      %244 = vector.load %arg16[%c0_129, %c0_130, %c0_131] : memref<1x8x128xf32, #tpu.memory_space<vmem>>, vector<1x8x128xf32>
      tpu.vector_store %arg16[%c0_129, %c0_130, %c0_131], %243 {strides = array<i32>} : memref<1x8x128xf32, #tpu.memory_space<vmem>>, vector<1x8x128xf32>,
    } else {
    }
    return
  }
  func.func @transform_0(%arg0: i32, %arg1: i32) -> (i32, i32, i32) {
    %c0_i32 = arith.constant 0 : i32
    %c0_i32_0 = arith.constant 0 : i32
    %c0_i32_1 = arith.constant 0 : i32
    return %arg0, %c0_i32, %c0_i32_0 : i32, i32, i32
  }
  func.func @transform_1(%arg0: i32, %arg1: i32) -> (i32, i32) {
    %c0_i32 = arith.constant 0 : i32
    %c0_i32_0 = arith.constant 0 : i32
    %c0_i32_1 = arith.constant 0 : i32
    return %c0_i32, %c0_i32_0 : i32, i32
  }
  func.func @transform_2(%arg0: i32, %arg1: i32) -> (i32, i32) {
    %c0_i32 = arith.constant 0 : i32
    %c0_i32_0 = arith.constant 0 : i32
    %c0_i32_1 = arith.constant 0 : i32
    return %c0_i32, %c0_i32_0 : i32, i32
  }
  func.func @transform_3(%arg0: i32, %arg1: i32) -> (i32, i32, i32) {
    %c0_i32 = arith.constant 0 : i32
    %c0_i32_0 = arith.constant 0 : i32
    %c0_i32_1 = arith.constant 0 : i32
    return %arg0, %c0_i32, %c0_i32_0 : i32, i32, i32
  }
  func.func @transform_4(%arg0: i32, %arg1: i32) -> (i32, i32) {
    %c0_i32 = arith.constant 0 : i32
    %c0_i32_0 = arith.constant 0 : i32
    %c0_i32_1 = arith.constant 0 : i32
    return %c0_i32, %c0_i32_0 : i32, i32
  }
  func.func @transform_5(%arg0: i32, %arg1: i32) -> (i32, i32, i32, i32) {
    %c0_i32 = arith.constant 0 : i32
    %c0_i32_0 = arith.constant 0 : i32
    %c0_i32_1 = arith.constant 0 : i32
    %c0_i32_2 = arith.constant 0 : i32
    return %arg1, %c0_i32, %c0_i32_0, %c0_i32_1 : i32, i32, i32, i32
  }
  func.func @transform_6(%arg0: i32, %arg1: i32) -> (i32, i32, i32, i32) {
    %c0_i32 = arith.constant 0 : i32
    %c0_i32_0 = arith.constant 0 : i32
    %c0_i32_1 = arith.constant 0 : i32
    %c0_i32_2 = arith.constant 0 : i32
    return %arg1, %c0_i32, %c0_i32_0, %c0_i32_1 : i32, i32, i32, i32
  }
  func.func @transform_7(%arg0: i32, %arg1: i32) -> (i32, i32, i32, i32) {
    %c0_i32 = arith.constant 0 : i32
    %c0_i32_0 = arith.constant 0 : i32
    %c0_i32_1 = arith.constant 0 : i32
    %c0_i32_2 = arith.constant 0 : i32
    return %arg1, %c0_i32, %c0_i32_0, %c0_i32_1 : i32, i32, i32, i32
  }
  func.func @transform_8(%arg0: i32, %arg1: i32) -> (i32, i32, i32, i32) {
    %c0_i32 = arith.constant 0 : i32
    %c0_i32_0 = arith.constant 0 : i32
    %c0_i32_1 = arith.constant 0 : i32
    %c0_i32_2 = arith.constant 0 : i32
    return %arg1, %c0_i32, %c0_i32_0, %c0_i32_1 : i32, i32, i32, i32
  }
  func.func @transform_9(%arg0: i32, %arg1: i32) -> (i32, i32, i32) {
    %c0_i32 = arith.constant 0 : i32
    %c0_i32_0 = arith.constant 0 : i32
    %c0_i32_1 = arith.constant 0 : i32
    return %arg1, %c0_i32, %c0_i32_0 : i32, i32, i32
  }
  func.func @transform_10(%arg0: i32, %arg1: i32) -> (i32, i32, i32) {
    %c0_i32 = arith.constant 0 : i32
    %c0_i32_0 = arith.constant 0 : i32
    %c0_i32_1 = arith.constant 0 : i32
    return %arg1, %c0_i32, %c0_i32_0 : i32, i32, i32
  }
  func.func @transform_11(%arg0: i32, %arg1: i32) -> (i32, i32, i32) {
    %c0_i32 = arith.constant 0 : i32
    %c0_i32_0 = arith.constant 0 : i32
    %c0_i32_1 = arith.constant 0 : i32
    return %arg1, %c0_i32, %c0_i32_0 : i32, i32, i32
  }
  func.func @transform_12(%arg0: i32, %arg1: i32) -> (i32, i32) {
    %c0_i32 = arith.constant 0 : i32
    %c0_i32_0 = arith.constant 0 : i32
    %c0_i32_1 = arith.constant 0 : i32
    return %c0_i32, %c0_i32_0 : i32, i32
  }
  func.func @transform_13(%arg0: i32, %arg1: i32) -> (i32, i32) {
    %c0_i32 = arith.constant 0 : i32
    %c0_i32_0 = arith.constant 0 : i32
    %c0_i32_1 = arith.constant 0 : i32
    return %c0_i32, %c0_i32_0 : i32, i32
  }
  func.func @transform_14(%arg0: i32, %arg1: i32) -> (i32, i32, i32) {
    %c0_i32 = arith.constant 0 : i32
    %c0_i32_0 = arith.constant 0 : i32
    %c0_i32_1 = arith.constant 0 : i32
    return %arg0, %c0_i32, %c0_i32_0 : i32, i32, i32
  }
}

</mosaic_0001>

<llo_original>
// kernel: tpu_custom_call.1
$region0: #{tpu_custom_call.1}
  #allocation0 [shape = 'u32[]', space=smem, size = 0x4, offset = 0x4, fixed_abs, tag = 'smem constant byte address 0x4 - core index']
  #allocation1 [shape = 'u32[144,128]{1,0:T(1,128)}', space=vmem, size = 0x12000, scoped, tag = 'internal scratch']
  #allocation2 [shape = 'f32[8,32]{1,0:T(8,128)}', space=vmem, size = 0x1000, scoped, tag = 'scratch operand']
  %s0 = inlined_call_operand.vmem [shape: f32[2,8,128], index: 0, kind: input, shape index: {}]
  %s1 = inlined_call_operand.vmem [shape: f32[8,32], index: 1, kind: input, shape index: {}]
  %s2 = inlined_call_operand.vmem [shape: f32[8,8], index: 2, kind: input, shape index: {}]
  %s3 = inlined_call_operand.vmem [shape: f32[2,1,8], index: 3, kind: input, shape index: {}]
  %s4 = inlined_call_operand.vmem [shape: bf16[128,32], index: 4, kind: input, shape index: {}]
  %s5 = inlined_call_operand.vmem [shape: bf16[2,4,32,8], index: 5, kind: input, shape index: {}]
  %s6 = inlined_call_operand.vmem [shape: bf16[2,4,32,8], index: 6, kind: input, shape index: {}]
  %s7 = inlined_call_operand.vmem [shape: bf16[2,4,32,8], index: 7, kind: input, shape index: {}]
  %s8 = inlined_call_operand.vmem [shape: bf16[2,4,8,32], index: 8, kind: input, shape index: {}]
  %s9 = inlined_call_operand.vmem [shape: bf16[2,32,32], index: 9, kind: input, shape index: {}]
  %s10 = inlined_call_operand.vmem [shape: bf16[2,32,32], index: 10, kind: input, shape index: {}]
  %s11 = inlined_call_operand.vmem [shape: f32[2,16,32], index: 11, kind: input, shape index: {}]
  %s12 = inlined_call_operand.vmem [shape: bf16[32,128], index: 12, kind: input, shape index: {}]
  %s13 = inlined_call_operand.vmem [shape: f32[1,128], index: 13, kind: input, shape index: {}]
  %s14 = inlined_call_operand.hbm [shape: f32[2,8,128], index: 14, kind: output, shape index: {}]
  %s15 = sld [smem:[#allocation0]]
  $region97: #{tpu_custom_call.1} parent=0
    _
  %s17 = ssub.s32 1, %s15
  %s18 = scalar_select 0, %s17, %s15
  $region1: #{tpu_custom_call.1} parent=0
    #allocation3 [shape = 'u8[8192]{0}', space=vmem, size = 0x2000, scoped, tag = 'output window, operand 0']
    #allocation4 [shape = 's32[2]{0}', space=sflag, size = 0x8, scoped, tag = 'scoped memory for tpu_custom_call.1']
    %19 = vsyncpa [#allocation4], 0
    %s20 = scalar_lea.sflag [#allocation4], 1
    %21 = vsyncpa %s20, 0
    loop: start=0, step=1, limit=6
    $region2: #{tpu_custom_call.1} parent=1 // loop_pre_header
      _
    $region3: #{tpu_custom_call.1} parent=1 // loop_header
      %s23 = sphi 0, %s27
      %p24 = scmp.ge.s32.totalorder %s23, 6
      %s30 = sphi 0, %s42
      %s31 = sphi 0, %s38
      %s32 = sphi 0, %s30
      %s33 = sphi 0, %s31
      %s34 = sphi 0, %s32
      %s35 = sphi 0, %s33
      %s45 = sphi 0, %s47
      %s48 = sphi 0, %s45
      %s49 = sphi 0, %s48
      %s65 = sphi 0, %s49
      %s69 = sphi 0, %s69
      %s71 = sphi 0, %s69
      %s72 = sphi 0, %s71
      %s86 = sphi 0, %s72
      %s90 = sphi 0, %s90
      %s92 = sphi 0, %s90
      %s93 = sphi 0, %s92
      %s107 = sphi 0, %s93
      %s113 = sphi 0, %s115
      %s116 = sphi 0, %s113
      %s117 = sphi 0, %s116
      %s133 = sphi 0, %s117
      %s137 = sphi 0, %s137
      %s139 = sphi 0, %s137
      %s140 = sphi 0, %s139
      %s154 = sphi 0, %s140
      %s160 = sphi 0, %s162
      %s163 = sphi 0, %s160
      %s164 = sphi 0, %s163
      %s180 = sphi 0, %s164
      %s186 = sphi 0, %s188
      %s189 = sphi 0, %s186
      %s190 = sphi 0, %s189
      %s206 = sphi 0, %s190
      %s212 = sphi 0, %s214
      %s215 = sphi 0, %s212
      %s216 = sphi 0, %s215
      %s232 = sphi 0, %s216
      %s238 = sphi 0, %s240
      %s241 = sphi 0, %s238
      %s242 = sphi 0, %s241
      %s258 = sphi 0, %s242
      %s264 = sphi 0, %s266
      %s267 = sphi 0, %s264
      %s268 = sphi 0, %s267
      %s284 = sphi 0, %s268
      %s290 = sphi 0, %s292
      %s293 = sphi 0, %s290
      %s294 = sphi 0, %s293
      %s310 = sphi 0, %s294
      %s316 = sphi 0, %s318
      %s319 = sphi 0, %s316
      %s320 = sphi 0, %s319
      %s336 = sphi 0, %s320
      %s340 = sphi 0, %s340
      %s342 = sphi 0, %s340
      %s343 = sphi 0, %s342
      %s357 = sphi 0, %s343
      %s361 = sphi 0, %s361
      %s363 = sphi 0, %s361
      %s364 = sphi 0, %s363
      %s378 = sphi 0, %s364
      %s384 = sphi 0, %s386
      %s387 = sphi 0, %s384
      %s388 = sphi 0, %s387
      %s404 = sphi 0, %s388
    $region4: #{tpu_custom_call.1} parent=1 // loop_header_branch
      %26 = sbr.rel (%p24) target = $region8
    $region5: #{tpu_custom_call.1} parent=1 // loop_body
      %s28 = ssub.s32 %s23, 1
      %s29 = ssub.s32 %s23, 2
      %s36 = sadd.s32 1, %s31
      %p37 = scmp.ge.s32.totalorder %s36, 2
      %s38 = scalar_select %p37, 0, %s36
      %s39 = sadd.s32 1, %s30
      %s40 = scalar_select %p37, %s39, %s30
      %p41 = scmp.ge.s32.totalorder %s40, 2
      %s42 = scalar_select %p41, 0, %s40
      %s43 = ssub.s32 %s30, %s42
      %p44 = scmp.eq.s32.totalorder %s43, 0
      %s46 = sadd.s32 %s45, 1
      %s47 = scalar_select %p44, %s45, %s46
      %p50 = pneg %p44
      %p51 = scmp.eq.s32.totalorder %s23, 3
      %p52 = por %p50, %p51
      %p53 = scmp.ne.s32.totalorder %s45, %s48
      %p54 = scmp.eq.s32.totalorder %s23, 0
      %p55 = por %p53, %p54
      %p56 = scmp.ne.s32.totalorder %s45, %s48
      %p57 = scmp.eq.s32.totalorder %s28, 3
      %p58 = por %p56, %p57
      %p59 = scmp.ne.s32.totalorder %s48, %s49
      %p60 = scmp.eq.s32.totalorder %s28, 0
      %p61 = por %p59, %p60
      %p62 = scmp.ne.s32.totalorder %s48, %s49
      %p63 = scmp.eq.s32.totalorder %s29, 3
      %p64 = por %p62, %p63
      %p66 = scmp.ne.s32.totalorder %s49, %s65
      %p67 = scmp.eq.s32.totalorder %s29, 0
      %p68 = por %p66, %p67
      %s70 = sadd.s32 %s69, 1
      %p73 = scmp.eq.s32.totalorder %s23, 3
      %p74 = scmp.ne.s32.totalorder %s69, %s71
      %p75 = scmp.eq.s32.totalorder %s23, 0
      %p76 = por %p74, %p75
      %p77 = scmp.ne.s32.totalorder %s69, %s71
      %p78 = scmp.eq.s32.totalorder %s28, 3
      %p79 = por %p77, %p78
      %p80 = scmp.ne.s32.totalorder %s71, %s72
      %p81 = scmp.eq.s32.totalorder %s28, 0
      %p82 = por %p80, %p81
      %p83 = scmp.ne.s32.totalorder %s71, %s72
      %p84 = scmp.eq.s32.totalorder %s29, 3
      %p85 = por %p83, %p84
      %p87 = scmp.ne.s32.totalorder %s72, %s86
      %p88 = scmp.eq.s32.totalorder %s29, 0
      %p89 = por %p87, %p88
      %s91 = sadd.s32 %s90, 1
      %p94 = scmp.eq.s32.totalorder %s23, 3
      %p95 = scmp.ne.s32.totalorder %s90, %s92
      %p96 = scmp.eq.s32.totalorder %s23, 0
      %p97 = por %p95, %p96
      %p98 = scmp.ne.s32.totalorder %s90, %s92
      %p99 = scmp.eq.s32.totalorder %s28, 3
      %p100 = por %p98, %p99
      %p101 = scmp.ne.s32.totalorder %s92, %s93
      %p102 = scmp.eq.s32.totalorder %s28, 0
      %p103 = por %p101, %p102
      %p104 = scmp.ne.s32.totalorder %s92, %s93
      %p105 = scmp.eq.s32.totalorder %s29, 3
      %p106 = por %p104, %p105
      %p108 = scmp.ne.s32.totalorder %s93, %s107
      %p109 = scmp.eq.s32.totalorder %s29, 0
      %p110 = por %p108, %p109
      %s111 = ssub.s32 %s30, %s42
      %p112 = scmp.eq.s32.totalorder %s111, 0
      %s114 = sadd.s32 %s113, 1
      %s115 = scalar_select %p112, %s113, %s114
      %p118 = pneg %p112
      %p119 = scmp.eq.s32.totalorder %s23, 3
      %p120 = por %p118, %p119
      %p121 = scmp.ne.s32.totalorder %s113, %s116
      %p122 = scmp.eq.s32.totalorder %s23, 0
      %p123 = por %p121, %p122
      %p124 = scmp.ne.s32.totalorder %s113, %s116
      %p125 = scmp.eq.s32.totalorder %s28, 3
      %p126 = por %p124, %p125
      %p127 = scmp.ne.s32.totalorder %s116, %s117
      %p128 = scmp.eq.s32.totalorder %s28, 0
      %p129 = por %p127, %p128
      %p130 = scmp.ne.s32.totalorder %s116, %s117
      %p131 = scmp.eq.s32.totalorder %s29, 3
      %p132 = por %p130, %p131
      %p134 = scmp.ne.s32.totalorder %s117, %s133
      %p135 = scmp.eq.s32.totalorder %s29, 0
      %p136 = por %p134, %p135
      %s138 = sadd.s32 %s137, 1
      %p141 = scmp.eq.s32.totalorder %s23, 3
      %p142 = scmp.ne.s32.totalorder %s137, %s139
      %p143 = scmp.eq.s32.totalorder %s23, 0
      %p144 = por %p142, %p143
      %p145 = scmp.ne.s32.totalorder %s137, %s139
      %p146 = scmp.eq.s32.totalorder %s28, 3
      %p147 = por %p145, %p146
      %p148 = scmp.ne.s32.totalorder %s139, %s140
      %p149 = scmp.eq.s32.totalorder %s28, 0
      %p150 = por %p148, %p149
      %p151 = scmp.ne.s32.totalorder %s139, %s140
      %p152 = scmp.eq.s32.totalorder %s29, 3
      %p153 = por %p151, %p152
      %p155 = scmp.ne.s32.totalorder %s140, %s154
      %p156 = scmp.eq.s32.totalorder %s29, 0
      %p157 = por %p155, %p156
      %s158 = ssub.s32 %s31, %s38
      %p159 = scmp.eq.s32.totalorder %s158, 0
      %s161 = sadd.s32 %s160, 1
      %s162 = scalar_select %p159, %s160, %s161
      %p165 = pneg %p159
      %p166 = scmp.eq.s32.totalorder %s23, 3
      %p167 = por %p165, %p166
      %p168 = scmp.ne.s32.totalorder %s160, %s163
      %p169 = scmp.eq.s32.totalorder %s23, 0
      %p170 = por %p168, %p169
      %p171 = scmp.ne.s32.totalorder %s160, %s163
      %p172 = scmp.eq.s32.totalorder %s28, 3
      %p173 = por %p171, %p172
      %p174 = scmp.ne.s32.totalorder %s163, %s164
      %p175 = scmp.eq.s32.totalorder %s28, 0
      %p176 = por %p174, %p175
      %p177 = scmp.ne.s32.totalorder %s163, %s164
      %p178 = scmp.eq.s32.totalorder %s29, 3
      %p179 = por %p177, %p178
      %p181 = scmp.ne.s32.totalorder %s164, %s180
      %p182 = scmp.eq.s32.totalorder %s29, 0
      %p183 = por %p181, %p182
      %s184 = ssub.s32 %s31, %s38
      %p185 = scmp.eq.s32.totalorder %s184, 0
      %s187 = sadd.s32 %s186, 1
      %s188 = scalar_select %p185, %s186, %s187
      %p191 = pneg %p185
      %p192 = scmp.eq.s32.totalorder %s23, 3
      %p193 = por %p191, %p192
      %p194 = scmp.ne.s32.totalorder %s186, %s189
      %p195 = scmp.eq.s32.totalorder %s23, 0
      %p196 = por %p194, %p195
      %p197 = scmp.ne.s32.totalorder %s186, %s189
      %p198 = scmp.eq.s32.totalorder %s28, 3
      %p199 = por %p197, %p198
      %p200 = scmp.ne.s32.totalorder %s189, %s190
      %p201 = scmp.eq.s32.totalorder %s28, 0
      %p202 = por %p200, %p201
      %p203 = scmp.ne.s32.totalorder %s189, %s190
      %p204 = scmp.eq.s32.totalorder %s29, 3
      %p205 = por %p203, %p204
      %p207 = scmp.ne.s32.totalorder %s190, %s206
      %p208 = scmp.eq.s32.totalorder %s29, 0
      %p209 = por %p207, %p208
      %s210 = ssub.s32 %s31, %s38
      %p211 = scmp.eq.s32.totalorder %s210, 0
      %s213 = sadd.s32 %s212, 1
      %s214 = scalar_select %p211, %s212, %s213
      %p217 = pneg %p211
      %p218 = scmp.eq.s32.totalorder %s23, 3
      %p219 = por %p217, %p218
      %p220 = scmp.ne.s32.totalorder %s212, %s215
      %p221 = scmp.eq.s32.totalorder %s23, 0
      %p222 = por %p220, %p221
      %p223 = scmp.ne.s32.totalorder %s212, %s215
      %p224 = scmp.eq.s32.totalorder %s28, 3
      %p225 = por %p223, %p224
      %p226 = scmp.ne.s32.totalorder %s215, %s216
      %p227 = scmp.eq.s32.totalorder %s28, 0
      %p228 = por %p226, %p227
      %p229 = scmp.ne.s32.totalorder %s215, %s216
      %p230 = scmp.eq.s32.totalorder %s29, 3
      %p231 = por %p229, %p230
      %p233 = scmp.ne.s32.totalorder %s216, %s232
      %p234 = scmp.eq.s32.totalorder %s29, 0
      %p235 = por %p233, %p234
      %s236 = ssub.s32 %s31, %s38
      %p237 = scmp.eq.s32.totalorder %s236, 0
      %s239 = sadd.s32 %s238, 1
      %s240 = scalar_select %p237, %s238, %s239
      %p243 = pneg %p237
      %p244 = scmp.eq.s32.totalorder %s23, 3
      %p245 = por %p243, %p244
      %p246 = scmp.ne.s32.totalorder %s238, %s241
      %p247 = scmp.eq.s32.totalorder %s23, 0
      %p248 = por %p246, %p247
      %p249 = scmp.ne.s32.totalorder %s238, %s241
      %p250 = scmp.eq.s32.totalorder %s28, 3
      %p251 = por %p249, %p250
      %p252 = scmp.ne.s32.totalorder %s241, %s242
      %p253 = scmp.eq.s32.totalorder %s28, 0
      %p254 = por %p252, %p253
      %p255 = scmp.ne.s32.totalorder %s241, %s242
      %p256 = scmp.eq.s32.totalorder %s29, 3
      %p257 = por %p255, %p256
      %p259 = scmp.ne.s32.totalorder %s242, %s258
      %p260 = scmp.eq.s32.totalorder %s29, 0
      %p261 = por %p259, %p260
      %s262 = ssub.s32 %s31, %s38
      %p263 = scmp.eq.s32.totalorder %s262, 0
      %s265 = sadd.s32 %s264, 1
      %s266 = scalar_select %p263, %s264, %s265
      %p269 = pneg %p263
      %p270 = scmp.eq.s32.totalorder %s23, 3
      %p271 = por %p269, %p270
      %p272 = scmp.ne.s32.totalorder %s264, %s267
      %p273 = scmp.eq.s32.totalorder %s23, 0
      %p274 = por %p272, %p273
      %p275 = scmp.ne.s32.totalorder %s264, %s267
      %p276 = scmp.eq.s32.totalorder %s28, 3
      %p277 = por %p275, %p276
      %p278 = scmp.ne.s32.totalorder %s267, %s268
      %p279 = scmp.eq.s32.totalorder %s28, 0
      %p280 = por %p278, %p279
      %p281 = scmp.ne.s32.totalorder %s267, %s268
      %p282 = scmp.eq.s32.totalorder %s29, 3
      %p283 = por %p281, %p282
      %p285 = scmp.ne.s32.totalorder %s268, %s284
      %p286 = scmp.eq.s32.totalorder %s29, 0
      %p287 = por %p285, %p286
      %s288 = ssub.s32 %s31, %s38
      %p289 = scmp.eq.s32.totalorder %s288, 0
      %s291 = sadd.s32 %s290, 1
      %s292 = scalar_select %p289, %s290, %s291
      %p295 = pneg %p289
      %p296 = scmp.eq.s32.totalorder %s23, 3
      %p297 = por %p295, %p296
      %p298 = scmp.ne.s32.totalorder %s290, %s293
      %p299 = scmp.eq.s32.totalorder %s23, 0
      %p300 = por %p298, %p299
      %p301 = scmp.ne.s32.totalorder %s290, %s293
      %p302 = scmp.eq.s32.totalorder %s28, 3
      %p303 = por %p301, %p302
      %p304 = scmp.ne.s32.totalorder %s293, %s294
      %p305 = scmp.eq.s32.totalorder %s28, 0
      %p306 = por %p304, %p305
      %p307 = scmp.ne.s32.totalorder %s293, %s294
      %p308 = scmp.eq.s32.totalorder %s29, 3
      %p309 = por %p307, %p308
      %p311 = scmp.ne.s32.totalorder %s294, %s310
      %p312 = scmp.eq.s32.totalorder %s29, 0
      %p313 = por %p311, %p312
      %s314 = ssub.s32 %s31, %s38
      %p315 = scmp.eq.s32.totalorder %s314, 0
      %s317 = sadd.s32 %s316, 1
      %s318 = scalar_select %p315, %s316, %s317
      %p321 = pneg %p315
      %p322 = scmp.eq.s32.totalorder %s23, 3
      %p323 = por %p321, %p322
      %p324 = scmp.ne.s32.totalorder %s316, %s319
      %p325 = scmp.eq.s32.totalorder %s23, 0
      %p326 = por %p324, %p325
      %p327 = scmp.ne.s32.totalorder %s316, %s319
      %p328 = scmp.eq.s32.totalorder %s28, 3
      %p329 = por %p327, %p328
      %p330 = scmp.ne.s32.totalorder %s319, %s320
      %p331 = scmp.eq.s32.totalorder %s28, 0
      %p332 = por %p330, %p331
      %p333 = scmp.ne.s32.totalorder %s319, %s320
      %p334 = scmp.eq.s32.totalorder %s29, 3
      %p335 = por %p333, %p334
      %p337 = scmp.ne.s32.totalorder %s320, %s336
      %p338 = scmp.eq.s32.totalorder %s29, 0
      %p339 = por %p337, %p338
      %s341 = sadd.s32 %s340, 1
      %p344 = scmp.eq.s32.totalorder %s23, 3
      %p345 = scmp.ne.s32.totalorder %s340, %s342
      %p346 = scmp.eq.s32.totalorder %s23, 0
      %p347 = por %p345, %p346
      %p348 = scmp.ne.s32.totalorder %s340, %s342
      %p349 = scmp.eq.s32.totalorder %s28, 3
      %p350 = por %p348, %p349
      %p351 = scmp.ne.s32.totalorder %s342, %s343
      %p352 = scmp.eq.s32.totalorder %s28, 0
      %p353 = por %p351, %p352
      %p354 = scmp.ne.s32.totalorder %s342, %s343
      %p355 = scmp.eq.s32.totalorder %s29, 3
      %p356 = por %p354, %p355
      %p358 = scmp.ne.s32.totalorder %s343, %s357
      %p359 = scmp.eq.s32.totalorder %s29, 0
      %p360 = por %p358, %p359
      %s362 = sadd.s32 %s361, 1
      %p365 = scmp.eq.s32.totalorder %s23, 3
      %p366 = scmp.ne.s32.totalorder %s361, %s363
      %p367 = scmp.eq.s32.totalorder %s23, 0
      %p368 = por %p366, %p367
      %p369 = scmp.ne.s32.totalorder %s361, %s363
      %p370 = scmp.eq.s32.totalorder %s28, 3
      %p371 = por %p369, %p370
      %p372 = scmp.ne.s32.totalorder %s363, %s364
      %p373 = scmp.eq.s32.totalorder %s28, 0
      %p374 = por %p372, %p373
      %p375 = scmp.ne.s32.totalorder %s363, %s364
      %p376 = scmp.eq.s32.totalorder %s29, 3
      %p377 = por %p375, %p376
      %p379 = scmp.ne.s32.totalorder %s364, %s378
      %p380 = scmp.eq.s32.totalorder %s29, 0
      %p381 = por %p379, %p380
      %s382 = ssub.s32 %s30, %s42
      %p383 = scmp.eq.s32.totalorder %s382, 0
      %s385 = sadd.s32 %s384, 1
      %s386 = scalar_select %p383, %s384, %s385
      %p389 = pneg %p383
      %p390 = scmp.eq.s32.totalorder %s23, 3
      %p391 = por %p389, %p390
      %p392 = scmp.ne.s32.totalorder %s384, %s387
      %p393 = scmp.eq.s32.totalorder %s23, 0
      %p394 = por %p392, %p393
      %p395 = scmp.ne.s32.totalorder %s384, %s387
      %p396 = scmp.eq.s32.totalorder %s28, 3
      %p397 = por %p395, %p396
      %p398 = scmp.ne.s32.totalorder %s387, %s388
      %p399 = scmp.eq.s32.totalorder %s28, 0
      %p400 = por %p398, %p399
      %p401 = scmp.ne.s32.totalorder %s387, %s388
      %p402 = scmp.eq.s32.totalorder %s29, 3
      %p403 = por %p401, %p402
      %p405 = scmp.ne.s32.totalorder %s388, %s404
      %p406 = scmp.eq.s32.totalorder %s29, 0
      %p407 = por %p405, %p406
      %p408 = scmp.le.s32.totalorder 1, %s23
      %p409 = scmp.lt.s32.totalorder %s23, 5
      %p410 = pnand %p408, %p409
      %p411 = pneg %p410
      // Predicated region
      $region9: #{tpu_custom_call.1} parent=5 // pred_check
        _
      $region10: #{tpu_custom_call.1} parent=5 // pred_check_branch
        %413 = sbr.rel (%p410) target = $region12
      $region11: #{tpu_custom_call.1} parent=5 // pred_region
        %s414 = ssub.s32 %s23, 1
        // Predicated region
        $region13: #{tpu_custom_call.1} parent=11 // pred_check
          %p415 = pneg %p82
        $region14: #{tpu_custom_call.1} parent=11 // pred_check_branch
          %417 = sbr.rel (%p415) target = $region16
        $region15: #{tpu_custom_call.1} parent=11 // pred_region
          _
        $region16: #{tpu_custom_call.1} parent=11 // pred_fallthru
          _
        // Predicated region
        $region17: #{tpu_custom_call.1} parent=11 // pred_check
          %p418 = pneg %p103
        $region18: #{tpu_custom_call.1} parent=11 // pred_check_branch
          %420 = sbr.rel (%p418) target = $region20
        $region19: #{tpu_custom_call.1} parent=11 // pred_region
          _
        $region20: #{tpu_custom_call.1} parent=11 // pred_fallthru
          _
        // Predicated region
        $region21: #{tpu_custom_call.1} parent=11 // pred_check
          %p421 = pneg %p150
        $region22: #{tpu_custom_call.1} parent=11 // pred_check_branch
          %423 = sbr.rel (%p421) target = $region24
        $region23: #{tpu_custom_call.1} parent=11 // pred_region
          _
        $region24: #{tpu_custom_call.1} parent=11 // pred_fallthru
          _
        // Predicated region
        $region25: #{tpu_custom_call.1} parent=11 // pred_check
          %p424 = pneg %p353
        $region26: #{tpu_custom_call.1} parent=11 // pred_check_branch
          %426 = sbr.rel (%p424) target = $region28
        $region27: #{tpu_custom_call.1} parent=11 // pred_region
          _
        $region28: #{tpu_custom_call.1} parent=11 // pred_fallthru
          _
        // Predicated region
        $region29: #{tpu_custom_call.1} parent=11 // pred_check
          %p427 = pneg %p374
        $region30: #{tpu_custom_call.1} parent=11 // pred_check_branch
          %429 = sbr.rel (%p427) target = $region32
        $region31: #{tpu_custom_call.1} parent=11 // pred_region
          _
        $region32: #{tpu_custom_call.1} parent=11 // pred_fallthru
          _
      $region12: #{tpu_custom_call.1} parent=5 // pred_fallthru
        _
      %p430 = scmp.lt.s32.totalorder %s23, 4
      // Predicated region
      $region33: #{tpu_custom_call.1} parent=5 // pred_check
        %p431 = pneg %p430
      $region34: #{tpu_custom_call.1} parent=5 // pred_check_branch
        %433 = sbr.rel (%p431) target = $region36
      $region35: #{tpu_custom_call.1} parent=5 // pred_region
        // Predicated region
        $region37: #{tpu_custom_call.1} parent=35 // pred_check
          %p434 = pneg %p55
        $region38: #{tpu_custom_call.1} parent=35 // pred_check_branch
          %436 = sbr.rel (%p434) target = $region40
        $region39: #{tpu_custom_call.1} parent=35 // pred_region
          %p437 = scmp.lt.s32.totalorder %s30, 1
          %s438 = scalar_select %p437, %s30, 1
          %s439 = smul.addr %s438, 8
          %s440 = scalar_lea.vmem %s0, %s439
        $region40: #{tpu_custom_call.1} parent=35 // pred_fallthru
          _
        // Predicated region
        $region41: #{tpu_custom_call.1} parent=35 // pred_check
          %p441 = pneg %p123
        $region42: #{tpu_custom_call.1} parent=35 // pred_check_branch
          %443 = sbr.rel (%p441) target = $region44
        $region43: #{tpu_custom_call.1} parent=35 // pred_region
          %p444 = scmp.lt.s32.totalorder %s30, 1
          %s445 = scalar_select %p444, %s30, 1
          %s446 = scalar_lea.vmem %s3, %s445
        $region44: #{tpu_custom_call.1} parent=35 // pred_fallthru
          _
        // Predicated region
        $region45: #{tpu_custom_call.1} parent=35 // pred_check
          %p447 = pneg %p170
        $region46: #{tpu_custom_call.1} parent=35 // pred_check_branch
          %449 = sbr.rel (%p447) target = $region48
        $region47: #{tpu_custom_call.1} parent=35 // pred_region
          %p450 = scmp.lt.s32.totalorder %s31, 1
          %s451 = scalar_select %p450, %s31, 1
          %s452 = smul.addr %s451, 16
          %s453 = smul.addr %s452, 4
          %s454 = scalar_lea.vmem %s5, %s453
        $region48: #{tpu_custom_call.1} parent=35 // pred_fallthru
          _
        // Predicated region
        $region49: #{tpu_custom_call.1} parent=35 // pred_check
          %p455 = pneg %p196
        $region50: #{tpu_custom_call.1} parent=35 // pred_check_branch
          %457 = sbr.rel (%p455) target = $region52
        $region51: #{tpu_custom_call.1} parent=35 // pred_region
          %p458 = scmp.lt.s32.totalorder %s31, 1
          %s459 = scalar_select %p458, %s31, 1
          %s460 = smul.addr %s459, 16
          %s461 = smul.addr %s460, 4
          %s462 = scalar_lea.vmem %s6, %s461
        $region52: #{tpu_custom_call.1} parent=35 // pred_fallthru
          _
        // Predicated region
        $region53: #{tpu_custom_call.1} parent=35 // pred_check
          %p463 = pneg %p222
        $region54: #{tpu_custom_call.1} parent=35 // pred_check_branch
          %465 = sbr.rel (%p463) target = $region56
        $region55: #{tpu_custom_call.1} parent=35 // pred_region
          %p466 = scmp.lt.s32.totalorder %s31, 1
          %s467 = scalar_select %p466, %s31, 1
          %s468 = smul.addr %s467, 16
          %s469 = smul.addr %s468, 4
          %s470 = scalar_lea.vmem %s7, %s469
        $region56: #{tpu_custom_call.1} parent=35 // pred_fallthru
          _
        // Predicated region
        $region57: #{tpu_custom_call.1} parent=35 // pred_check
          %p471 = pneg %p248
        $region58: #{tpu_custom_call.1} parent=35 // pred_check_branch
          %473 = sbr.rel (%p471) target = $region60
        $region59: #{tpu_custom_call.1} parent=35 // pred_region
          %p474 = scmp.lt.s32.totalorder %s31, 1
          %s475 = scalar_select %p474, %s31, 1
          %s476 = smul.addr %s475, 4
          %s477 = smul.addr %s476, 4
          %s478 = scalar_lea.vmem %s8, %s477
        $region60: #{tpu_custom_call.1} parent=35 // pred_fallthru
          _
        // Predicated region
        $region61: #{tpu_custom_call.1} parent=35 // pred_check
          %p479 = pneg %p274
        $region62: #{tpu_custom_call.1} parent=35 // pred_check_branch
          %481 = sbr.rel (%p479) target = $region64
        $region63: #{tpu_custom_call.1} parent=35 // pred_region
          %p482 = scmp.lt.s32.totalorder %s31, 1
          %s483 = scalar_select %p482, %s31, 1
          %s484 = smul.addr %s483, 4
          %s485 = smul.addr %s484, 4
          %s486 = scalar_lea.vmem %s9, %s485
        $region64: #{tpu_custom_call.1} parent=35 // pred_fallthru
          _
        // Predicated region
        $region65: #{tpu_custom_call.1} parent=35 // pred_check
          %p487 = pneg %p300
        $region66: #{tpu_custom_call.1} parent=35 // pred_check_branch
          %489 = sbr.rel (%p487) target = $region68
        $region67: #{tpu_custom_call.1} parent=35 // pred_region
          %p490 = scmp.lt.s32.totalorder %s31, 1
          %s491 = scalar_select %p490, %s31, 1
          %s492 = smul.addr %s491, 4
          %s493 = smul.addr %s492, 4
          %s494 = scalar_lea.vmem %s10, %s493
        $region68: #{tpu_custom_call.1} parent=35 // pred_fallthru
          _
        // Predicated region
        $region69: #{tpu_custom_call.1} parent=35 // pred_check
          %p495 = pneg %p326
        $region70: #{tpu_custom_call.1} parent=35 // pred_check_branch
          %497 = sbr.rel (%p495) target = $region72
        $region71: #{tpu_custom_call.1} parent=35 // pred_region
          %p498 = scmp.lt.s32.totalorder %s31, 1
          %s499 = scalar_select %p498, %s31, 1
          %s500 = smul.addr %s499, 2
          %s501 = smul.addr %s500, 8
          %s502 = scalar_lea.vmem %s11, %s501
        $region72: #{tpu_custom_call.1} parent=35 // pred_fallthru
          _
      $region36: #{tpu_custom_call.1} parent=5 // pred_fallthru
        _
      %p503 = scmp.le.s32.totalorder 1, %s23
      %p504 = scmp.lt.s32.totalorder %s23, 5
      %p505 = pnand %p503, %p504
      %p506 = pneg %p505
      // Predicated region
      $region73: #{tpu_custom_call.1} parent=5 // pred_check
        _
      $region74: #{tpu_custom_call.1} parent=5 // pred_check_branch
        %508 = sbr.rel (%p505) target = $region76
      $region75: #{tpu_custom_call.1} parent=5 // pred_region
        %s509 = ssub.s32 %s23, 1
        %p510 = scmp.lt.s32.totalorder %s32, 1
        %s511 = scalar_select %p510, %s32, 1
        %s512 = smul.addr %s511, 8
        %s513 = scalar_lea.vmem %s0, %s512
        %p514 = pneg %p61
        %p515 = pneg %p58
        %p516 = pneg %p82
        %p517 = pneg %p79
        %p518 = pneg %p103
        %p519 = pneg %p100
        %p520 = scmp.lt.s32.totalorder %s32, 1
        %s521 = scalar_select %p520, %s32, 1
        %s522 = scalar_lea.vmem %s3, %s521
        %p523 = pneg %p129
        %p524 = pneg %p126
        %p525 = pneg %p150
        %p526 = pneg %p147
        %p527 = scmp.lt.s32.totalorder %s33, 1
        %s528 = scalar_select %p527, %s33, 1
        %s529 = smul.addr %s528, 16
        %s530 = smul.addr %s529, 4
        %s531 = scalar_lea.vmem %s5, %s530
        %p532 = pneg %p176
        %p533 = pneg %p173
        %p534 = scmp.lt.s32.totalorder %s33, 1
        %s535 = scalar_select %p534, %s33, 1
        %s536 = smul.addr %s535, 16
        %s537 = smul.addr %s536, 4
        %s538 = scalar_lea.vmem %s6, %s537
        %p539 = pneg %p202
        %p540 = pneg %p199
        %p541 = scmp.lt.s32.totalorder %s33, 1
        %s542 = scalar_select %p541, %s33, 1
        %s543 = smul.addr %s542, 16
        %s544 = smul.addr %s543, 4
        %s545 = scalar_lea.vmem %s7, %s544
        %p546 = pneg %p228
        %p547 = pneg %p225
        %p548 = scmp.lt.s32.totalorder %s33, 1
        %s549 = scalar_select %p548, %s33, 1
        %s550 = smul.addr %s549, 4
        %s551 = smul.addr %s550, 4
        %s552 = scalar_lea.vmem %s8, %s551
        %p553 = pneg %p254
        %p554 = pneg %p251
        %p555 = scmp.lt.s32.totalorder %s33, 1
        %s556 = scalar_select %p555, %s33, 1
        %s557 = smul.addr %s556, 4
        %s558 = smul.addr %s557, 4
        %s559 = scalar_lea.vmem %s9, %s558
        %p560 = pneg %p280
        %p561 = pneg %p277
        %p562 = scmp.lt.s32.totalorder %s33, 1
        %s563 = scalar_select %p562, %s33, 1
        %s564 = smul.addr %s563, 4
        %s565 = smul.addr %s564, 4
        %s566 = scalar_lea.vmem %s10, %s565
        %p567 = pneg %p306
        %p568 = pneg %p303
        %p569 = scmp.lt.s32.totalorder %s33, 1
        %s570 = scalar_select %p569, %s33, 1
        %s571 = smul.addr %s570, 2
        %s572 = smul.addr %s571, 8
        %s573 = scalar_lea.vmem %s11, %s572
        %p574 = pneg %p332
        %p575 = pneg %p329
        %p576 = pneg %p353
        %p577 = pneg %p350
        %p578 = pneg %p374
        %p579 = pneg %p371
        %p580 = pneg %p400
        %p581 = pneg %p397
        %s582 = sand.u32 %s387, 1
        %s583 = scalar_lea.sflag [#allocation4], %s582
        %s584 = sand.u32 %s387, 1
        %s585 = smul.addr %s584, 8
        %s586 = scalar_lea.vmem [#allocation3], %s585
        %p587 = scmp.lt.s32.totalorder %s32, 1
        %s588 = scalar_select %p587, %s32, 1
        %s589 = smul.addr %s588, 8
        %s590 = scalar_lea.vmem %s0, %s589
        %p591 = scmp.lt.s32.totalorder %s32, 1
        %s592 = scalar_select %p591, %s32, 1
        %s593 = scalar_lea.vmem %s3, %s592
        %p594 = scmp.lt.s32.totalorder %s33, 1
        %s595 = scalar_select %p594, %s33, 1
        %s596 = smul.addr %s595, 16
        %s597 = smul.addr %s596, 4
        %s598 = scalar_lea.vmem %s5, %s597
        %p599 = scmp.lt.s32.totalorder %s33, 1
        %s600 = scalar_select %p599, %s33, 1
        %s601 = smul.addr %s600, 16
        %s602 = smul.addr %s601, 4
        %s603 = scalar_lea.vmem %s6, %s602
        %p604 = scmp.lt.s32.totalorder %s33, 1
        %s605 = scalar_select %p604, %s33, 1
        %s606 = smul.addr %s605, 16
        %s607 = smul.addr %s606, 4
        %s608 = scalar_lea.vmem %s7, %s607
        %p609 = scmp.lt.s32.totalorder %s33, 1
        %s610 = scalar_select %p609, %s33, 1
        %s611 = smul.addr %s610, 4
        %s612 = smul.addr %s611, 4
        %s613 = scalar_lea.vmem %s8, %s612
        %p614 = scmp.lt.s32.totalorder %s33, 1
        %s615 = scalar_select %p614, %s33, 1
        %s616 = smul.addr %s615, 4
        %s617 = smul.addr %s616, 4
        %s618 = scalar_lea.vmem %s9, %s617
        %p619 = scmp.lt.s32.totalorder %s33, 1
        %s620 = scalar_select %p619, %s33, 1
        %s621 = smul.addr %s620, 4
        %s622 = smul.addr %s621, 4
        %s623 = scalar_lea.vmem %s10, %s622
        %p624 = scmp.lt.s32.totalorder %s33, 1
        %s625 = scalar_select %p624, %s33, 1
        %s626 = smul.addr %s625, 2
        %s627 = smul.addr %s626, 8
        %s628 = scalar_lea.vmem %s11, %s627
        %p630 = scmp.eq.s32.totalorder %s33, 0
        // Predicated region
        $region77: #{tpu_custom_call.1} parent=75 // pred_check
          %p631 = pneg %p630
        $region78: #{tpu_custom_call.1} parent=75 // pred_check_branch
          %633 = sbr.rel (%p631) target = $region80
        $region79: #{tpu_custom_call.1} parent=75 // pred_region
          %v634 = vld [vmem:[%s590] sm:$0xff]
          %v635 = vpack.c.bf16 %v634, %v634
          %v636 = vld [vmem:[%s4] sm:$0xf]
          %v637 = vld [vmem:[%s4 + $0x4] sm:$0xf]
          %v638 = vld [vmem:[%s4 + $0x8] sm:$0xf]
          %v639 = vld [vmem:[%s4 + $0xc] sm:$0xf]
          %v640 = vld [vmem:[%s4 + $0x10] sm:$0xf]
          %v641 = vld [vmem:[%s4 + $0x14] sm:$0xf]
          %v642 = vld [vmem:[%s4 + $0x18] sm:$0xf]
          %v643 = vld [vmem:[%s4 + $0x1c] sm:$0xf]
          %v644 = vld [vmem:[%s4 + $0x20] sm:$0xf]
          %v645 = vld [vmem:[%s4 + $0x24] sm:$0xf]
          %v646 = vld [vmem:[%s4 + $0x28] sm:$0xf]
          %v647 = vld [vmem:[%s4 + $0x2c] sm:$0xf]
          %v648 = vld [vmem:[%s4 + $0x30] sm:$0xf]
          %v649 = vld [vmem:[%s4 + $0x34] sm:$0xf]
          %v650 = vld [vmem:[%s4 + $0x38] sm:$0xf]
          %v651 = vld [vmem:[%s4 + $0x3c] sm:$0xf]
          %v652 = vld [vmem:[%s1] sm:$0xff]
          %v669 = vunpack.c.l.b16 %v636
          %v670 = vunpack.c.l.b16 %v637
          %v671 = vunpack.c.l.b16 %v638
          %v672 = vunpack.c.l.b16 %v639
          %v673 = vunpack.c.l.b16 %v640
          %v674 = vunpack.c.l.b16 %v641
          %v675 = vunpack.c.l.b16 %v642
          %v676 = vunpack.c.l.b16 %v643
          %v677 = vunpack.c.l.b16 %v644
          %v678 = vunpack.c.l.b16 %v645
          %v679 = vunpack.c.l.b16 %v646
          %v680 = vunpack.c.l.b16 %v647
          %v681 = vunpack.c.l.b16 %v648
          %v682 = vunpack.c.l.b16 %v649
          %v683 = vunpack.c.l.b16 %v650
          %v684 = vunpack.c.l.b16 %v651
          %v685 = vpack.c.b16 %v670, %v669
          %v686 = vpack.c.b16 %v672, %v671
          %v687 = vpack.c.b16 %v674, %v673
          %v688 = vpack.c.b16 %v676, %v675
          %v689 = vpack.c.b16 %v678, %v677
          %v690 = vpack.c.b16 %v680, %v679
          %v691 = vpack.c.b16 %v682, %v681
          %v692 = vpack.c.b16 %v684, %v683
          %701 = vmatprep.subr.bf16.mxu0 0
          %702 = vmatpush1.bf16.msra.mxu0 %v692
          %703 = vmatprep.subr.bf16.mxu0 0
          %704 = vmatpush1.bf16.msra.mxu0 %v691
          %705 = vmatprep.subr.bf16.mxu0 0
          %706 = vmatpush1.bf16.msra.mxu0 %v690
          %707 = vmatprep.subr.bf16.mxu0 0
          %708 = vmatpush1.bf16.msra.mxu0 %v689
          %709 = vmatprep.subr.bf16.mxu0 0
          %710 = vmatpush1.bf16.msra.mxu0 %v688
          %711 = vmatprep.subr.bf16.mxu0 0
          %712 = vmatpush1.bf16.msra.mxu0 %v687
          %713 = vmatprep.subr.bf16.mxu0 0
          %714 = vmatpush1.bf16.msra.mxu0 %v686
          %715 = vmatprep.subr.bf16.mxu0 0
          %716 = vmatpush1.bf16.msra.mxu0 %v685
          %717 = vmatprep.subr.bf16.mxu0 0
          %718 = vmatpush2.bf16.msra.mxu0 0
          %719 = vmatprep.subr.bf16.mxu0 0
          %720 = vmatpush2.bf16.msra.mxu0 0
          %721 = vmatprep.subr.bf16.mxu0 0
          %722 = vmatpush2.bf16.msra.mxu0 0
          %723 = vmatprep.subr.bf16.mxu0 0
          %724 = vmatpush2.bf16.msra.mxu0 0
          %725 = vmatprep.subr.bf16.mxu0 0
          %726 = vmatpush2.bf16.msra.mxu0 0
          %727 = vmatprep.subr.bf16.mxu0 0
          %728 = vmatpush2.bf16.msra.mxu0 0
          %729 = vmatprep.subr.bf16.mxu0 0
          %730 = vmatpush2.bf16.msra.mxu0 0
          %731 = vmatprep.subr.bf16.mxu0 0
          %732 = vmatpush2.bf16.msra.mxu0 0
          %733 = vmatprep.mubr.bf16.mxu0 0
          %734 = vmatmul.mubr.bf16.gmra.mxu0 %v635
          %v735 = vpop.f32.mrf.mxu0
          %v736 = vadd.f32 %v652, %v735
          %v737 = vpop.f32.mrf.mxu0
          %v738 = vpop.f32.mrf.mxu0
          %v739 = vpop.f32.mrf.mxu0
          %740 = vdwg.mxu0
          %vm741 = vcmask 261120
          %742 = vst.msk [vmem:[#allocation2] sm:$0xff] %vm741, %v736
        $region80: #{tpu_custom_call.1} parent=75 // pred_fallthru
          _
        %v743 = vld [vmem:[#allocation2] sm:$0xff]
        %v744 = vpack.c.bf16 %v743, %v743
        %v745 = vld [vmem:[%s628] sm:$0xff]
        %v746 = vld [vmem:[%s628 + $0x8] sm:$0xff]
        %v747 = vld [vmem:[%s2] sm:$0xff]
        %v748 = vld [vmem:[%s593] sm:$0x1]
        %v750 = vlaneseq
        %v751 = vshrl.u32 %v750, 7
        %v752 = vsub.s32 0, %v751
        %v753 = vrot.slane %v748, %v752
        %v755 = vadd.f32 %v747, %v753
        %v756 = vld [vmem:[%s598] sm:$0xf]
        %v757 = vld [vmem:[%s598 + $0x4] sm:$0xf]
        %v758 = vld [vmem:[%s598 + $0x8] sm:$0xf]
        %v759 = vld [vmem:[%s598 + $0xc] sm:$0xf]
        %v760 = vlaneseq
        %v761 = vshrl.u32 %v760, 7
        %v762 = vsub.s32 0, %v761
        %v763 = vrot.slane %v745, %v762
        %v768 = vunpack.c.l.b16 %v756
        %v769 = vunpack.c.l.b16 %v757
        %v770 = vunpack.c.l.b16 %v758
        %v771 = vunpack.c.l.b16 %v759
        %v772 = vpack.c.b16 %v769, %v768
        %v773 = vpack.c.b16 %v771, %v770
        %vm776 = vcmask 261120
        %v778 = vsel %vm776, %v744, 0
        %780 = vmatprep.subr.bf16.mxu0 0
        %781 = vmatpush1.bf16.msra.mxu0 0
        %782 = vmatprep.subr.bf16.mxu0 0
        %783 = vmatpush1.bf16.msra.mxu0 0
        %784 = vmatprep.subr.bf16.mxu0 0
        %785 = vmatpush1.bf16.msra.mxu0 0
        %786 = vmatprep.subr.bf16.mxu0 0
        %787 = vmatpush1.bf16.msra.mxu0 0
        %788 = vmatprep.subr.bf16.mxu0 0
        %789 = vmatpush1.bf16.msra.mxu0 0
        %790 = vmatprep.subr.bf16.mxu0 0
        %791 = vmatpush1.bf16.msra.mxu0 0
        %792 = vmatprep.subr.bf16.mxu0 0
        %793 = vmatpush1.bf16.msra.mxu0 %v773
        %794 = vmatprep.subr.bf16.mxu0 0
        %795 = vmatpush1.bf16.msra.mxu0 %v772
        %796 = vmatprep.subr.bf16.mxu0 0
        %797 = vmatpush2.bf16.msra.mxu0 0
        %798 = vmatprep.subr.bf16.mxu0 0
        %799 = vmatpush2.bf16.msra.mxu0 0
        %800 = vmatprep.subr.bf16.mxu0 0
        %801 = vmatpush2.bf16.msra.mxu0 0
        %802 = vmatprep.subr.bf16.mxu0 0
        %803 = vmatpush2.bf16.msra.mxu0 0
        %804 = vmatprep.subr.bf16.mxu0 0
        %805 = vmatpush2.bf16.msra.mxu0 0
        %806 = vmatprep.subr.bf16.mxu0 0
        %807 = vmatpush2.bf16.msra.mxu0 0
        %808 = vmatprep.subr.bf16.mxu0 0
        %809 = vmatpush2.bf16.msra.mxu0 0
        %810 = vmatprep.subr.bf16.mxu0 0
        %811 = vmatpush2.bf16.msra.mxu0 0
        %812 = vmatprep.mubr.bf16.mxu0 0
        %813 = vmatmul.mubr.bf16.gmra.mxu0 %v778
        %v814 = vpop.f32.mrf.mxu0
        %v815 = vadd.f32 %v763, %v814
        %v816 = vpop.f32.mrf.mxu0
        %v817 = vpop.f32.mrf.mxu0
        %v818 = vpop.f32.mrf.mxu0
        %819 = vdwg.mxu0
        %v820 = vpack.c.bf16 %v815, %v815
        %v821 = vld [vmem:[%s603] sm:$0xf]
        %v822 = vld [vmem:[%s603 + $0x4] sm:$0xf]
        %v823 = vld [vmem:[%s603 + $0x8] sm:$0xf]
        %v824 = vld [vmem:[%s603 + $0xc] sm:$0xf]
        %v829 = vunpack.c.l.b16 %v821
        %v830 = vunpack.c.l.b16 %v822
        %v831 = vunpack.c.l.b16 %v823
        %v832 = vunpack.c.l.b16 %v824
        %v833 = vpack.c.b16 %v830, %v829
        %v834 = vpack.c.b16 %v832, %v831
        %837 = vmatprep.subr.bf16.mxu0 0
        %838 = vmatpush1.bf16.msra.mxu0 0
        %839 = vmatprep.subr.bf16.mxu0 0
        %840 = vmatpush1.bf16.msra.mxu0 0
        %841 = vmatprep.subr.bf16.mxu0 0
        %842 = vmatpush1.bf16.msra.mxu0 0
        %843 = vmatprep.subr.bf16.mxu0 0
        %844 = vmatpush1.bf16.msra.mxu0 0
        %845 = vmatprep.subr.bf16.mxu0 0
        %846 = vmatpush1.bf16.msra.mxu0 0
        %847 = vmatprep.subr.bf16.mxu0 0
        %848 = vmatpush1.bf16.msra.mxu0 0
        %849 = vmatprep.subr.bf16.mxu0 0
        %850 = vmatpush1.bf16.msra.mxu0 %v834
        %851 = vmatprep.subr.bf16.mxu0 0
        %852 = vmatpush1.bf16.msra.mxu0 %v833
        %853 = vmatprep.subr.bf16.mxu0 0
        %854 = vmatpush2.bf16.msra.mxu0 0
        %855 = vmatprep.subr.bf16.mxu0 0
        %856 = vmatpush2.bf16.msra.mxu0 0
        %857 = vmatprep.subr.bf16.mxu0 0
        %858 = vmatpush2.bf16.msra.mxu0 0
        %859 = vmatprep.subr.bf16.mxu0 0
        %860 = vmatpush2.bf16.msra.mxu0 0
        %861 = vmatprep.subr.bf16.mxu0 0
        %862 = vmatpush2.bf16.msra.mxu0 0
        %863 = vmatprep.subr.bf16.mxu0 0
        %864 = vmatpush2.bf16.msra.mxu0 0
        %865 = vmatprep.subr.bf16.mxu0 0
        %866 = vmatpush2.bf16.msra.mxu0 0
        %867 = vmatprep.subr.bf16.mxu0 0
        %868 = vmatpush2.bf16.msra.mxu0 0
        %869 = vmatprep.mubr.bf16.mxu0 0
        %870 = vmatmul.mubr.bf16.gmra.mxu0 %v778
        %v871 = vpop.f32.mrf.mxu0
        %v872 = vadd.f32 0.0, %v871
        %v873 = vpop.f32.mrf.mxu0
        %v874 = vpop.f32.mrf.mxu0
        %v875 = vpop.f32.mrf.mxu0
        %876 = vdwg.mxu0
        %v877 = vpack.c.bf16 %v872, %v872
        %v878 = vld [vmem:[%s608] sm:$0xf]
        %v879 = vld [vmem:[%s608 + $0x4] sm:$0xf]
        %v880 = vld [vmem:[%s608 + $0x8] sm:$0xf]
        %v881 = vld [vmem:[%s608 + $0xc] sm:$0xf]
        %v886 = vunpack.c.l.b16 %v878
        %v887 = vunpack.c.l.b16 %v879
        %v888 = vunpack.c.l.b16 %v880
        %v889 = vunpack.c.l.b16 %v881
        %v890 = vpack.c.b16 %v887, %v886
        %v891 = vpack.c.b16 %v889, %v888
        %894 = vmatprep.subr.bf16.mxu0 0
        %895 = vmatpush1.bf16.msra.mxu0 0
        %896 = vmatprep.subr.bf16.mxu0 0
        %897 = vmatpush1.bf16.msra.mxu0 0
        %898 = vmatprep.subr.bf16.mxu0 0
        %899 = vmatpush1.bf16.msra.mxu0 0
        %900 = vmatprep.subr.bf16.mxu0 0
        %901 = vmatpush1.bf16.msra.mxu0 0
        %902 = vmatprep.subr.bf16.mxu0 0
        %903 = vmatpush1.bf16.msra.mxu0 0
        %904 = vmatprep.subr.bf16.mxu0 0
        %905 = vmatpush1.bf16.msra.mxu0 0
        %906 = vmatprep.subr.bf16.mxu0 0
        %907 = vmatpush1.bf16.msra.mxu0 %v891
        %908 = vmatprep.subr.bf16.mxu0 0
        %909 = vmatpush1.bf16.msra.mxu0 %v890
        %910 = vmatprep.subr.bf16.mxu0 0
        %911 = vmatpush2.bf16.msra.mxu0 0
        %912 = vmatprep.subr.bf16.mxu0 0
        %913 = vmatpush2.bf16.msra.mxu0 0
        %914 = vmatprep.subr.bf16.mxu0 0
        %915 = vmatpush2.bf16.msra.mxu0 0
        %916 = vmatprep.subr.bf16.mxu0 0
        %917 = vmatpush2.bf16.msra.mxu0 0
        %918 = vmatprep.subr.bf16.mxu0 0
        %919 = vmatpush2.bf16.msra.mxu0 0
        %920 = vmatprep.subr.bf16.mxu0 0
        %921 = vmatpush2.bf16.msra.mxu0 0
        %922 = vmatprep.subr.bf16.mxu0 0
        %923 = vmatpush2.bf16.msra.mxu0 0
        %924 = vmatprep.subr.bf16.mxu0 0
        %925 = vmatpush2.bf16.msra.mxu0 0
        %926 = vmatprep.mubr.bf16.mxu0 0
        %927 = vmatmul.mubr.bf16.gmra.mxu0 %v778
        %v928 = vpop.f32.mrf.mxu0
        %v929 = vadd.f32 0.0, %v928
        %v930 = vpop.f32.mrf.mxu0
        %v931 = vpop.f32.mrf.mxu0
        %v932 = vpop.f32.mrf.mxu0
        %933 = vdwg.mxu0
        %v934 = vpack.c.bf16 %v929, %v929
        %vm935 = vcmask 64512
        %v937 = vsel %vm935, %v820, 0
        %v940 = vsel %vm935, %v877, 0
        %942 = vmatprep.subr.bf16.mxu0 0
        %943 = vmatpush1.bf16.xpose.msra.mxu0 0
        %944 = vmatprep.subr.bf16.mxu0 0
        %945 = vmatpush1.bf16.xpose.msra.mxu0 0
        %946 = vmatprep.subr.bf16.mxu0 0
        %947 = vmatpush1.bf16.xpose.msra.mxu0 0
        %948 = vmatprep.subr.bf16.mxu0 0
        %949 = vmatpush1.bf16.xpose.msra.mxu0 0
        %950 = vmatprep.subr.bf16.mxu0 0
        %951 = vmatpush1.bf16.xpose.msra.mxu0 0
        %952 = vmatprep.subr.bf16.mxu0 0
        %953 = vmatpush1.bf16.xpose.msra.mxu0 0
        %954 = vmatprep.subr.bf16.mxu0 0
        %955 = vmatpush1.bf16.xpose.msra.mxu0 0
        %956 = vmatprep.subr.bf16.mxu0 0
        %957 = vmatpush1.bf16.xpose.msra.mxu0 %v940
        %958 = vmatprep.subr.bf16.mxu0 0
        %959 = vmatpush2.bf16.xpose.msra.mxu0 0
        %960 = vmatprep.subr.bf16.mxu0 0
        %961 = vmatpush2.bf16.xpose.msra.mxu0 0
        %962 = vmatprep.subr.bf16.mxu0 0
        %963 = vmatpush2.bf16.xpose.msra.mxu0 0
        %964 = vmatprep.subr.bf16.mxu0 0
        %965 = vmatpush2.bf16.xpose.msra.mxu0 0
        %966 = vmatprep.subr.bf16.mxu0 0
        %967 = vmatpush2.bf16.xpose.msra.mxu0 0
        %968 = vmatprep.subr.bf16.mxu0 0
        %969 = vmatpush2.bf16.xpose.msra.mxu0 0
        %970 = vmatprep.subr.bf16.mxu0 0
        %971 = vmatpush2.bf16.xpose.msra.mxu0 0
        %972 = vmatprep.subr.bf16.mxu0 0
        %973 = vmatpush2.bf16.xpose.msra.mxu0 0
        %974 = vmatprep.mubr.bf16.mxu0 0
        %975 = vmatmul.mubr.bf16.gmra.mxu0 %v937
        %v976 = vpop.f32.mrf.mxu0
        %v977 = vadd.f32 %v755, %v976
        %v978 = vpop.f32.mrf.mxu0
        %v979 = vpop.f32.mrf.mxu0
        %v980 = vpop.f32.mrf.mxu0
        %981 = vdwg.mxu0
        %v982 = vsel %vm935, %v977, -inf
        %983 = vmax.xlane.f32.xlu0 %v982
        %v984 = vpop.xlane.xlu0 %983
        %v985 = vsub.f32 %v977, %v984
        %v986 = vmul.f32 %v985, 1.442695
        %v987 = vpow.pop %v986
        %v988 = vsel %vm935, %v987, 0.0
        %989 = vadd.xlane.f32.xlu0 %v988
        %v990 = vpop.xlane.xlu0 %989
        %v991 = vrcp.pop %v990
        %v992 = vmul.f32 %v987, %v991
        %v993 = vpack.c.bf16 %v992, %v992
        %v995 = vsel %vm935, %v993, 0
        %vm997 = vcmask 1043456
        %v999 = vsel %vm997, %v934, 0
        %1001 = vmatprep.subr.bf16.mxu0 0
        %1002 = vmatpush1.bf16.msra.mxu0 0
        %1003 = vmatprep.subr.bf16.mxu0 0
        %1004 = vmatpush1.bf16.msra.mxu0 0
        %1005 = vmatprep.subr.bf16.mxu0 0
        %1006 = vmatpush1.bf16.msra.mxu0 0
        %1007 = vmatprep.subr.bf16.mxu0 0
        %1008 = vmatpush1.bf16.msra.mxu0 0
        %1009 = vmatprep.subr.bf16.mxu0 0
        %1010 = vmatpush1.bf16.msra.mxu0 0
        %1011 = vmatprep.subr.bf16.mxu0 0
        %1012 = vmatpush1.bf16.msra.mxu0 0
        %1013 = vmatprep.subr.bf16.mxu0 0
        %1014 = vmatpush1.bf16.msra.mxu0 0
        %1015 = vmatprep.subr.bf16.mxu0 0
        %1016 = vmatpush1.bf16.msra.mxu0 %v999
        %1017 = vmatprep.subr.bf16.mxu0 0
        %1018 = vmatpush2.bf16.msra.mxu0 0
        %1019 = vmatprep.subr.bf16.mxu0 0
        %1020 = vmatpush2.bf16.msra.mxu0 0
        %1021 = vmatprep.subr.bf16.mxu0 0
        %1022 = vmatpush2.bf16.msra.mxu0 0
        %1023 = vmatprep.subr.bf16.mxu0 0
        %1024 = vmatpush2.bf16.msra.mxu0 0
        %1025 = vmatprep.subr.bf16.mxu0 0
        %1026 = vmatpush2.bf16.msra.mxu0 0
        %1027 = vmatprep.subr.bf16.mxu0 0
        %1028 = vmatpush2.bf16.msra.mxu0 0
        %1029 = vmatprep.subr.bf16.mxu0 0
        %1030 = vmatpush2.bf16.msra.mxu0 0
        %1031 = vmatprep.subr.bf16.mxu0 0
        %1032 = vmatpush2.bf16.msra.mxu0 0
        %1033 = vmatprep.mubr.bf16.mxu0 0
        %1034 = vmatmul.mubr.bf16.gmra.mxu0 %v995
        %v1035 = vpop.f32.mrf.mxu0
        %v1036 = vadd.f32 0.0, %v1035
        %v1037 = vpop.f32.mrf.mxu0
        %v1038 = vpop.f32.mrf.mxu0
        %v1039 = vpop.f32.mrf.mxu0
        %1040 = vdwg.mxu0
        %v1041 = vpack.c.bf16 %v1036, %v1036
        %v1042 = vld [vmem:[%s613] sm:$0xf]
        %s1043 = scalar_lea.vmem %s598, 16
        %v1044 = vld [vmem:[%s1043] sm:$0xf]
        %v1045 = vld [vmem:[%s1043 + $0x4] sm:$0xf]
        %v1046 = vld [vmem:[%s1043 + $0x8] sm:$0xf]
        %v1047 = vld [vmem:[%s1043 + $0xc] sm:$0xf]
        %v1048 = vlaneseq
        %v1049 = vshrl.u32 %v1048, 7
        %v1050 = vsub.s32 1, %v1049
        %v1051 = vrot.slane %v745, %v1050
        %v1056 = vunpack.c.l.b16 %v1044
        %v1057 = vunpack.c.l.b16 %v1045
        %v1058 = vunpack.c.l.b16 %v1046
        %v1059 = vunpack.c.l.b16 %v1047
        %v1060 = vpack.c.b16 %v1057, %v1056
        %v1061 = vpack.c.b16 %v1059, %v1058
        %1064 = vmatprep.subr.bf16.mxu0 0
        %1065 = vmatpush1.bf16.msra.mxu0 0
        %1066 = vmatprep.subr.bf16.mxu0 0
        %1067 = vmatpush1.bf16.msra.mxu0 0
        %1068 = vmatprep.subr.bf16.mxu0 0
        %1069 = vmatpush1.bf16.msra.mxu0 0
        %1070 = vmatprep.subr.bf16.mxu0 0
        %1071 = vmatpush1.bf16.msra.mxu0 0
        %1072 = vmatprep.subr.bf16.mxu0 0
        %1073 = vmatpush1.bf16.msra.mxu0 0
        %1074 = vmatprep.subr.bf16.mxu0 0
        %1075 = vmatpush1.bf16.msra.mxu0 0
        %1076 = vmatprep.subr.bf16.mxu0 0
        %1077 = vmatpush1.bf16.msra.mxu0 %v1061
        %1078 = vmatprep.subr.bf16.mxu0 0
        %1079 = vmatpush1.bf16.msra.mxu0 %v1060
        %1080 = vmatprep.subr.bf16.mxu0 0
        %1081 = vmatpush2.bf16.msra.mxu0 0
        %1082 = vmatprep.subr.bf16.mxu0 0
        %1083 = vmatpush2.bf16.msra.mxu0 0
        %1084 = vmatprep.subr.bf16.mxu0 0
        %1085 = vmatpush2.bf16.msra.mxu0 0
        %1086 = vmatprep.subr.bf16.mxu0 0
        %1087 = vmatpush2.bf16.msra.mxu0 0
        %1088 = vmatprep.subr.bf16.mxu0 0
        %1089 = vmatpush2.bf16.msra.mxu0 0
        %1090 = vmatprep.subr.bf16.mxu0 0
        %1091 = vmatpush2.bf16.msra.mxu0 0
        %1092 = vmatprep.subr.bf16.mxu0 0
        %1093 = vmatpush2.bf16.msra.mxu0 0
        %1094 = vmatprep.subr.bf16.mxu0 0
        %1095 = vmatpush2.bf16.msra.mxu0 0
        %1096 = vmatprep.mubr.bf16.mxu0 0
        %1097 = vmatmul.mubr.bf16.gmra.mxu0 %v778
        %v1098 = vpop.f32.mrf.mxu0
        %v1099 = vadd.f32 %v1051, %v1098
        %v1100 = vpop.f32.mrf.mxu0
        %v1101 = vpop.f32.mrf.mxu0
        %v1102 = vpop.f32.mrf.mxu0
        %1103 = vdwg.mxu0
        %v1104 = vpack.c.bf16 %v1099, %v1099
        %s1105 = scalar_lea.vmem %s603, 16
        %v1106 = vld [vmem:[%s1105] sm:$0xf]
        %v1107 = vld [vmem:[%s1105 + $0x4] sm:$0xf]
        %v1108 = vld [vmem:[%s1105 + $0x8] sm:$0xf]
        %v1109 = vld [vmem:[%s1105 + $0xc] sm:$0xf]
        %v1114 = vunpack.c.l.b16 %v1106
        %v1115 = vunpack.c.l.b16 %v1107
        %v1116 = vunpack.c.l.b16 %v1108
        %v1117 = vunpack.c.l.b16 %v1109
        %v1118 = vpack.c.b16 %v1115, %v1114
        %v1119 = vpack.c.b16 %v1117, %v1116
        %1122 = vmatprep.subr.bf16.mxu0 0
        %1123 = vmatpush1.bf16.msra.mxu0 0
        %1124 = vmatprep.subr.bf16.mxu0 0
        %1125 = vmatpush1.bf16.msra.mxu0 0
        %1126 = vmatprep.subr.bf16.mxu0 0
        %1127 = vmatpush1.bf16.msra.mxu0 0
        %1128 = vmatprep.subr.bf16.mxu0 0
        %1129 = vmatpush1.bf16.msra.mxu0 0
        %1130 = vmatprep.subr.bf16.mxu0 0
        %1131 = vmatpush1.bf16.msra.mxu0 0
        %1132 = vmatprep.subr.bf16.mxu0 0
        %1133 = vmatpush1.bf16.msra.mxu0 0
        %1134 = vmatprep.subr.bf16.mxu0 0
        %1135 = vmatpush1.bf16.msra.mxu0 %v1119
        %1136 = vmatprep.subr.bf16.mxu0 0
        %1137 = vmatpush1.bf16.msra.mxu0 %v1118
        %1138 = vmatprep.subr.bf16.mxu0 0
        %1139 = vmatpush2.bf16.msra.mxu0 0
        %1140 = vmatprep.subr.bf16.mxu0 0
        %1141 = vmatpush2.bf16.msra.mxu0 0
        %1142 = vmatprep.subr.bf16.mxu0 0
        %1143 = vmatpush2.bf16.msra.mxu0 0
        %1144 = vmatprep.subr.bf16.mxu0 0
        %1145 = vmatpush2.bf16.msra.mxu0 0
        %1146 = vmatprep.subr.bf16.mxu0 0
        %1147 = vmatpush2.bf16.msra.mxu0 0
        %1148 = vmatprep.subr.bf16.mxu0 0
        %1149 = vmatpush2.bf16.msra.mxu0 0
        %1150 = vmatprep.subr.bf16.mxu0 0
        %1151 = vmatpush2.bf16.msra.mxu0 0
        %1152 = vmatprep.subr.bf16.mxu0 0
        %1153 = vmatpush2.bf16.msra.mxu0 0
        %1154 = vmatprep.mubr.bf16.mxu0 0
        %1155 = vmatmul.mubr.bf16.gmra.mxu0 %v778
        %v1156 = vpop.f32.mrf.mxu0
        %v1157 = vadd.f32 0.0, %v1156
        %v1158 = vpop.f32.mrf.mxu0
        %v1159 = vpop.f32.mrf.mxu0
        %v1160 = vpop.f32.mrf.mxu0
        %1161 = vdwg.mxu0
        %v1162 = vpack.c.bf16 %v1157, %v1157
        %s1163 = scalar_lea.vmem %s608, 16
        %v1164 = vld [vmem:[%s1163] sm:$0xf]
        %v1165 = vld [vmem:[%s1163 + $0x4] sm:$0xf]
        %v1166 = vld [vmem:[%s1163 + $0x8] sm:$0xf]
        %v1167 = vld [vmem:[%s1163 + $0xc] sm:$0xf]
        %v1172 = vunpack.c.l.b16 %v1164
        %v1173 = vunpack.c.l.b16 %v1165
        %v1174 = vunpack.c.l.b16 %v1166
        %v1175 = vunpack.c.l.b16 %v1167
        %v1176 = vpack.c.b16 %v1173, %v1172
        %v1177 = vpack.c.b16 %v1175, %v1174
        %1180 = vmatprep.subr.bf16.mxu0 0
        %1181 = vmatpush1.bf16.msra.mxu0 0
        %1182 = vmatprep.subr.bf16.mxu0 0
        %1183 = vmatpush1.bf16.msra.mxu0 0
        %1184 = vmatprep.subr.bf16.mxu0 0
        %1185 = vmatpush1.bf16.msra.mxu0 0
        %1186 = vmatprep.subr.bf16.mxu0 0
        %1187 = vmatpush1.bf16.msra.mxu0 0
        %1188 = vmatprep.subr.bf16.mxu0 0
        %1189 = vmatpush1.bf16.msra.mxu0 0
        %1190 = vmatprep.subr.bf16.mxu0 0
        %1191 = vmatpush1.bf16.msra.mxu0 0
        %1192 = vmatprep.subr.bf16.mxu0 0
        %1193 = vmatpush1.bf16.msra.mxu0 %v1177
        %1194 = vmatprep.subr.bf16.mxu0 0
        %1195 = vmatpush1.bf16.msra.mxu0 %v1176
        %1196 = vmatprep.subr.bf16.mxu0 0
        %1197 = vmatpush2.bf16.msra.mxu0 0
        %1198 = vmatprep.subr.bf16.mxu0 0
        %1199 = vmatpush2.bf16.msra.mxu0 0
        %1200 = vmatprep.subr.bf16.mxu0 0
        %1201 = vmatpush2.bf16.msra.mxu0 0
        %1202 = vmatprep.subr.bf16.mxu0 0
        %1203 = vmatpush2.bf16.msra.mxu0 0
        %1204 = vmatprep.subr.bf16.mxu0 0
        %1205 = vmatpush2.bf16.msra.mxu0 0
        %1206 = vmatprep.subr.bf16.mxu0 0
        %1207 = vmatpush2.bf16.msra.mxu0 0
        %1208 = vmatprep.subr.bf16.mxu0 0
        %1209 = vmatpush2.bf16.msra.mxu0 0
        %1210 = vmatprep.subr.bf16.mxu0 0
        %1211 = vmatpush2.bf16.msra.mxu0 0
        %1212 = vmatprep.mubr.bf16.mxu0 0
        %1213 = vmatmul.mubr.bf16.gmra.mxu0 %v778
        %v1214 = vpop.f32.mrf.mxu0
        %v1215 = vadd.f32 0.0, %v1214
        %v1216 = vpop.f32.mrf.mxu0
        %v1217 = vpop.f32.mrf.mxu0
        %v1218 = vpop.f32.mrf.mxu0
        %1219 = vdwg.mxu0
        %v1220 = vpack.c.bf16 %v1215, %v1215
        %v1222 = vsel %vm935, %v1104, 0
        %v1225 = vsel %vm935, %v1162, 0
        %1227 = vmatprep.subr.bf16.mxu0 0
        %1228 = vmatpush1.bf16.xpose.msra.mxu0 0
        %1229 = vmatprep.subr.bf16.mxu0 0
        %1230 = vmatpush1.bf16.xpose.msra.mxu0 0
        %1231 = vmatprep.subr.bf16.mxu0 0
        %1232 = vmatpush1.bf16.xpose.msra.mxu0 0
        %1233 = vmatprep.subr.bf16.mxu0 0
        %1234 = vmatpush1.bf16.xpose.msra.mxu0 0
        %1235 = vmatprep.subr.bf16.mxu0 0
        %1236 = vmatpush1.bf16.xpose.msra.mxu0 0
        %1237 = vmatprep.subr.bf16.mxu0 0
        %1238 = vmatpush1.bf16.xpose.msra.mxu0 0
        %1239 = vmatprep.subr.bf16.mxu0 0
        %1240 = vmatpush1.bf16.xpose.msra.mxu0 0
        %1241 = vmatprep.subr.bf16.mxu0 0
        %1242 = vmatpush1.bf16.xpose.msra.mxu0 %v1225
        %1243 = vmatprep.subr.bf16.mxu0 0
        %1244 = vmatpush2.bf16.xpose.msra.mxu0 0
        %1245 = vmatprep.subr.bf16.mxu0 0
        %1246 = vmatpush2.bf16.xpose.msra.mxu0 0
        %1247 = vmatprep.subr.bf16.mxu0 0
        %1248 = vmatpush2.bf16.xpose.msra.mxu0 0
        %1249 = vmatprep.subr.bf16.mxu0 0
        %1250 = vmatpush2.bf16.xpose.msra.mxu0 0
        %1251 = vmatprep.subr.bf16.mxu0 0
        %1252 = vmatpush2.bf16.xpose.msra.mxu0 0
        %1253 = vmatprep.subr.bf16.mxu0 0
        %1254 = vmatpush2.bf16.xpose.msra.mxu0 0
        %1255 = vmatprep.subr.bf16.mxu0 0
        %1256 = vmatpush2.bf16.xpose.msra.mxu0 0
        %1257 = vmatprep.subr.bf16.mxu0 0
        %1258 = vmatpush2.bf16.xpose.msra.mxu0 0
        %1259 = vmatprep.mubr.bf16.mxu0 0
        %1260 = vmatmul.mubr.bf16.gmra.mxu0 %v1222
        %v1261 = vpop.f32.mrf.mxu0
        %v1262 = vadd.f32 %v755, %v1261
        %v1263 = vpop.f32.mrf.mxu0
        %v1264 = vpop.f32.mrf.mxu0
        %v1265 = vpop.f32.mrf.mxu0
        %1266 = vdwg.mxu0
        %v1267 = vsel %vm935, %v1262, -inf
        %1268 = vmax.xlane.f32.xlu0 %v1267
        %v1269 = vpop.xlane.xlu0 %1268
        %v1270 = vsub.f32 %v1262, %v1269
        %v1271 = vmul.f32 %v1270, 1.442695
        %v1272 = vpow.pop %v1271
        %v1273 = vsel %vm935, %v1272, 0.0
        %1274 = vadd.xlane.f32.xlu0 %v1273
        %v1275 = vpop.xlane.xlu0 %1274
        %v1276 = vrcp.pop %v1275
        %v1277 = vmul.f32 %v1272, %v1276
        %v1278 = vpack.c.bf16 %v1277, %v1277
        %v1280 = vsel %vm935, %v1278, 0
        %v1283 = vsel %vm997, %v1220, 0
        %1285 = vmatprep.subr.bf16.mxu0 0
        %1286 = vmatpush1.bf16.msra.mxu0 0
        %1287 = vmatprep.subr.bf16.mxu0 0
        %1288 = vmatpush1.bf16.msra.mxu0 0
        %1289 = vmatprep.subr.bf16.mxu0 0
        %1290 = vmatpush1.bf16.msra.mxu0 0
        %1291 = vmatprep.subr.bf16.mxu0 0
        %1292 = vmatpush1.bf16.msra.mxu0 0
        %1293 = vmatprep.subr.bf16.mxu0 0
        %1294 = vmatpush1.bf16.msra.mxu0 0
        %1295 = vmatprep.subr.bf16.mxu0 0
        %1296 = vmatpush1.bf16.msra.mxu0 0
        %1297 = vmatprep.subr.bf16.mxu0 0
        %1298 = vmatpush1.bf16.msra.mxu0 0
        %1299 = vmatprep.subr.bf16.mxu0 0
        %1300 = vmatpush1.bf16.msra.mxu0 %v1283
        %1301 = vmatprep.subr.bf16.mxu0 0
        %1302 = vmatpush2.bf16.msra.mxu0 0
        %1303 = vmatprep.subr.bf16.mxu0 0
        %1304 = vmatpush2.bf16.msra.mxu0 0
        %1305 = vmatprep.subr.bf16.mxu0 0
        %1306 = vmatpush2.bf16.msra.mxu0 0
        %1307 = vmatprep.subr.bf16.mxu0 0
        %1308 = vmatpush2.bf16.msra.mxu0 0
        %1309 = vmatprep.subr.bf16.mxu0 0
        %1310 = vmatpush2.bf16.msra.mxu0 0
        %1311 = vmatprep.subr.bf16.mxu0 0
        %1312 = vmatpush2.bf16.msra.mxu0 0
        %1313 = vmatprep.subr.bf16.mxu0 0
        %1314 = vmatpush2.bf16.msra.mxu0 0
        %1315 = vmatprep.subr.bf16.mxu0 0
        %1316 = vmatpush2.bf16.msra.mxu0 0
        %1317 = vmatprep.mubr.bf16.mxu0 0
        %1318 = vmatmul.mubr.bf16.gmra.mxu0 %v1280
        %v1319 = vpop.f32.mrf.mxu0
        %v1320 = vadd.f32 0.0, %v1319
        %v1321 = vpop.f32.mrf.mxu0
        %v1322 = vpop.f32.mrf.mxu0
        %v1323 = vpop.f32.mrf.mxu0
        %1324 = vdwg.mxu0
        %v1325 = vpack.c.bf16 %v1320, %v1320
        %s1326 = scalar_lea.vmem %s613, 4
        %v1327 = vld [vmem:[%s1326] sm:$0xf]
        %v1329 = vsel %vm935, %v1325, 0
        %v1332 = vsel %vm997, %v1327, 0
        %1334 = vmatprep.subr.bf16.mxu0 0
        %1335 = vmatpush1.bf16.msra.mxu0 0
        %1336 = vmatprep.subr.bf16.mxu0 0
        %1337 = vmatpush1.bf16.msra.mxu0 0
        %1338 = vmatprep.subr.bf16.mxu0 0
        %1339 = vmatpush1.bf16.msra.mxu0 0
        %1340 = vmatprep.subr.bf16.mxu0 0
        %1341 = vmatpush1.bf16.msra.mxu0 0
        %1342 = vmatprep.subr.bf16.mxu0 0
        %1343 = vmatpush1.bf16.msra.mxu0 0
        %1344 = vmatprep.subr.bf16.mxu0 0
        %1345 = vmatpush1.bf16.msra.mxu0 0
        %1346 = vmatprep.subr.bf16.mxu0 0
        %1347 = vmatpush1.bf16.msra.mxu0 0
        %1348 = vmatprep.subr.bf16.mxu0 0
        %1349 = vmatpush1.bf16.msra.mxu0 %v1332
        %1350 = vmatprep.subr.bf16.mxu0 0
        %1351 = vmatpush2.bf16.msra.mxu0 0
        %1352 = vmatprep.subr.bf16.mxu0 0
        %1353 = vmatpush2.bf16.msra.mxu0 0
        %1354 = vmatprep.subr.bf16.mxu0 0
        %1355 = vmatpush2.bf16.msra.mxu0 0
        %1356 = vmatprep.subr.bf16.mxu0 0
        %1357 = vmatpush2.bf16.msra.mxu0 0
        %1358 = vmatprep.subr.bf16.mxu0 0
        %1359 = vmatpush2.bf16.msra.mxu0 0
        %1360 = vmatprep.subr.bf16.mxu0 0
        %1361 = vmatpush2.bf16.msra.mxu0 0
        %1362 = vmatprep.subr.bf16.mxu0 0
        %1363 = vmatpush2.bf16.msra.mxu0 0
        %1364 = vmatprep.subr.bf16.mxu0 0
        %1365 = vmatpush2.bf16.msra.mxu0 0
        %1366 = vmatprep.mubr.bf16.mxu0 0
        %1367 = vmatmul.mubr.bf16.gmra.mxu0 %v1329
        %v1368 = vpop.f32.mrf.mxu0
        %v1369 = vadd.f32 0.0, %v1368
        %v1370 = vpop.f32.mrf.mxu0
        %v1371 = vpop.f32.mrf.mxu0
        %v1372 = vpop.f32.mrf.mxu0
        %1373 = vdwg.mxu0
        %v1375 = vsel %vm935, %v1041, 0
        %v1378 = vsel %vm997, %v1042, 0
        %1380 = vmatprep.subr.bf16.mxu0 0
        %1381 = vmatpush1.bf16.msra.mxu0 0
        %1382 = vmatprep.subr.bf16.mxu0 0
        %1383 = vmatpush1.bf16.msra.mxu0 0
        %1384 = vmatprep.subr.bf16.mxu0 0
        %1385 = vmatpush1.bf16.msra.mxu0 0
        %1386 = vmatprep.subr.bf16.mxu0 0
        %1387 = vmatpush1.bf16.msra.mxu0 0
        %1388 = vmatprep.subr.bf16.mxu0 0
        %1389 = vmatpush1.bf16.msra.mxu0 0
        %1390 = vmatprep.subr.bf16.mxu0 0
        %1391 = vmatpush1.bf16.msra.mxu0 0
        %1392 = vmatprep.subr.bf16.mxu0 0
        %1393 = vmatpush1.bf16.msra.mxu0 0
        %1394 = vmatprep.subr.bf16.mxu0 0
        %1395 = vmatpush1.bf16.msra.mxu0 %v1378
        %1396 = vmatprep.subr.bf16.mxu0 0
        %1397 = vmatpush2.bf16.msra.mxu0 0
        %1398 = vmatprep.subr.bf16.mxu0 0
        %1399 = vmatpush2.bf16.msra.mxu0 0
        %1400 = vmatprep.subr.bf16.mxu0 0
        %1401 = vmatpush2.bf16.msra.mxu0 0
        %1402 = vmatprep.subr.bf16.mxu0 0
        %1403 = vmatpush2.bf16.msra.mxu0 0
        %1404 = vmatprep.subr.bf16.mxu0 0
        %1405 = vmatpush2.bf16.msra.mxu0 0
        %1406 = vmatprep.subr.bf16.mxu0 0
        %1407 = vmatpush2.bf16.msra.mxu0 0
        %1408 = vmatprep.subr.bf16.mxu0 0
        %1409 = vmatpush2.bf16.msra.mxu0 0
        %1410 = vmatprep.subr.bf16.mxu0 0
        %1411 = vmatpush2.bf16.msra.mxu0 0
        %1412 = vmatprep.mubr.bf16.mxu0 0
        %1413 = vmatmul.mubr.bf16.gmra.mxu0 %v1375
        %v1414 = vpop.f32.mrf.mxu0
        %v1415 = vadd.f32 %v1369, %v1414
        %v1416 = vpop.f32.mrf.mxu0
        %v1417 = vpop.f32.mrf.mxu0
        %v1418 = vpop.f32.mrf.mxu0
        %1419 = vdwg.mxu0
        %s1420 = scalar_lea.vmem %s598, 32
        %v1421 = vld [vmem:[%s1420] sm:$0xf]
        %v1422 = vld [vmem:[%s1420 + $0x4] sm:$0xf]
        %v1423 = vld [vmem:[%s1420 + $0x8] sm:$0xf]
        %v1424 = vld [vmem:[%s1420 + $0xc] sm:$0xf]
        %v1425 = vlaneseq
        %v1426 = vshrl.u32 %v1425, 7
        %v1427 = vsub.s32 2, %v1426
        %v1428 = vrot.slane %v745, %v1427
        %v1433 = vunpack.c.l.b16 %v1421
        %v1434 = vunpack.c.l.b16 %v1422
        %v1435 = vunpack.c.l.b16 %v1423
        %v1436 = vunpack.c.l.b16 %v1424
        %v1437 = vpack.c.b16 %v1434, %v1433
        %v1438 = vpack.c.b16 %v1436, %v1435
        %1441 = vmatprep.subr.bf16.mxu0 0
        %1442 = vmatpush1.bf16.msra.mxu0 0
        %1443 = vmatprep.subr.bf16.mxu0 0
        %1444 = vmatpush1.bf16.msra.mxu0 0
        %1445 = vmatprep.subr.bf16.mxu0 0
        %1446 = vmatpush1.bf16.msra.mxu0 0
        %1447 = vmatprep.subr.bf16.mxu0 0
        %1448 = vmatpush1.bf16.msra.mxu0 0
        %1449 = vmatprep.subr.bf16.mxu0 0
        %1450 = vmatpush1.bf16.msra.mxu0 0
        %1451 = vmatprep.subr.bf16.mxu0 0
        %1452 = vmatpush1.bf16.msra.mxu0 0
        %1453 = vmatprep.subr.bf16.mxu0 0
        %1454 = vmatpush1.bf16.msra.mxu0 %v1438
        %1455 = vmatprep.subr.bf16.mxu0 0
        %1456 = vmatpush1.bf16.msra.mxu0 %v1437
        %1457 = vmatprep.subr.bf16.mxu0 0
        %1458 = vmatpush2.bf16.msra.mxu0 0
        %1459 = vmatprep.subr.bf16.mxu0 0
        %1460 = vmatpush2.bf16.msra.mxu0 0
        %1461 = vmatprep.subr.bf16.mxu0 0
        %1462 = vmatpush2.bf16.msra.mxu0 0
        %1463 = vmatprep.subr.bf16.mxu0 0
        %1464 = vmatpush2.bf16.msra.mxu0 0
        %1465 = vmatprep.subr.bf16.mxu0 0
        %1466 = vmatpush2.bf16.msra.mxu0 0
        %1467 = vmatprep.subr.bf16.mxu0 0
        %1468 = vmatpush2.bf16.msra.mxu0 0
        %1469 = vmatprep.subr.bf16.mxu0 0
        %1470 = vmatpush2.bf16.msra.mxu0 0
        %1471 = vmatprep.subr.bf16.mxu0 0
        %1472 = vmatpush2.bf16.msra.mxu0 0
        %1473 = vmatprep.mubr.bf16.mxu0 0
        %1474 = vmatmul.mubr.bf16.gmra.mxu0 %v778
        %v1475 = vpop.f32.mrf.mxu0
        %v1476 = vadd.f32 %v1428, %v1475
        %v1477 = vpop.f32.mrf.mxu0
        %v1478 = vpop.f32.mrf.mxu0
        %v1479 = vpop.f32.mrf.mxu0
        %1480 = vdwg.mxu0
        %v1481 = vpack.c.bf16 %v1476, %v1476
        %s1482 = scalar_lea.vmem %s603, 32
        %v1483 = vld [vmem:[%s1482] sm:$0xf]
        %v1484 = vld [vmem:[%s1482 + $0x4] sm:$0xf]
        %v1485 = vld [vmem:[%s1482 + $0x8] sm:$0xf]
        %v1486 = vld [vmem:[%s1482 + $0xc] sm:$0xf]
        %v1491 = vunpack.c.l.b16 %v1483
        %v1492 = vunpack.c.l.b16 %v1484
        %v1493 = vunpack.c.l.b16 %v1485
        %v1494 = vunpack.c.l.b16 %v1486
        %v1495 = vpack.c.b16 %v1492, %v1491
        %v1496 = vpack.c.b16 %v1494, %v1493
        %1499 = vmatprep.subr.bf16.mxu0 0
        %1500 = vmatpush1.bf16.msra.mxu0 0
        %1501 = vmatprep.subr.bf16.mxu0 0
        %1502 = vmatpush1.bf16.msra.mxu0 0
        %1503 = vmatprep.subr.bf16.mxu0 0
        %1504 = vmatpush1.bf16.msra.mxu0 0
        %1505 = vmatprep.subr.bf16.mxu0 0
        %1506 = vmatpush1.bf16.msra.mxu0 0
        %1507 = vmatprep.subr.bf16.mxu0 0
        %1508 = vmatpush1.bf16.msra.mxu0 0
        %1509 = vmatprep.subr.bf16.mxu0 0
        %1510 = vmatpush1.bf16.msra.mxu0 0
        %1511 = vmatprep.subr.bf16.mxu0 0
        %1512 = vmatpush1.bf16.msra.mxu0 %v1496
        %1513 = vmatprep.subr.bf16.mxu0 0
        %1514 = vmatpush1.bf16.msra.mxu0 %v1495
        %1515 = vmatprep.subr.bf16.mxu0 0
        %1516 = vmatpush2.bf16.msra.mxu0 0
        %1517 = vmatprep.subr.bf16.mxu0 0
        %1518 = vmatpush2.bf16.msra.mxu0 0
        %1519 = vmatprep.subr.bf16.mxu0 0
        %1520 = vmatpush2.bf16.msra.mxu0 0
        %1521 = vmatprep.subr.bf16.mxu0 0
        %1522 = vmatpush2.bf16.msra.mxu0 0
        %1523 = vmatprep.subr.bf16.mxu0 0
        %1524 = vmatpush2.bf16.msra.mxu0 0
        %1525 = vmatprep.subr.bf16.mxu0 0
        %1526 = vmatpush2.bf16.msra.mxu0 0
        %1527 = vmatprep.subr.bf16.mxu0 0
        %1528 = vmatpush2.bf16.msra.mxu0 0
        %1529 = vmatprep.subr.bf16.mxu0 0
        %1530 = vmatpush2.bf16.msra.mxu0 0
        %1531 = vmatprep.mubr.bf16.mxu0 0
        %1532 = vmatmul.mubr.bf16.gmra.mxu0 %v778
        %v1533 = vpop.f32.mrf.mxu0
        %v1534 = vadd.f32 0.0, %v1533
        %v1535 = vpop.f32.mrf.mxu0
        %v1536 = vpop.f32.mrf.mxu0
        %v1537 = vpop.f32.mrf.mxu0
        %1538 = vdwg.mxu0
        %v1539 = vpack.c.bf16 %v1534, %v1534
        %s1540 = scalar_lea.vmem %s608, 32
        %v1541 = vld [vmem:[%s1540] sm:$0xf]
        %v1542 = vld [vmem:[%s1540 + $0x4] sm:$0xf]
        %v1543 = vld [vmem:[%s1540 + $0x8] sm:$0xf]
        %v1544 = vld [vmem:[%s1540 + $0xc] sm:$0xf]
        %v1549 = vunpack.c.l.b16 %v1541
        %v1550 = vunpack.c.l.b16 %v1542
        %v1551 = vunpack.c.l.b16 %v1543
        %v1552 = vunpack.c.l.b16 %v1544
        %v1553 = vpack.c.b16 %v1550, %v1549
        %v1554 = vpack.c.b16 %v1552, %v1551
        %1557 = vmatprep.subr.bf16.mxu0 0
        %1558 = vmatpush1.bf16.msra.mxu0 0
        %1559 = vmatprep.subr.bf16.mxu0 0
        %1560 = vmatpush1.bf16.msra.mxu0 0
        %1561 = vmatprep.subr.bf16.mxu0 0
        %1562 = vmatpush1.bf16.msra.mxu0 0
        %1563 = vmatprep.subr.bf16.mxu0 0
        %1564 = vmatpush1.bf16.msra.mxu0 0
        %1565 = vmatprep.subr.bf16.mxu0 0
        %1566 = vmatpush1.bf16.msra.mxu0 0
        %1567 = vmatprep.subr.bf16.mxu0 0
        %1568 = vmatpush1.bf16.msra.mxu0 0
        %1569 = vmatprep.subr.bf16.mxu0 0
        %1570 = vmatpush1.bf16.msra.mxu0 %v1554
        %1571 = vmatprep.subr.bf16.mxu0 0
        %1572 = vmatpush1.bf16.msra.mxu0 %v1553
        %1573 = vmatprep.subr.bf16.mxu0 0
        %1574 = vmatpush2.bf16.msra.mxu0 0
        %1575 = vmatprep.subr.bf16.mxu0 0
        %1576 = vmatpush2.bf16.msra.mxu0 0
        %1577 = vmatprep.subr.bf16.mxu0 0
        %1578 = vmatpush2.bf16.msra.mxu0 0
        %1579 = vmatprep.subr.bf16.mxu0 0
        %1580 = vmatpush2.bf16.msra.mxu0 0
        %1581 = vmatprep.subr.bf16.mxu0 0
        %1582 = vmatpush2.bf16.msra.mxu0 0
        %1583 = vmatprep.subr.bf16.mxu0 0
        %1584 = vmatpush2.bf16.msra.mxu0 0
        %1585 = vmatprep.subr.bf16.mxu0 0
        %1586 = vmatpush2.bf16.msra.mxu0 0
        %1587 = vmatprep.subr.bf16.mxu0 0
        %1588 = vmatpush2.bf16.msra.mxu0 0
        %1589 = vmatprep.mubr.bf16.mxu0 0
        %1590 = vmatmul.mubr.bf16.gmra.mxu0 %v778
        %v1591 = vpop.f32.mrf.mxu0
        %v1592 = vadd.f32 0.0, %v1591
        %v1593 = vpop.f32.mrf.mxu0
        %v1594 = vpop.f32.mrf.mxu0
        %v1595 = vpop.f32.mrf.mxu0
        %1596 = vdwg.mxu0
        %v1597 = vpack.c.bf16 %v1592, %v1592
        %v1599 = vsel %vm935, %v1481, 0
        %v1602 = vsel %vm935, %v1539, 0
        %1604 = vmatprep.subr.bf16.mxu0 0
        %1605 = vmatpush1.bf16.xpose.msra.mxu0 0
        %1606 = vmatprep.subr.bf16.mxu0 0
        %1607 = vmatpush1.bf16.xpose.msra.mxu0 0
        %1608 = vmatprep.subr.bf16.mxu0 0
        %1609 = vmatpush1.bf16.xpose.msra.mxu0 0
        %1610 = vmatprep.subr.bf16.mxu0 0
        %1611 = vmatpush1.bf16.xpose.msra.mxu0 0
        %1612 = vmatprep.subr.bf16.mxu0 0
        %1613 = vmatpush1.bf16.xpose.msra.mxu0 0
        %1614 = vmatprep.subr.bf16.mxu0 0
        %1615 = vmatpush1.bf16.xpose.msra.mxu0 0
        %1616 = vmatprep.subr.bf16.mxu0 0
        %1617 = vmatpush1.bf16.xpose.msra.mxu0 0
        %1618 = vmatprep.subr.bf16.mxu0 0
        %1619 = vmatpush1.bf16.xpose.msra.mxu0 %v1602
        %1620 = vmatprep.subr.bf16.mxu0 0
        %1621 = vmatpush2.bf16.xpose.msra.mxu0 0
        %1622 = vmatprep.subr.bf16.mxu0 0
        %1623 = vmatpush2.bf16.xpose.msra.mxu0 0
        %1624 = vmatprep.subr.bf16.mxu0 0
        %1625 = vmatpush2.bf16.xpose.msra.mxu0 0
        %1626 = vmatprep.subr.bf16.mxu0 0
        %1627 = vmatpush2.bf16.xpose.msra.mxu0 0
        %1628 = vmatprep.subr.bf16.mxu0 0
        %1629 = vmatpush2.bf16.xpose.msra.mxu0 0
        %1630 = vmatprep.subr.bf16.mxu0 0
        %1631 = vmatpush2.bf16.xpose.msra.mxu0 0
        %1632 = vmatprep.subr.bf16.mxu0 0
        %1633 = vmatpush2.bf16.xpose.msra.mxu0 0
        %1634 = vmatprep.subr.bf16.mxu0 0
        %1635 = vmatpush2.bf16.xpose.msra.mxu0 0
        %1636 = vmatprep.mubr.bf16.mxu0 0
        %1637 = vmatmul.mubr.bf16.gmra.mxu0 %v1599
        %v1638 = vpop.f32.mrf.mxu0
        %v1639 = vadd.f32 %v755, %v1638
        %v1640 = vpop.f32.mrf.mxu0
        %v1641 = vpop.f32.mrf.mxu0
        %v1642 = vpop.f32.mrf.mxu0
        %1643 = vdwg.mxu0
        %v1644 = vsel %vm935, %v1639, -inf
        %1645 = vmax.xlane.f32.xlu0 %v1644
        %v1646 = vpop.xlane.xlu0 %1645
        %v1647 = vsub.f32 %v1639, %v1646
        %v1648 = vmul.f32 %v1647, 1.442695
        %v1649 = vpow.pop %v1648
        %v1650 = vsel %vm935, %v1649, 0.0
        %1651 = vadd.xlane.f32.xlu0 %v1650
        %v1652 = vpop.xlane.xlu0 %1651
        %v1653 = vrcp.pop %v1652
        %v1654 = vmul.f32 %v1649, %v1653
        %v1655 = vpack.c.bf16 %v1654, %v1654
        %v1657 = vsel %vm935, %v1655, 0
        %v1660 = vsel %vm997, %v1597, 0
        %1662 = vmatprep.subr.bf16.mxu0 0
        %1663 = vmatpush1.bf16.msra.mxu0 0
        %1664 = vmatprep.subr.bf16.mxu0 0
        %1665 = vmatpush1.bf16.msra.mxu0 0
        %1666 = vmatprep.subr.bf16.mxu0 0
        %1667 = vmatpush1.bf16.msra.mxu0 0
        %1668 = vmatprep.subr.bf16.mxu0 0
        %1669 = vmatpush1.bf16.msra.mxu0 0
        %1670 = vmatprep.subr.bf16.mxu0 0
        %1671 = vmatpush1.bf16.msra.mxu0 0
        %1672 = vmatprep.subr.bf16.mxu0 0
        %1673 = vmatpush1.bf16.msra.mxu0 0
        %1674 = vmatprep.subr.bf16.mxu0 0
        %1675 = vmatpush1.bf16.msra.mxu0 0
        %1676 = vmatprep.subr.bf16.mxu0 0
        %1677 = vmatpush1.bf16.msra.mxu0 %v1660
        %1678 = vmatprep.subr.bf16.mxu0 0
        %1679 = vmatpush2.bf16.msra.mxu0 0
        %1680 = vmatprep.subr.bf16.mxu0 0
        %1681 = vmatpush2.bf16.msra.mxu0 0
        %1682 = vmatprep.subr.bf16.mxu0 0
        %1683 = vmatpush2.bf16.msra.mxu0 0
        %1684 = vmatprep.subr.bf16.mxu0 0
        %1685 = vmatpush2.bf16.msra.mxu0 0
        %1686 = vmatprep.subr.bf16.mxu0 0
        %1687 = vmatpush2.bf16.msra.mxu0 0
        %1688 = vmatprep.subr.bf16.mxu0 0
        %1689 = vmatpush2.bf16.msra.mxu0 0
        %1690 = vmatprep.subr.bf16.mxu0 0
        %1691 = vmatpush2.bf16.msra.mxu0 0
        %1692 = vmatprep.subr.bf16.mxu0 0
        %1693 = vmatpush2.bf16.msra.mxu0 0
        %1694 = vmatprep.mubr.bf16.mxu0 0
        %1695 = vmatmul.mubr.bf16.gmra.mxu0 %v1657
        %v1696 = vpop.f32.mrf.mxu0
        %v1697 = vadd.f32 0.0, %v1696
        %v1698 = vpop.f32.mrf.mxu0
        %v1699 = vpop.f32.mrf.mxu0
        %v1700 = vpop.f32.mrf.mxu0
        %1701 = vdwg.mxu0
        %v1702 = vpack.c.bf16 %v1697, %v1697
        %s1703 = scalar_lea.vmem %s613, 8
        %v1704 = vld [vmem:[%s1703] sm:$0xf]
        %v1706 = vsel %vm935, %v1702, 0
        %v1709 = vsel %vm997, %v1704, 0
        %1711 = vmatprep.subr.bf16.mxu0 0
        %1712 = vmatpush1.bf16.msra.mxu0 0
        %1713 = vmatprep.subr.bf16.mxu0 0
        %1714 = vmatpush1.bf16.msra.mxu0 0
        %1715 = vmatprep.subr.bf16.mxu0 0
        %1716 = vmatpush1.bf16.msra.mxu0 0
        %1717 = vmatprep.subr.bf16.mxu0 0
        %1718 = vmatpush1.bf16.msra.mxu0 0
        %1719 = vmatprep.subr.bf16.mxu0 0
        %1720 = vmatpush1.bf16.msra.mxu0 0
        %1721 = vmatprep.subr.bf16.mxu0 0
        %1722 = vmatpush1.bf16.msra.mxu0 0
        %1723 = vmatprep.subr.bf16.mxu0 0
        %1724 = vmatpush1.bf16.msra.mxu0 0
        %1725 = vmatprep.subr.bf16.mxu0 0
        %1726 = vmatpush1.bf16.msra.mxu0 %v1709
        %1727 = vmatprep.subr.bf16.mxu0 0
        %1728 = vmatpush2.bf16.msra.mxu0 0
        %1729 = vmatprep.subr.bf16.mxu0 0
        %1730 = vmatpush2.bf16.msra.mxu0 0
        %1731 = vmatprep.subr.bf16.mxu0 0
        %1732 = vmatpush2.bf16.msra.mxu0 0
        %1733 = vmatprep.subr.bf16.mxu0 0
        %1734 = vmatpush2.bf16.msra.mxu0 0
        %1735 = vmatprep.subr.bf16.mxu0 0
        %1736 = vmatpush2.bf16.msra.mxu0 0
        %1737 = vmatprep.subr.bf16.mxu0 0
        %1738 = vmatpush2.bf16.msra.mxu0 0
        %1739 = vmatprep.subr.bf16.mxu0 0
        %1740 = vmatpush2.bf16.msra.mxu0 0
        %1741 = vmatprep.subr.bf16.mxu0 0
        %1742 = vmatpush2.bf16.msra.mxu0 0
        %1743 = vmatprep.mubr.bf16.mxu0 0
        %1744 = vmatmul.mubr.bf16.gmra.mxu0 %v1706
        %v1745 = vpop.f32.mrf.mxu0
        %v1746 = vadd.f32 0.0, %v1745
        %v1747 = vpop.f32.mrf.mxu0
        %v1748 = vpop.f32.mrf.mxu0
        %v1749 = vpop.f32.mrf.mxu0
        %1750 = vdwg.mxu0
        %v1751 = vadd.f32 %v1415, %v1746
        %s1752 = scalar_lea.vmem %s598, 48
        %v1753 = vld [vmem:[%s1752] sm:$0xf]
        %v1754 = vld [vmem:[%s1752 + $0x4] sm:$0xf]
        %v1755 = vld [vmem:[%s1752 + $0x8] sm:$0xf]
        %v1756 = vld [vmem:[%s1752 + $0xc] sm:$0xf]
        %v1757 = vlaneseq
        %v1758 = vshrl.u32 %v1757, 7
        %v1759 = vsub.s32 3, %v1758
        %v1760 = vrot.slane %v745, %v1759
        %v1765 = vunpack.c.l.b16 %v1753
        %v1766 = vunpack.c.l.b16 %v1754
        %v1767 = vunpack.c.l.b16 %v1755
        %v1768 = vunpack.c.l.b16 %v1756
        %v1769 = vpack.c.b16 %v1766, %v1765
        %v1770 = vpack.c.b16 %v1768, %v1767
        %1773 = vmatprep.subr.bf16.mxu0 0
        %1774 = vmatpush1.bf16.msra.mxu0 0
        %1775 = vmatprep.subr.bf16.mxu0 0
        %1776 = vmatpush1.bf16.msra.mxu0 0
        %1777 = vmatprep.subr.bf16.mxu0 0
        %1778 = vmatpush1.bf16.msra.mxu0 0
        %1779 = vmatprep.subr.bf16.mxu0 0
        %1780 = vmatpush1.bf16.msra.mxu0 0
        %1781 = vmatprep.subr.bf16.mxu0 0
        %1782 = vmatpush1.bf16.msra.mxu0 0
        %1783 = vmatprep.subr.bf16.mxu0 0
        %1784 = vmatpush1.bf16.msra.mxu0 0
        %1785 = vmatprep.subr.bf16.mxu0 0
        %1786 = vmatpush1.bf16.msra.mxu0 %v1770
        %1787 = vmatprep.subr.bf16.mxu0 0
        %1788 = vmatpush1.bf16.msra.mxu0 %v1769
        %1789 = vmatprep.subr.bf16.mxu0 0
        %1790 = vmatpush2.bf16.msra.mxu0 0
        %1791 = vmatprep.subr.bf16.mxu0 0
        %1792 = vmatpush2.bf16.msra.mxu0 0
        %1793 = vmatprep.subr.bf16.mxu0 0
        %1794 = vmatpush2.bf16.msra.mxu0 0
        %1795 = vmatprep.subr.bf16.mxu0 0
        %1796 = vmatpush2.bf16.msra.mxu0 0
        %1797 = vmatprep.subr.bf16.mxu0 0
        %1798 = vmatpush2.bf16.msra.mxu0 0
        %1799 = vmatprep.subr.bf16.mxu0 0
        %1800 = vmatpush2.bf16.msra.mxu0 0
        %1801 = vmatprep.subr.bf16.mxu0 0
        %1802 = vmatpush2.bf16.msra.mxu0 0
        %1803 = vmatprep.subr.bf16.mxu0 0
        %1804 = vmatpush2.bf16.msra.mxu0 0
        %1805 = vmatprep.mubr.bf16.mxu0 0
        %1806 = vmatmul.mubr.bf16.gmra.mxu0 %v778
        %v1807 = vpop.f32.mrf.mxu0
        %v1808 = vadd.f32 %v1760, %v1807
        %v1809 = vpop.f32.mrf.mxu0
        %v1810 = vpop.f32.mrf.mxu0
        %v1811 = vpop.f32.mrf.mxu0
        %1812 = vdwg.mxu0
        %v1813 = vpack.c.bf16 %v1808, %v1808
        %s1814 = scalar_lea.vmem %s603, 48
        %v1815 = vld [vmem:[%s1814] sm:$0xf]
        %v1816 = vld [vmem:[%s1814 + $0x4] sm:$0xf]
        %v1817 = vld [vmem:[%s1814 + $0x8] sm:$0xf]
        %v1818 = vld [vmem:[%s1814 + $0xc] sm:$0xf]
        %v1823 = vunpack.c.l.b16 %v1815
        %v1824 = vunpack.c.l.b16 %v1816
        %v1825 = vunpack.c.l.b16 %v1817
        %v1826 = vunpack.c.l.b16 %v1818
        %v1827 = vpack.c.b16 %v1824, %v1823
        %v1828 = vpack.c.b16 %v1826, %v1825
        %1831 = vmatprep.subr.bf16.mxu0 0
        %1832 = vmatpush1.bf16.msra.mxu0 0
        %1833 = vmatprep.subr.bf16.mxu0 0
        %1834 = vmatpush1.bf16.msra.mxu0 0
        %1835 = vmatprep.subr.bf16.mxu0 0
        %1836 = vmatpush1.bf16.msra.mxu0 0
        %1837 = vmatprep.subr.bf16.mxu0 0
        %1838 = vmatpush1.bf16.msra.mxu0 0
        %1839 = vmatprep.subr.bf16.mxu0 0
        %1840 = vmatpush1.bf16.msra.mxu0 0
        %1841 = vmatprep.subr.bf16.mxu0 0
        %1842 = vmatpush1.bf16.msra.mxu0 0
        %1843 = vmatprep.subr.bf16.mxu0 0
        %1844 = vmatpush1.bf16.msra.mxu0 %v1828
        %1845 = vmatprep.subr.bf16.mxu0 0
        %1846 = vmatpush1.bf16.msra.mxu0 %v1827
        %1847 = vmatprep.subr.bf16.mxu0 0
        %1848 = vmatpush2.bf16.msra.mxu0 0
        %1849 = vmatprep.subr.bf16.mxu0 0
        %1850 = vmatpush2.bf16.msra.mxu0 0
        %1851 = vmatprep.subr.bf16.mxu0 0
        %1852 = vmatpush2.bf16.msra.mxu0 0
        %1853 = vmatprep.subr.bf16.mxu0 0
        %1854 = vmatpush2.bf16.msra.mxu0 0
        %1855 = vmatprep.subr.bf16.mxu0 0
        %1856 = vmatpush2.bf16.msra.mxu0 0
        %1857 = vmatprep.subr.bf16.mxu0 0
        %1858 = vmatpush2.bf16.msra.mxu0 0
        %1859 = vmatprep.subr.bf16.mxu0 0
        %1860 = vmatpush2.bf16.msra.mxu0 0
        %1861 = vmatprep.subr.bf16.mxu0 0
        %1862 = vmatpush2.bf16.msra.mxu0 0
        %1863 = vmatprep.mubr.bf16.mxu0 0
        %1864 = vmatmul.mubr.bf16.gmra.mxu0 %v778
        %v1865 = vpop.f32.mrf.mxu0
        %v1866 = vadd.f32 0.0, %v1865
        %v1867 = vpop.f32.mrf.mxu0
        %v1868 = vpop.f32.mrf.mxu0
        %v1869 = vpop.f32.mrf.mxu0
        %1870 = vdwg.mxu0
        %v1871 = vpack.c.bf16 %v1866, %v1866
        %s1872 = scalar_lea.vmem %s608, 48
        %v1873 = vld [vmem:[%s1872] sm:$0xf]
        %v1874 = vld [vmem:[%s1872 + $0x4] sm:$0xf]
        %v1875 = vld [vmem:[%s1872 + $0x8] sm:$0xf]
        %v1876 = vld [vmem:[%s1872 + $0xc] sm:$0xf]
        %v1881 = vunpack.c.l.b16 %v1873
        %v1882 = vunpack.c.l.b16 %v1874
        %v1883 = vunpack.c.l.b16 %v1875
        %v1884 = vunpack.c.l.b16 %v1876
        %v1885 = vpack.c.b16 %v1882, %v1881
        %v1886 = vpack.c.b16 %v1884, %v1883
        %1889 = vmatprep.subr.bf16.mxu0 0
        %1890 = vmatpush1.bf16.msra.mxu0 0
        %1891 = vmatprep.subr.bf16.mxu0 0
        %1892 = vmatpush1.bf16.msra.mxu0 0
        %1893 = vmatprep.subr.bf16.mxu0 0
        %1894 = vmatpush1.bf16.msra.mxu0 0
        %1895 = vmatprep.subr.bf16.mxu0 0
        %1896 = vmatpush1.bf16.msra.mxu0 0
        %1897 = vmatprep.subr.bf16.mxu0 0
        %1898 = vmatpush1.bf16.msra.mxu0 0
        %1899 = vmatprep.subr.bf16.mxu0 0
        %1900 = vmatpush1.bf16.msra.mxu0 0
        %1901 = vmatprep.subr.bf16.mxu0 0
        %1902 = vmatpush1.bf16.msra.mxu0 %v1886
        %1903 = vmatprep.subr.bf16.mxu0 0
        %1904 = vmatpush1.bf16.msra.mxu0 %v1885
        %1905 = vmatprep.subr.bf16.mxu0 0
        %1906 = vmatpush2.bf16.msra.mxu0 0
        %1907 = vmatprep.subr.bf16.mxu0 0
        %1908 = vmatpush2.bf16.msra.mxu0 0
        %1909 = vmatprep.subr.bf16.mxu0 0
        %1910 = vmatpush2.bf16.msra.mxu0 0
        %1911 = vmatprep.subr.bf16.mxu0 0
        %1912 = vmatpush2.bf16.msra.mxu0 0
        %1913 = vmatprep.subr.bf16.mxu0 0
        %1914 = vmatpush2.bf16.msra.mxu0 0
        %1915 = vmatprep.subr.bf16.mxu0 0
        %1916 = vmatpush2.bf16.msra.mxu0 0
        %1917 = vmatprep.subr.bf16.mxu0 0
        %1918 = vmatpush2.bf16.msra.mxu0 0
        %1919 = vmatprep.subr.bf16.mxu0 0
        %1920 = vmatpush2.bf16.msra.mxu0 0
        %1921 = vmatprep.mubr.bf16.mxu0 0
        %1922 = vmatmul.mubr.bf16.gmra.mxu0 %v778
        %v1923 = vpop.f32.mrf.mxu0
        %v1924 = vadd.f32 0.0, %v1923
        %v1925 = vpop.f32.mrf.mxu0
        %v1926 = vpop.f32.mrf.mxu0
        %v1927 = vpop.f32.mrf.mxu0
        %1928 = vdwg.mxu0
        %v1929 = vpack.c.bf16 %v1924, %v1924
        %v1931 = vsel %vm935, %v1813, 0
        %v1934 = vsel %vm935, %v1871, 0
        %1936 = vmatprep.subr.bf16.mxu0 0
        %1937 = vmatpush1.bf16.xpose.msra.mxu0 0
        %1938 = vmatprep.subr.bf16.mxu0 0
        %1939 = vmatpush1.bf16.xpose.msra.mxu0 0
        %1940 = vmatprep.subr.bf16.mxu0 0
        %1941 = vmatpush1.bf16.xpose.msra.mxu0 0
        %1942 = vmatprep.subr.bf16.mxu0 0
        %1943 = vmatpush1.bf16.xpose.msra.mxu0 0
        %1944 = vmatprep.subr.bf16.mxu0 0
        %1945 = vmatpush1.bf16.xpose.msra.mxu0 0
        %1946 = vmatprep.subr.bf16.mxu0 0
        %1947 = vmatpush1.bf16.xpose.msra.mxu0 0
        %1948 = vmatprep.subr.bf16.mxu0 0
        %1949 = vmatpush1.bf16.xpose.msra.mxu0 0
        %1950 = vmatprep.subr.bf16.mxu0 0
        %1951 = vmatpush1.bf16.xpose.msra.mxu0 %v1934
        %1952 = vmatprep.subr.bf16.mxu0 0
        %1953 = vmatpush2.bf16.xpose.msra.mxu0 0
        %1954 = vmatprep.subr.bf16.mxu0 0
        %1955 = vmatpush2.bf16.xpose.msra.mxu0 0
        %1956 = vmatprep.subr.bf16.mxu0 0
        %1957 = vmatpush2.bf16.xpose.msra.mxu0 0
        %1958 = vmatprep.subr.bf16.mxu0 0
        %1959 = vmatpush2.bf16.xpose.msra.mxu0 0
        %1960 = vmatprep.subr.bf16.mxu0 0
        %1961 = vmatpush2.bf16.xpose.msra.mxu0 0
        %1962 = vmatprep.subr.bf16.mxu0 0
        %1963 = vmatpush2.bf16.xpose.msra.mxu0 0
        %1964 = vmatprep.subr.bf16.mxu0 0
        %1965 = vmatpush2.bf16.xpose.msra.mxu0 0
        %1966 = vmatprep.subr.bf16.mxu0 0
        %1967 = vmatpush2.bf16.xpose.msra.mxu0 0
        %1968 = vmatprep.mubr.bf16.mxu0 0
        %1969 = vmatmul.mubr.bf16.gmra.mxu0 %v1931
        %v1970 = vpop.f32.mrf.mxu0
        %v1971 = vadd.f32 %v755, %v1970
        %v1972 = vpop.f32.mrf.mxu0
        %v1973 = vpop.f32.mrf.mxu0
        %v1974 = vpop.f32.mrf.mxu0
        %1975 = vdwg.mxu0
        %v1976 = vsel %vm935, %v1971, -inf
        %1977 = vmax.xlane.f32.xlu0 %v1976
        %v1978 = vpop.xlane.xlu0 %1977
        %v1979 = vsub.f32 %v1971, %v1978
        %v1980 = vmul.f32 %v1979, 1.442695
        %v1981 = vpow.pop %v1980
        %v1982 = vsel %vm935, %v1981, 0.0
        %1983 = vadd.xlane.f32.xlu0 %v1982
        %v1984 = vpop.xlane.xlu0 %1983
        %v1985 = vrcp.pop %v1984
        %v1986 = vmul.f32 %v1981, %v1985
        %v1987 = vpack.c.bf16 %v1986, %v1986
        %v1989 = vsel %vm935, %v1987, 0
        %v1992 = vsel %vm997, %v1929, 0
        %1994 = vmatprep.subr.bf16.mxu0 0
        %1995 = vmatpush1.bf16.msra.mxu0 0
        %1996 = vmatprep.subr.bf16.mxu0 0
        %1997 = vmatpush1.bf16.msra.mxu0 0
        %1998 = vmatprep.subr.bf16.mxu0 0
        %1999 = vmatpush1.bf16.msra.mxu0 0
        %2000 = vmatprep.subr.bf16.mxu0 0
        %2001 = vmatpush1.bf16.msra.mxu0 0
        %2002 = vmatprep.subr.bf16.mxu0 0
        %2003 = vmatpush1.bf16.msra.mxu0 0
        %2004 = vmatprep.subr.bf16.mxu0 0
        %2005 = vmatpush1.bf16.msra.mxu0 0
        %2006 = vmatprep.subr.bf16.mxu0 0
        %2007 = vmatpush1.bf16.msra.mxu0 0
        %2008 = vmatprep.subr.bf16.mxu0 0
        %2009 = vmatpush1.bf16.msra.mxu0 %v1992
        %2010 = vmatprep.subr.bf16.mxu0 0
        %2011 = vmatpush2.bf16.msra.mxu0 0
        %2012 = vmatprep.subr.bf16.mxu0 0
        %2013 = vmatpush2.bf16.msra.mxu0 0
        %2014 = vmatprep.subr.bf16.mxu0 0
        %2015 = vmatpush2.bf16.msra.mxu0 0
        %2016 = vmatprep.subr.bf16.mxu0 0
        %2017 = vmatpush2.bf16.msra.mxu0 0
        %2018 = vmatprep.subr.bf16.mxu0 0
        %2019 = vmatpush2.bf16.msra.mxu0 0
        %2020 = vmatprep.subr.bf16.mxu0 0
        %2021 = vmatpush2.bf16.msra.mxu0 0
        %2022 = vmatprep.subr.bf16.mxu0 0
        %2023 = vmatpush2.bf16.msra.mxu0 0
        %2024 = vmatprep.subr.bf16.mxu0 0
        %2025 = vmatpush2.bf16.msra.mxu0 0
        %2026 = vmatprep.mubr.bf16.mxu0 0
        %2027 = vmatmul.mubr.bf16.gmra.mxu0 %v1989
        %v2028 = vpop.f32.mrf.mxu0
        %v2029 = vadd.f32 0.0, %v2028
        %v2030 = vpop.f32.mrf.mxu0
        %v2031 = vpop.f32.mrf.mxu0
        %v2032 = vpop.f32.mrf.mxu0
        %2033 = vdwg.mxu0
        %v2034 = vpack.c.bf16 %v2029, %v2029
        %s2035 = scalar_lea.vmem %s613, 12
        %v2036 = vld [vmem:[%s2035] sm:$0xf]
        %v2038 = vsel %vm935, %v2034, 0
        %v2041 = vsel %vm997, %v2036, 0
        %2043 = vmatprep.subr.bf16.mxu0 0
        %2044 = vmatpush1.bf16.msra.mxu0 0
        %2045 = vmatprep.subr.bf16.mxu0 0
        %2046 = vmatpush1.bf16.msra.mxu0 0
        %2047 = vmatprep.subr.bf16.mxu0 0
        %2048 = vmatpush1.bf16.msra.mxu0 0
        %2049 = vmatprep.subr.bf16.mxu0 0
        %2050 = vmatpush1.bf16.msra.mxu0 0
        %2051 = vmatprep.subr.bf16.mxu0 0
        %2052 = vmatpush1.bf16.msra.mxu0 0
        %2053 = vmatprep.subr.bf16.mxu0 0
        %2054 = vmatpush1.bf16.msra.mxu0 0
        %2055 = vmatprep.subr.bf16.mxu0 0
        %2056 = vmatpush1.bf16.msra.mxu0 0
        %2057 = vmatprep.subr.bf16.mxu0 0
        %2058 = vmatpush1.bf16.msra.mxu0 %v2041
        %2059 = vmatprep.subr.bf16.mxu0 0
        %2060 = vmatpush2.bf16.msra.mxu0 0
        %2061 = vmatprep.subr.bf16.mxu0 0
        %2062 = vmatpush2.bf16.msra.mxu0 0
        %2063 = vmatprep.subr.bf16.mxu0 0
        %2064 = vmatpush2.bf16.msra.mxu0 0
        %2065 = vmatprep.subr.bf16.mxu0 0
        %2066 = vmatpush2.bf16.msra.mxu0 0
        %2067 = vmatprep.subr.bf16.mxu0 0
        %2068 = vmatpush2.bf16.msra.mxu0 0
        %2069 = vmatprep.subr.bf16.mxu0 0
        %2070 = vmatpush2.bf16.msra.mxu0 0
        %2071 = vmatprep.subr.bf16.mxu0 0
        %2072 = vmatpush2.bf16.msra.mxu0 0
        %2073 = vmatprep.subr.bf16.mxu0 0
        %2074 = vmatpush2.bf16.msra.mxu0 0
        %2075 = vmatprep.mubr.bf16.mxu0 0
        %2076 = vmatmul.mubr.bf16.gmra.mxu0 %v2038
        %v2077 = vpop.f32.mrf.mxu0
        %v2078 = vadd.f32 0.0, %v2077
        %v2079 = vpop.f32.mrf.mxu0
        %v2080 = vpop.f32.mrf.mxu0
        %v2081 = vpop.f32.mrf.mxu0
        %2082 = vdwg.mxu0
        %v2083 = vadd.f32 %v1751, %v2078
        %v2084 = vlaneseq
        %v2085 = vshrl.u32 %v2084, 7
        %v2086 = vsub.s32 4, %v2085
        %v2087 = vrot.slane %v745, %v2086
        %v2088 = vadd.f32 %v2083, %v2087
        %v2089 = vadd.f32 %v743, %v2088
        %v2090 = vsel %vm776, %v2089, 0.0
        %2091 = vadd.xlane.f32.xlu0 %v2090
        %v2092 = vpop.xlane.xlu0 %2091
        %v2093 = vrcp.pop 32.0
        %v2094 = vmul.f32 %v2092, %v2093
        %v2095 = vsub.f32 %v2089, %v2094
        %v2096 = vmul.f32 %v2095, %v2095
        %v2097 = vsel %vm776, %v2096, 0.0
        %2098 = vadd.xlane.f32.xlu0 %v2097
        %v2099 = vpop.xlane.xlu0 %2098
        %v2100 = vmul.f32 %v2099, %v2093
        %v2101 = vadd.f32 %v2100, 1e-05
        %v2102 = vrsqrt.pop %v2101
        %v2103 = vmul.f32 %v2095, %v2102
        %v2104 = vlaneseq
        %v2105 = vshrl.u32 %v2104, 7
        %v2106 = vsub.s32 7, %v2105
        %v2107 = vrot.slane %v745, %v2106
        %v2108 = vmul.f32 %v2103, %v2107
        %v2109 = vlaneseq
        %v2110 = vshrl.u32 %v2109, 7
        %v2111 = vsub.s32 0, %v2110
        %v2112 = vrot.slane %v746, %v2111
        %v2113 = vadd.f32 %v2108, %v2112
        %v2114 = vpack.c.bf16 %v2113, %v2113
        %v2115 = vld [vmem:[%s618] sm:$0xf]
        %v2116 = vld [vmem:[%s618 + $0x4] sm:$0xf]
        %v2117 = vld [vmem:[%s618 + $0x8] sm:$0xf]
        %v2118 = vld [vmem:[%s618 + $0xc] sm:$0xf]
        %v2119 = vlaneseq
        %v2120 = vshrl.u32 %v2119, 7
        %v2121 = vsub.s32 5, %v2120
        %v2122 = vrot.slane %v745, %v2121
        %v2127 = vunpack.c.l.b16 %v2115
        %v2128 = vunpack.c.l.b16 %v2116
        %v2129 = vunpack.c.l.b16 %v2117
        %v2130 = vunpack.c.l.b16 %v2118
        %v2131 = vpack.c.b16 %v2128, %v2127
        %v2132 = vpack.c.b16 %v2130, %v2129
        %v2136 = vsel %vm776, %v2114, 0
        %2138 = vmatprep.subr.bf16.mxu0 0
        %2139 = vmatpush1.bf16.msra.mxu0 0
        %2140 = vmatprep.subr.bf16.mxu0 0
        %2141 = vmatpush1.bf16.msra.mxu0 0
        %2142 = vmatprep.subr.bf16.mxu0 0
        %2143 = vmatpush1.bf16.msra.mxu0 0
        %2144 = vmatprep.subr.bf16.mxu0 0
        %2145 = vmatpush1.bf16.msra.mxu0 0
        %2146 = vmatprep.subr.bf16.mxu0 0
        %2147 = vmatpush1.bf16.msra.mxu0 0
        %2148 = vmatprep.subr.bf16.mxu0 0
        %2149 = vmatpush1.bf16.msra.mxu0 0
        %2150 = vmatprep.subr.bf16.mxu0 0
        %2151 = vmatpush1.bf16.msra.mxu0 %v2132
        %2152 = vmatprep.subr.bf16.mxu0 0
        %2153 = vmatpush1.bf16.msra.mxu0 %v2131
        %2154 = vmatprep.subr.bf16.mxu0 0
        %2155 = vmatpush2.bf16.msra.mxu0 0
        %2156 = vmatprep.subr.bf16.mxu0 0
        %2157 = vmatpush2.bf16.msra.mxu0 0
        %2158 = vmatprep.subr.bf16.mxu0 0
        %2159 = vmatpush2.bf16.msra.mxu0 0
        %2160 = vmatprep.subr.bf16.mxu0 0
        %2161 = vmatpush2.bf16.msra.mxu0 0
        %2162 = vmatprep.subr.bf16.mxu0 0
        %2163 = vmatpush2.bf16.msra.mxu0 0
        %2164 = vmatprep.subr.bf16.mxu0 0
        %2165 = vmatpush2.bf16.msra.mxu0 0
        %2166 = vmatprep.subr.bf16.mxu0 0
        %2167 = vmatpush2.bf16.msra.mxu0 0
        %2168 = vmatprep.subr.bf16.mxu0 0
        %2169 = vmatpush2.bf16.msra.mxu0 0
        %2170 = vmatprep.mubr.bf16.mxu0 0
        %2171 = vmatmul.mubr.bf16.gmra.mxu0 %v2136
        %v2172 = vpop.f32.mrf.mxu0
        %v2173 = vadd.f32 %v2122, %v2172
        %v2174 = vpop.f32.mrf.mxu0
        %v2175 = vpop.f32.mrf.mxu0
        %v2176 = vpop.f32.mrf.mxu0
        %2177 = vdwg.mxu0
        %v2178 = vmax.f32 %v2173, 0.0
        %v2179 = vpack.c.bf16 %v2178, %v2178
        %v2180 = vld [vmem:[%s623] sm:$0xf]
        %v2181 = vld [vmem:[%s623 + $0x4] sm:$0xf]
        %v2182 = vld [vmem:[%s623 + $0x8] sm:$0xf]
        %v2183 = vld [vmem:[%s623 + $0xc] sm:$0xf]
        %v2184 = vlaneseq
        %v2185 = vshrl.u32 %v2184, 7
        %v2186 = vsub.s32 6, %v2185
        %v2187 = vrot.slane %v745, %v2186
        %v2192 = vunpack.c.l.b16 %v2180
        %v2193 = vunpack.c.l.b16 %v2181
        %v2194 = vunpack.c.l.b16 %v2182
        %v2195 = vunpack.c.l.b16 %v2183
        %v2196 = vpack.c.b16 %v2193, %v2192
        %v2197 = vpack.c.b16 %v2195, %v2194
        %v2201 = vsel %vm776, %v2179, 0
        %2203 = vmatprep.subr.bf16.mxu0 0
        %2204 = vmatpush1.bf16.msra.mxu0 0
        %2205 = vmatprep.subr.bf16.mxu0 0
        %2206 = vmatpush1.bf16.msra.mxu0 0
        %2207 = vmatprep.subr.bf16.mxu0 0
        %2208 = vmatpush1.bf16.msra.mxu0 0
        %2209 = vmatprep.subr.bf16.mxu0 0
        %2210 = vmatpush1.bf16.msra.mxu0 0
        %2211 = vmatprep.subr.bf16.mxu0 0
        %2212 = vmatpush1.bf16.msra.mxu0 0
        %2213 = vmatprep.subr.bf16.mxu0 0
        %2214 = vmatpush1.bf16.msra.mxu0 0
        %2215 = vmatprep.subr.bf16.mxu0 0
        %2216 = vmatpush1.bf16.msra.mxu0 %v2197
        %2217 = vmatprep.subr.bf16.mxu0 0
        %2218 = vmatpush1.bf16.msra.mxu0 %v2196
        %2219 = vmatprep.subr.bf16.mxu0 0
        %2220 = vmatpush2.bf16.msra.mxu0 0
        %2221 = vmatprep.subr.bf16.mxu0 0
        %2222 = vmatpush2.bf16.msra.mxu0 0
        %2223 = vmatprep.subr.bf16.mxu0 0
        %2224 = vmatpush2.bf16.msra.mxu0 0
        %2225 = vmatprep.subr.bf16.mxu0 0
        %2226 = vmatpush2.bf16.msra.mxu0 0
        %2227 = vmatprep.subr.bf16.mxu0 0
        %2228 = vmatpush2.bf16.msra.mxu0 0
        %2229 = vmatprep.subr.bf16.mxu0 0
        %2230 = vmatpush2.bf16.msra.mxu0 0
        %2231 = vmatprep.subr.bf16.mxu0 0
        %2232 = vmatpush2.bf16.msra.mxu0 0
        %2233 = vmatprep.subr.bf16.mxu0 0
        %2234 = vmatpush2.bf16.msra.mxu0 0
        %2235 = vmatprep.mubr.bf16.mxu0 0
        %2236 = vmatmul.mubr.bf16.gmra.mxu0 %v2201
        %v2237 = vpop.f32.mrf.mxu0
        %v2238 = vadd.f32 %v2187, %v2237
        %v2239 = vpop.f32.mrf.mxu0
        %v2240 = vpop.f32.mrf.mxu0
        %v2241 = vpop.f32.mrf.mxu0
        %2242 = vdwg.mxu0
        %v2243 = vadd.f32 %v2113, %v2238
        %v2244 = vsel %vm776, %v2243, 0.0
        %2245 = vadd.xlane.f32.xlu0 %v2244
        %v2246 = vpop.xlane.xlu0 %2245
        %v2247 = vmul.f32 %v2246, %v2093
        %v2248 = vsub.f32 %v2243, %v2247
        %v2249 = vmul.f32 %v2248, %v2248
        %v2250 = vsel %vm776, %v2249, 0.0
        %2251 = vadd.xlane.f32.xlu0 %v2250
        %v2252 = vpop.xlane.xlu0 %2251
        %v2253 = vmul.f32 %v2252, %v2093
        %v2254 = vadd.f32 %v2253, 1e-05
        %v2255 = vrsqrt.pop %v2254
        %v2256 = vmul.f32 %v2248, %v2255
        %v2257 = vlaneseq
        %v2258 = vshrl.u32 %v2257, 7
        %v2259 = vsub.s32 1, %v2258
        %v2260 = vrot.slane %v746, %v2259
        %v2261 = vmul.f32 %v2256, %v2260
        %v2262 = vlaneseq
        %v2263 = vshrl.u32 %v2262, 7
        %v2264 = vsub.s32 2, %v2263
        %v2265 = vrot.slane %v746, %v2264
        %v2266 = vadd.f32 %v2261, %v2265
        %2267 = vst.msk [vmem:[#allocation2] sm:$0xff] %vm776, %v2266
        %p2268 = scmp.eq.s32.totalorder %s33, 1
        // Predicated region
        $region81: #{tpu_custom_call.1} parent=75 // pred_check
          %p2269 = pneg %p2268
        $region82: #{tpu_custom_call.1} parent=75 // pred_check_branch
          %2271 = sbr.rel (%p2269) target = $region84
        $region83: #{tpu_custom_call.1} parent=75 // pred_region
          %v2272 = vpack.c.bf16 %v2266, %v2266
          %v2273 = vld [vmem:[%s12] sm:$0xf]
          %v2274 = vld [vmem:[%s12 + $0x4] sm:$0xf]
          %v2275 = vld [vmem:[%s12 + $0x8] sm:$0xf]
          %v2276 = vld [vmem:[%s12 + $0xc] sm:$0xf]
          %v2277 = vld [vmem:[%s13] sm:$0x1]
          %v2279 = vlaneseq
          %v2280 = vshrl.u32 %v2279, 7
          %v2281 = vsub.s32 0, %v2280
          %v2282 = vrot.slane %v2277, %v2281
          %v2288 = vunpack.c.l.b16 %v2273
          %v2289 = vunpack.c.l.b16 %v2274
          %v2290 = vunpack.c.l.b16 %v2275
          %v2291 = vunpack.c.l.b16 %v2276
          %v2292 = vpack.c.b16 %v2289, %v2288
          %v2293 = vpack.c.b16 %v2291, %v2290
          %v2297 = vsel %vm776, %v2272, 0
          %2299 = vmatprep.subr.bf16.mxu0 0
          %2300 = vmatpush1.bf16.msra.mxu0 0
          %2301 = vmatprep.subr.bf16.mxu0 0
          %2302 = vmatpush1.bf16.msra.mxu0 0
          %2303 = vmatprep.subr.bf16.mxu0 0
          %2304 = vmatpush1.bf16.msra.mxu0 0
          %2305 = vmatprep.subr.bf16.mxu0 0
          %2306 = vmatpush1.bf16.msra.mxu0 0
          %2307 = vmatprep.subr.bf16.mxu0 0
          %2308 = vmatpush1.bf16.msra.mxu0 0
          %2309 = vmatprep.subr.bf16.mxu0 0
          %2310 = vmatpush1.bf16.msra.mxu0 0
          %2311 = vmatprep.subr.bf16.mxu0 0
          %2312 = vmatpush1.bf16.msra.mxu0 %v2293
          %2313 = vmatprep.subr.bf16.mxu0 0
          %2314 = vmatpush1.bf16.msra.mxu0 %v2292
          %2315 = vmatprep.subr.bf16.mxu0 0
          %2316 = vmatpush2.bf16.msra.mxu0 0
          %2317 = vmatprep.subr.bf16.mxu0 0
          %2318 = vmatpush2.bf16.msra.mxu0 0
          %2319 = vmatprep.subr.bf16.mxu0 0
          %2320 = vmatpush2.bf16.msra.mxu0 0
          %2321 = vmatprep.subr.bf16.mxu0 0
          %2322 = vmatpush2.bf16.msra.mxu0 0
          %2323 = vmatprep.subr.bf16.mxu0 0
          %2324 = vmatpush2.bf16.msra.mxu0 0
          %2325 = vmatprep.subr.bf16.mxu0 0
          %2326 = vmatpush2.bf16.msra.mxu0 0
          %2327 = vmatprep.subr.bf16.mxu0 0
          %2328 = vmatpush2.bf16.msra.mxu0 0
          %2329 = vmatprep.subr.bf16.mxu0 0
          %2330 = vmatpush2.bf16.msra.mxu0 0
          %2331 = vmatprep.mubr.bf16.mxu0 0
          %2332 = vmatmul.mubr.bf16.gmra.mxu0 %v2297
          %v2333 = vpop.f32.mrf.mxu0
          %v2334 = vadd.f32 %v2282, %v2333
          %v2335 = vpop.f32.mrf.mxu0
          %v2336 = vpop.f32.mrf.mxu0
          %v2337 = vpop.f32.mrf.mxu0
          %2338 = vdwg.mxu0
          %v2339 = vtanh.pop %v2334
          %2340 = vst [vmem:[%s586] sm:$0xff] %v2339
        $region84: #{tpu_custom_call.1} parent=75 // pred_fallthru
          _
        %s2341 = sand.u32 %s387, 1
        %s2342 = scalar_lea.sflag [#allocation4], %s2341
        %s2343 = sand.u32 %s387, 1
        %s2344 = smul.addr %s2343, 8
        %s2345 = scalar_lea.vmem [#allocation3], %s2344
        // Predicated region
        $region85: #{tpu_custom_call.1} parent=75 // pred_check
          %p2346 = pneg %p397
        $region86: #{tpu_custom_call.1} parent=75 // pred_check_branch
          %2348 = sbr.rel (%p2346) target = $region88
        $region87: #{tpu_custom_call.1} parent=75 // pred_region
          %s2350 = ssub.s32 128, 128
          %2351 = vsyncadd %s2342, %s2350
          %s2352 = smul.addr %s32, 128
          %s2353 = scalar_lea.hbm %s14, %s2352
          %s2355 = sshll.u32 %s2345, 4
          %s2356 = int_to_ptr.vmem [resolvable:$true] %s2355
          %2358 = dma.vmem_to_hbm [thread:$0]  %s2356, 128, %s2353, %s2342
        $region88: #{tpu_custom_call.1} parent=75 // pred_fallthru
          _
      $region76: #{tpu_custom_call.1} parent=5 // pred_fallthru
        _
      %p2359 = scmp.le.s32.totalorder 2, %s23
      // Predicated region
      $region89: #{tpu_custom_call.1} parent=5 // pred_check
        %p2360 = pneg %p2359
      $region90: #{tpu_custom_call.1} parent=5 // pred_check_branch
        %2362 = sbr.rel (%p2360) target = $region92
      $region91: #{tpu_custom_call.1} parent=5 // pred_region
        %s2363 = ssub.s32 %s23, 2
        // Predicated region
        $region93: #{tpu_custom_call.1} parent=91 // pred_check
          %p2364 = pneg %p403
        $region94: #{tpu_custom_call.1} parent=91 // pred_check_branch
          %2366 = sbr.rel (%p2364) target = $region96
        $region95: #{tpu_custom_call.1} parent=91 // pred_region
          %s2367 = sand.u32 %s388, 1
          %s2368 = scalar_lea.sflag [#allocation4], %s2367
          %s2369 = sand.u32 %s388, 1
          %s2370 = smul.addr %s2369, 8
          %s2371 = scalar_lea.vmem [#allocation3], %s2370
          %2372 = dma.done %s2368, 128
        $region96: #{tpu_custom_call.1} parent=91 // pred_fallthru
          _
      $region92: #{tpu_custom_call.1} parent=5 // pred_fallthru
        _
    $region6: #{tpu_custom_call.1} parent=1 // loop_footer
      %s27 = sadd.s32 1, %s23
    $region7: #{tpu_custom_call.1} parent=1 // loop_footer_branch
      %22 = sbr.rel target = $region3
    $region8: #{tpu_custom_call.1} parent=1 // loop_exit
      _
    %2373 = vsyncpa [#allocation4], 1
    %s2374 = scalar_lea.sflag [#allocation4], 1
    %2375 = vsyncpa %s2374, 1

</llo_original>
